<compile_context>
chip_gen: v7x
topology: tpu7x:2x2x1
jax: 0.10.0
libtpu: 0.0.40
codegen_flags: <defaults>
</compile_context>

<pallas_src>
import numpy as np
import jax
import jax.numpy as jnp
from jax import lax
from jax.experimental import pallas as pl
from jax.experimental.pallas import tpu as pltpu


def vertex_conv_kernel(x_ref, wkk_ref, bkk_ref, w1_ref, b1_ref, out_ref):
    # x_ref:   [TM, k*D]  (VMEM, row tile of region_feats flattened over (k, D))
    # wkk_ref: [k, k, D]  (VMEM, resident convKK weight, bf16)
    # bkk_ref: [k, k]     (VMEM, resident convKK bias, f32)
    # w1_ref:  [k]        (SMEM, convK1 weight)
    # b1_ref:  [1]        (SMEM, convK1 bias)
    # out_ref: [TM, D]
    tm, d = out_ref.shape
    k = wkk_ref.shape[0]

    # Small resident operands: load once per grid step (hoisted out of the strip loop).
    wkk = wkk_ref[...]                                   # [k, k, D] bf16 (tiny)
    bkk = bkk_ref[...]                                   # [k, k]    f32  (tiny)
    b1 = b1_ref[0]

    # Strip-mine rows so that per-strip values (v, acc, slabs) stay in vregs even
    # when TM is 512-1024; each strip's results are stored before the next starts.
    strip = min(tm, 128)
    n_strips = tm // strip

    def strip_body(s, carry):
        row = pl.multiple_of(s * strip, strip)

        # ---- Stage 1: folded convKK + softmax + convK1 channel mix ----------
        # v[n, j] = sum_g w1[g] * softmax_j(logits[n, g, :])[j]
        v = jnp.zeros((strip, k), jnp.float32)
        for g in range(k):                               # k is small & static -> unrolled
            xg = x_ref[pl.ds(row, strip), g * d:(g + 1) * d]       # [strip, D] f32
            logits = lax.dot_general(                    # contract D: [strip,D]x[k,D]->[strip,k]
                xg.astype(jnp.bfloat16), wkk[g],
                (((1,), (1,)), ((), ())),
                preferred_element_type=jnp.float32)
            logits = logits + bkk[g:g + 1, :]            # broadcast [1, k]
            m = jnp.max(logits, axis=-1, keepdims=True)
            e = jnp.exp(logits - m)
            p = e * pl.reciprocal(jnp.sum(e, axis=-1, keepdims=True), approx=True)
            v = v + w1_ref[g] * p                        # scalar weight from SMEM

        # ---- Stage 2: out[n, d] = sum_j v[n, j] * x[n, j, d] + b1 (VPU only) -
        acc = jnp.zeros((strip, d), jnp.float32)
        for j in range(k):
            acc = acc + v[:, j:j + 1] * x_ref[pl.ds(row, strip), j * d:(j + 1) * d]
        out_ref[pl.ds(row, strip), :] = (acc + b1).astype(out_ref.dtype)
        return carry

    lax.fori_loop(0, n_strips, strip_body, 0, unroll=True)


def _choose_tm(n):
    """Largest row tile in {1024, 512, 256, 128} that still gives >= 8 grid steps
    (so both TensorCores on v7x get several steps each); floor at 128, and for
    tiny N fall back to N rounded up to a sublane multiple."""
    for tm in (1024, 512, 256, 128):
        if pl.cdiv(n, tm) >= 8:
            return tm
    return max(8, min(128, ((n + 7) // 8) * 8))


def vertex_conv(region_feats, w_kk, b_kk, w1, b1, *, tm=None):
    """region_feats: [N, k, dim_in]; w_kk: [k, k, dim_in] (convKK weight reshaped);
    b_kk: [k, k]; w1: [k] (convK1 weight); b1: [1]. Returns [N, dim_in] (f32)."""
    N, k, d = region_feats.shape
    if tm is None:
        tm = _choose_tm(N)

    # Free, contiguous reshape (no transpose, no pad): [N, k, D] -> [N, k*D].
    x_flat = region_feats.reshape(N, k * d)
    # convKK weight fed to the MXU in bf16 (accumulation stays f32 inside the kernel).
    w_kk_bf = w_kk.astype(jnp.bfloat16)

    cost = pl.CostEstimate(
        flops=2 * N * k * k * d + 2 * N * k * d,
        transcendentals=N * k * k,
        bytes_accessed=4 * (N * k * d + N * d) + 2 * k * k * d + 4 * (k * k + k + 1),
    )

    out = pl.pallas_call(
        vertex_conv_kernel,
        out_shape=jax.ShapeDtypeStruct((N, d), jnp.float32),
        grid_spec=pltpu.PrefetchScalarGridSpec(
            num_scalar_prefetch=0,
            grid=(pl.cdiv(N, tm),),
            in_specs=[
                pl.BlockSpec((tm, k * d), lambda i: (i, 0)),         # x row tile
                pl.BlockSpec((k, k, d), lambda i: (0, 0, 0)),        # Wkk (resident, bf16)
                pl.BlockSpec((k, k), lambda i: (0, 0)),              # bkk (resident)
                pl.BlockSpec(memory_space=pltpu.MemorySpace.SMEM),   # w1 scalars
                pl.BlockSpec(memory_space=pltpu.MemorySpace.SMEM),   # b1 scalar
            ],
            out_specs=pl.BlockSpec((tm, d), lambda i: (i, 0)),
        ),
        compiler_params=pltpu.CompilerParams(
            dimension_semantics=("parallel",),       # shard row tiles across TCs (v7x)
            vmem_limit_bytes=48 * 1024 * 1024,
        ),
        cost_estimate=cost,
    )(x_flat, w_kk_bf, b_kk, w1, b1)
    return out


if __name__ == "__main__":
    # Small deterministic problem: N=256 regions, k=8 neighbors, dim_in=128 (lane dense).
    N, k, dim_in = 256, 8, 128
    key = jax.random.PRNGKey(0)
    k1, k2, k3, k4, k5 = jax.random.split(key, 5)

    region_feats = jax.random.normal(k1, (N, k, dim_in), dtype=jnp.float32)

    # Conv1d(k, k*k, dim_in, groups=k): weight [k*k, 1, dim_in] -> reshaped [k, k, dim_in];
    # bias [k*k] -> [k, k]. PyTorch init bound = 1/sqrt(fan_in) = 1/sqrt(dim_in).
    bound_kk = 1.0 / np.sqrt(dim_in)
    w_kk = jax.random.uniform(k2, (k, k, dim_in), jnp.float32, -bound_kk, bound_kk)
    b_kk = jax.random.uniform(k3, (k, k), jnp.float32, -bound_kk, bound_kk)

    # Conv1d(k, 1, 1): weight [1, k, 1] -> [k]; bias [1]. bound = 1/sqrt(k).
    bound_1 = 1.0 / np.sqrt(k)
    w1 = jax.random.uniform(k4, (k,), jnp.float32, -bound_1, bound_1)
    b1 = jax.random.uniform(k5, (1,), jnp.float32, -bound_1, bound_1)

    out = jax.block_until_ready(vertex_conv(region_feats, w_kk, b_kk, w1, b1))

    # Pure-JAX reference mirroring the PyTorch forward (full f32, HIGHEST precision).
    hp = jax.lax.Precision.HIGHEST
    logits = jnp.einsum('ngd,gjd->ngj', region_feats, w_kk, precision=hp) + b_kk[None]
    multiplier = jax.nn.softmax(logits, axis=-1)
    transformed = jnp.einsum('ncj,njd->ncd', multiplier, region_feats, precision=hp)
    ref = jnp.einsum('c,ncd->nd', w1, transformed, precision=hp) + b1[0]

    # Tolerance reflects bf16 rounding of the MXU operands for the logits matmul
    # (accumulation is f32); structural errors would be orders of magnitude larger.
    np.testing.assert_allclose(np.asarray(out), np.asarray(ref), rtol=2e-2, atol=2e-2)

    print("KERNEL_OK")
</pallas_src>

<mosaic_0001>
module attributes {stable_mosaic.version = 11 : i64} {
  func.func @vertex_conv_kernel(%arg0: i32, %arg1: memref<128x1024xf32, #tpu.memory_space<vmem>>, %arg2: memref<8x8x128xbf16, #tpu.memory_space<vmem>>, %arg3: memref<8x8xf32, #tpu.memory_space<vmem>>, %arg4: memref<8xf32, #tpu.memory_space<smem>>, %arg5: memref<1xf32, #tpu.memory_space<smem>>, %arg6: memref<128x128xf32, #tpu.memory_space<vmem>>) attributes {dimension_semantics = [#tpu.dimension_semantics<parallel>], iteration_bounds = array<i64: 2>, scalar_prefetch = 0 : i64, scratch_operands = 0 : i64, tpu.core_type = #tpu.core_type<tc>, window_params = [{transform_indices = @transform_0, window_bounds = array<i64: 128, 1024>}, {pipeline_mode = #tpu.pipeline_mode<synchronous>, transform_indices = @transform_1, window_bounds = array<i64: 8, 8, 128>}, {pipeline_mode = #tpu.pipeline_mode<synchronous>, transform_indices = @transform_2, window_bounds = array<i64: 8, 8>}, {transform_indices = @transform_3, window_bounds = array<i64: 8>}, {transform_indices = @transform_4, window_bounds = array<i64: 1>}, {transform_indices = @transform_5, window_bounds = array<i64: 128, 128>}]} {
    %c0 = arith.constant 0 : index
    %c0_0 = arith.constant 0 : index
    %c0_1 = arith.constant 0 : index
    %0 = vector.load %arg2[%c0, %c0_0, %c0_1] : memref<8x8x128xbf16, #tpu.memory_space<vmem>>, vector<8x8x128xbf16>
    %c0_2 = arith.constant 0 : index
    %c0_3 = arith.constant 0 : index
    %1 = vector.load %arg3[%c0_2, %c0_3] : memref<8x8xf32, #tpu.memory_space<vmem>>, vector<8x8xf32>
    %c0_4 = arith.constant 0 : index
    %2 = memref.load %arg5[%c0_4] : memref<1xf32, #tpu.memory_space<smem>>
    %c0_i32 = arith.constant 0 : i32
    %c128_i32 = arith.constant 128 : i32
    %3 = arith.muli %c0_i32, %c128_i32 : i32
    %4 = tpu.assume_multiple %3, 128 : i32
    %cst = arith.constant 0.000000e+00 : f32
    %5 = vector.broadcast %cst : f32 to vector<128x8xf32>
    %6 = arith.index_cast %4 : i32 to index
    %c0_5 = arith.constant 0 : index
    %7 = vector.load %arg1[%6, %c0_5] : memref<128x1024xf32, #tpu.memory_space<vmem>>, vector<128x128xf32>
    %8 = arith.truncf %7 : vector<128x128xf32> to vector<128x128xbf16>
    %9 = vector.extract_strided_slice %0 {offsets = [0, 0, 0], sizes = [1, 8, 128], strides = [1, 1, 1]} : vector<8x8x128xbf16> to vector<1x8x128xbf16>
    %10 = vector.shape_cast %9 : vector<1x8x128xbf16> to vector<8x128xbf16>
    %cst_6 = arith.constant dense<0.000000e+00> : vector<128x8xf32>
    %11 = tpu.matmul %8, %10, %cst_6 {dimension_numbers = #tpu.dot_dimension_numbers<[1], [1], [0], [0], [0, 0, 1, 0], [], []>} : vector<128x128xbf16>, vector<8x128xbf16>, vector<128x8xf32> -> vector<128x8xf32>
    %12 = vector.extract_strided_slice %1 {offsets = [0, 0], sizes = [1, 8], strides = [1, 1]} : vector<8x8xf32> to vector<1x8xf32>
    %13 = vector.broadcast %12 : vector<1x8xf32> to vector<128x8xf32>
    %14 = arith.addf %11, %13 : vector<128x8xf32>
    %cst_7 = arith.constant dense<0xFF800000> : vector<128xf32>
    %15 = vector.multi_reduction <maximumf>, %14, %cst_7 [1] : vector<128x8xf32> to vector<128xf32>
    %16 = vector.shape_cast %15 : vector<128xf32> to vector<128x1xf32>
    %17 = vector.broadcast %16 : vector<128x1xf32> to vector<128x8xf32>
    %18 = arith.subf %14, %17 : vector<128x8xf32>
    %19 = math.exp %18 : vector<128x8xf32>
    %cst_8 = arith.constant dense<0.000000e+00> : vector<128xf32>
    %20 = vector.multi_reduction <add>, %19, %cst_8 [1] : vector<128x8xf32> to vector<128xf32>
    %21 = vector.shape_cast %20 : vector<128xf32> to vector<128x1xf32>
    %22 = tpu.reciprocal %21 {approx = true} : vector<128x1xf32> -> vector<128x1xf32>
    %23 = vector.broadcast %22 : vector<128x1xf32> to vector<128x8xf32>
    %24 = arith.mulf %19, %23 : vector<128x8xf32>
    %c0_9 = arith.constant 0 : index
    %25 = memref.load %arg4[%c0_9] : memref<8xf32, #tpu.memory_space<smem>>
    %26 = vector.broadcast %25 : f32 to vector<128x8xf32>
    %27 = arith.mulf %26, %24 : vector<128x8xf32>
    %28 = arith.addf %5, %27 : vector<128x8xf32>
    %29 = arith.index_cast %4 : i32 to index
    %c128 = arith.constant 128 : index
    %30 = vector.load %arg1[%29, %c128] : memref<128x1024xf32, #tpu.memory_space<vmem>>, vector<128x128xf32>
    %31 = arith.truncf %30 : vector<128x128xf32> to vector<128x128xbf16>
    %32 = vector.extract_strided_slice %0 {offsets = [1, 0, 0], sizes = [1, 8, 128], strides = [1, 1, 1]} : vector<8x8x128xbf16> to vector<1x8x128xbf16>
    %33 = vector.shape_cast %32 : vector<1x8x128xbf16> to vector<8x128xbf16>
    %cst_10 = arith.constant dense<0.000000e+00> : vector<128x8xf32>
    %34 = tpu.matmul %31, %33, %cst_10 {dimension_numbers = #tpu.dot_dimension_numbers<[1], [1], [0], [0], [0, 0, 1, 0], [], []>} : vector<128x128xbf16>, vector<8x128xbf16>, vector<128x8xf32> -> vector<128x8xf32>
    %35 = vector.extract_strided_slice %1 {offsets = [1, 0], sizes = [1, 8], strides = [1, 1]} : vector<8x8xf32> to vector<1x8xf32>
    %36 = vector.broadcast %35 : vector<1x8xf32> to vector<128x8xf32>
    %37 = arith.addf %34, %36 : vector<128x8xf32>
    %cst_11 = arith.constant dense<0xFF800000> : vector<128xf32>
    %38 = vector.multi_reduction <maximumf>, %37, %cst_11 [1] : vector<128x8xf32> to vector<128xf32>
    %39 = vector.shape_cast %38 : vector<128xf32> to vector<128x1xf32>
    %40 = vector.broadcast %39 : vector<128x1xf32> to vector<128x8xf32>
    %41 = arith.subf %37, %40 : vector<128x8xf32>
    %42 = math.exp %41 : vector<128x8xf32>
    %cst_12 = arith.constant dense<0.000000e+00> : vector<128xf32>
    %43 = vector.multi_reduction <add>, %42, %cst_12 [1] : vector<128x8xf32> to vector<128xf32>
    %44 = vector.shape_cast %43 : vector<128xf32> to vector<128x1xf32>
    %45 = tpu.reciprocal %44 {approx = true} : vector<128x1xf32> -> vector<128x1xf32>
    %46 = vector.broadcast %45 : vector<128x1xf32> to vector<128x8xf32>
    %47 = arith.mulf %42, %46 : vector<128x8xf32>
    %c1 = arith.constant 1 : index
    %48 = memref.load %arg4[%c1] : memref<8xf32, #tpu.memory_space<smem>>
    %49 = vector.broadcast %48 : f32 to vector<128x8xf32>
    %50 = arith.mulf %49, %47 : vector<128x8xf32>
    %51 = arith.addf %28, %50 : vector<128x8xf32>
    %52 = arith.index_cast %4 : i32 to index
    %c256 = arith.constant 256 : index
    %53 = vector.load %arg1[%52, %c256] : memref<128x1024xf32, #tpu.memory_space<vmem>>, vector<128x128xf32>
    %54 = arith.truncf %53 : vector<128x128xf32> to vector<128x128xbf16>
    %55 = vector.extract_strided_slice %0 {offsets = [2, 0, 0], sizes = [1, 8, 128], strides = [1, 1, 1]} : vector<8x8x128xbf16> to vector<1x8x128xbf16>
    %56 = vector.shape_cast %55 : vector<1x8x128xbf16> to vector<8x128xbf16>
    %cst_13 = arith.constant dense<0.000000e+00> : vector<128x8xf32>
    %57 = tpu.matmul %54, %56, %cst_13 {dimension_numbers = #tpu.dot_dimension_numbers<[1], [1], [0], [0], [0, 0, 1, 0], [], []>} : vector<128x128xbf16>, vector<8x128xbf16>, vector<128x8xf32> -> vector<128x8xf32>
    %58 = vector.extract_strided_slice %1 {offsets = [2, 0], sizes = [1, 8], strides = [1, 1]} : vector<8x8xf32> to vector<1x8xf32>
    %59 = vector.broadcast %58 : vector<1x8xf32> to vector<128x8xf32>
    %60 = arith.addf %57, %59 : vector<128x8xf32>
    %cst_14 = arith.constant dense<0xFF800000> : vector<128xf32>
    %61 = vector.multi_reduction <maximumf>, %60, %cst_14 [1] : vector<128x8xf32> to vector<128xf32>
    %62 = vector.shape_cast %61 : vector<128xf32> to vector<128x1xf32>
    %63 = vector.broadcast %62 : vector<128x1xf32> to vector<128x8xf32>
    %64 = arith.subf %60, %63 : vector<128x8xf32>
    %65 = math.exp %64 : vector<128x8xf32>
    %cst_15 = arith.constant dense<0.000000e+00> : vector<128xf32>
    %66 = vector.multi_reduction <add>, %65, %cst_15 [1] : vector<128x8xf32> to vector<128xf32>
    %67 = vector.shape_cast %66 : vector<128xf32> to vector<128x1xf32>
    %68 = tpu.reciprocal %67 {approx = true} : vector<128x1xf32> -> vector<128x1xf32>
    %69 = vector.broadcast %68 : vector<128x1xf32> to vector<128x8xf32>
    %70 = arith.mulf %65, %69 : vector<128x8xf32>
    %c2 = arith.constant 2 : index
    %71 = memref.load %arg4[%c2] : memref<8xf32, #tpu.memory_space<smem>>
    %72 = vector.broadcast %71 : f32 to vector<128x8xf32>
    %73 = arith.mulf %72, %70 : vector<128x8xf32>
    %74 = arith.addf %51, %73 : vector<128x8xf32>
    %75 = arith.index_cast %4 : i32 to index
    %c384 = arith.constant 384 : index
    %76 = vector.load %arg1[%75, %c384] : memref<128x1024xf32, #tpu.memory_space<vmem>>, vector<128x128xf32>
    %77 = arith.truncf %76 : vector<128x128xf32> to vector<128x128xbf16>
    %78 = vector.extract_strided_slice %0 {offsets = [3, 0, 0], sizes = [1, 8, 128], strides = [1, 1, 1]} : vector<8x8x128xbf16> to vector<1x8x128xbf16>
    %79 = vector.shape_cast %78 : vector<1x8x128xbf16> to vector<8x128xbf16>
    %cst_16 = arith.constant dense<0.000000e+00> : vector<128x8xf32>
    %80 = tpu.matmul %77, %79, %cst_16 {dimension_numbers = #tpu.dot_dimension_numbers<[1], [1], [0], [0], [0, 0, 1, 0], [], []>} : vector<128x128xbf16>, vector<8x128xbf16>, vector<128x8xf32> -> vector<128x8xf32>
    %81 = vector.extract_strided_slice %1 {offsets = [3, 0], sizes = [1, 8], strides = [1, 1]} : vector<8x8xf32> to vector<1x8xf32>
    %82 = vector.broadcast %81 : vector<1x8xf32> to vector<128x8xf32>
    %83 = arith.addf %80, %82 : vector<128x8xf32>
    %cst_17 = arith.constant dense<0xFF800000> : vector<128xf32>
    %84 = vector.multi_reduction <maximumf>, %83, %cst_17 [1] : vector<128x8xf32> to vector<128xf32>
    %85 = vector.shape_cast %84 : vector<128xf32> to vector<128x1xf32>
    %86 = vector.broadcast %85 : vector<128x1xf32> to vector<128x8xf32>
    %87 = arith.subf %83, %86 : vector<128x8xf32>
    %88 = math.exp %87 : vector<128x8xf32>
    %cst_18 = arith.constant dense<0.000000e+00> : vector<128xf32>
    %89 = vector.multi_reduction <add>, %88, %cst_18 [1] : vector<128x8xf32> to vector<128xf32>
    %90 = vector.shape_cast %89 : vector<128xf32> to vector<128x1xf32>
    %91 = tpu.reciprocal %90 {approx = true} : vector<128x1xf32> -> vector<128x1xf32>
    %92 = vector.broadcast %91 : vector<128x1xf32> to vector<128x8xf32>
    %93 = arith.mulf %88, %92 : vector<128x8xf32>
    %c3 = arith.constant 3 : index
    %94 = memref.load %arg4[%c3] : memref<8xf32, #tpu.memory_space<smem>>
    %95 = vector.broadcast %94 : f32 to vector<128x8xf32>
    %96 = arith.mulf %95, %93 : vector<128x8xf32>
    %97 = arith.addf %74, %96 : vector<128x8xf32>
    %98 = arith.index_cast %4 : i32 to index
    %c512 = arith.constant 512 : index
    %99 = vector.load %arg1[%98, %c512] : memref<128x1024xf32, #tpu.memory_space<vmem>>, vector<128x128xf32>
    %100 = arith.truncf %99 : vector<128x128xf32> to vector<128x128xbf16>
    %101 = vector.extract_strided_slice %0 {offsets = [4, 0, 0], sizes = [1, 8, 128], strides = [1, 1, 1]} : vector<8x8x128xbf16> to vector<1x8x128xbf16>
    %102 = vector.shape_cast %101 : vector<1x8x128xbf16> to vector<8x128xbf16>
    %cst_19 = arith.constant dense<0.000000e+00> : vector<128x8xf32>
    %103 = tpu.matmul %100, %102, %cst_19 {dimension_numbers = #tpu.dot_dimension_numbers<[1], [1], [0], [0], [0, 0, 1, 0], [], []>} : vector<128x128xbf16>, vector<8x128xbf16>, vector<128x8xf32> -> vector<128x8xf32>
    %104 = vector.extract_strided_slice %1 {offsets = [4, 0], sizes = [1, 8], strides = [1, 1]} : vector<8x8xf32> to vector<1x8xf32>
    %105 = vector.broadcast %104 : vector<1x8xf32> to vector<128x8xf32>
    %106 = arith.addf %103, %105 : vector<128x8xf32>
    %cst_20 = arith.constant dense<0xFF800000> : vector<128xf32>
    %107 = vector.multi_reduction <maximumf>, %106, %cst_20 [1] : vector<128x8xf32> to vector<128xf32>
    %108 = vector.shape_cast %107 : vector<128xf32> to vector<128x1xf32>
    %109 = vector.broadcast %108 : vector<128x1xf32> to vector<128x8xf32>
    %110 = arith.subf %106, %109 : vector<128x8xf32>
    %111 = math.exp %110 : vector<128x8xf32>
    %cst_21 = arith.constant dense<0.000000e+00> : vector<128xf32>
    %112 = vector.multi_reduction <add>, %111, %cst_21 [1] : vector<128x8xf32> to vector<128xf32>
    %113 = vector.shape_cast %112 : vector<128xf32> to vector<128x1xf32>
    %114 = tpu.reciprocal %113 {approx = true} : vector<128x1xf32> -> vector<128x1xf32>
    %115 = vector.broadcast %114 : vector<128x1xf32> to vector<128x8xf32>
    %116 = arith.mulf %111, %115 : vector<128x8xf32>
    %c4 = arith.constant 4 : index
    %117 = memref.load %arg4[%c4] : memref<8xf32, #tpu.memory_space<smem>>
    %118 = vector.broadcast %117 : f32 to vector<128x8xf32>
    %119 = arith.mulf %118, %116 : vector<128x8xf32>
    %120 = arith.addf %97, %119 : vector<128x8xf32>
    %121 = arith.index_cast %4 : i32 to index
    %c640 = arith.constant 640 : index
    %122 = vector.load %arg1[%121, %c640] : memref<128x1024xf32, #tpu.memory_space<vmem>>, vector<128x128xf32>
    %123 = arith.truncf %122 : vector<128x128xf32> to vector<128x128xbf16>
    %124 = vector.extract_strided_slice %0 {offsets = [5, 0, 0], sizes = [1, 8, 128], strides = [1, 1, 1]} : vector<8x8x128xbf16> to vector<1x8x128xbf16>
    %125 = vector.shape_cast %124 : vector<1x8x128xbf16> to vector<8x128xbf16>
    %cst_22 = arith.constant dense<0.000000e+00> : vector<128x8xf32>
    %126 = tpu.matmul %123, %125, %cst_22 {dimension_numbers = #tpu.dot_dimension_numbers<[1], [1], [0], [0], [0, 0, 1, 0], [], []>} : vector<128x128xbf16>, vector<8x128xbf16>, vector<128x8xf32> -> vector<128x8xf32>
    %127 = vector.extract_strided_slice %1 {offsets = [5, 0], sizes = [1, 8], strides = [1, 1]} : vector<8x8xf32> to vector<1x8xf32>
    %128 = vector.broadcast %127 : vector<1x8xf32> to vector<128x8xf32>
    %129 = arith.addf %126, %128 : vector<128x8xf32>
    %cst_23 = arith.constant dense<0xFF800000> : vector<128xf32>
    %130 = vector.multi_reduction <maximumf>, %129, %cst_23 [1] : vector<128x8xf32> to vector<128xf32>
    %131 = vector.shape_cast %130 : vector<128xf32> to vector<128x1xf32>
    %132 = vector.broadcast %131 : vector<128x1xf32> to vector<128x8xf32>
    %133 = arith.subf %129, %132 : vector<128x8xf32>
    %134 = math.exp %133 : vector<128x8xf32>
    %cst_24 = arith.constant dense<0.000000e+00> : vector<128xf32>
    %135 = vector.multi_reduction <add>, %134, %cst_24 [1] : vector<128x8xf32> to vector<128xf32>
    %136 = vector.shape_cast %135 : vector<128xf32> to vector<128x1xf32>
    %137 = tpu.reciprocal %136 {approx = true} : vector<128x1xf32> -> vector<128x1xf32>
    %138 = vector.broadcast %137 : vector<128x1xf32> to vector<128x8xf32>
    %139 = arith.mulf %134, %138 : vector<128x8xf32>
    %c5 = arith.constant 5 : index
    %140 = memref.load %arg4[%c5] : memref<8xf32, #tpu.memory_space<smem>>
    %141 = vector.broadcast %140 : f32 to vector<128x8xf32>
    %142 = arith.mulf %141, %139 : vector<128x8xf32>
    %143 = arith.addf %120, %142 : vector<128x8xf32>
    %144 = arith.index_cast %4 : i32 to index
    %c768 = arith.constant 768 : index
    %145 = vector.load %arg1[%144, %c768] : memref<128x1024xf32, #tpu.memory_space<vmem>>, vector<128x128xf32>
    %146 = arith.truncf %145 : vector<128x128xf32> to vector<128x128xbf16>
    %147 = vector.extract_strided_slice %0 {offsets = [6, 0, 0], sizes = [1, 8, 128], strides = [1, 1, 1]} : vector<8x8x128xbf16> to vector<1x8x128xbf16>
    %148 = vector.shape_cast %147 : vector<1x8x128xbf16> to vector<8x128xbf16>
    %cst_25 = arith.constant dense<0.000000e+00> : vector<128x8xf32>
    %149 = tpu.matmul %146, %148, %cst_25 {dimension_numbers = #tpu.dot_dimension_numbers<[1], [1], [0], [0], [0, 0, 1, 0], [], []>} : vector<128x128xbf16>, vector<8x128xbf16>, vector<128x8xf32> -> vector<128x8xf32>
    %150 = vector.extract_strided_slice %1 {offsets = [6, 0], sizes = [1, 8], strides = [1, 1]} : vector<8x8xf32> to vector<1x8xf32>
    %151 = vector.broadcast %150 : vector<1x8xf32> to vector<128x8xf32>
    %152 = arith.addf %149, %151 : vector<128x8xf32>
    %cst_26 = arith.constant dense<0xFF800000> : vector<128xf32>
    %153 = vector.multi_reduction <maximumf>, %152, %cst_26 [1] : vector<128x8xf32> to vector<128xf32>
    %154 = vector.shape_cast %153 : vector<128xf32> to vector<128x1xf32>
    %155 = vector.broadcast %154 : vector<128x1xf32> to vector<128x8xf32>
    %156 = arith.subf %152, %155 : vector<128x8xf32>
    %157 = math.exp %156 : vector<128x8xf32>
    %cst_27 = arith.constant dense<0.000000e+00> : vector<128xf32>
    %158 = vector.multi_reduction <add>, %157, %cst_27 [1] : vector<128x8xf32> to vector<128xf32>
    %159 = vector.shape_cast %158 : vector<128xf32> to vector<128x1xf32>
    %160 = tpu.reciprocal %159 {approx = true} : vector<128x1xf32> -> vector<128x1xf32>
    %161 = vector.broadcast %160 : vector<128x1xf32> to vector<128x8xf32>
    %162 = arith.mulf %157, %161 : vector<128x8xf32>
    %c6 = arith.constant 6 : index
    %163 = memref.load %arg4[%c6] : memref<8xf32, #tpu.memory_space<smem>>
    %164 = vector.broadcast %163 : f32 to vector<128x8xf32>
    %165 = arith.mulf %164, %162 : vector<128x8xf32>
    %166 = arith.addf %143, %165 : vector<128x8xf32>
    %167 = arith.index_cast %4 : i32 to index
    %c896 = arith.constant 896 : index
    %168 = vector.load %arg1[%167, %c896] : memref<128x1024xf32, #tpu.memory_space<vmem>>, vector<128x128xf32>
    %169 = arith.truncf %168 : vector<128x128xf32> to vector<128x128xbf16>
    %170 = vector.extract_strided_slice %0 {offsets = [7, 0, 0], sizes = [1, 8, 128], strides = [1, 1, 1]} : vector<8x8x128xbf16> to vector<1x8x128xbf16>
    %171 = vector.shape_cast %170 : vector<1x8x128xbf16> to vector<8x128xbf16>
    %cst_28 = arith.constant dense<0.000000e+00> : vector<128x8xf32>
    %172 = tpu.matmul %169, %171, %cst_28 {dimension_numbers = #tpu.dot_dimension_numbers<[1], [1], [0], [0], [0, 0, 1, 0], [], []>} : vector<128x128xbf16>, vector<8x128xbf16>, vector<128x8xf32> -> vector<128x8xf32>
    %173 = vector.extract_strided_slice %1 {offsets = [7, 0], sizes = [1, 8], strides = [1, 1]} : vector<8x8xf32> to vector<1x8xf32>
    %174 = vector.broadcast %173 : vector<1x8xf32> to vector<128x8xf32>
    %175 = arith.addf %172, %174 : vector<128x8xf32>
    %cst_29 = arith.constant dense<0xFF800000> : vector<128xf32>
    %176 = vector.multi_reduction <maximumf>, %175, %cst_29 [1] : vector<128x8xf32> to vector<128xf32>
    %177 = vector.shape_cast %176 : vector<128xf32> to vector<128x1xf32>
    %178 = vector.broadcast %177 : vector<128x1xf32> to vector<128x8xf32>
    %179 = arith.subf %175, %178 : vector<128x8xf32>
    %180 = math.exp %179 : vector<128x8xf32>
    %cst_30 = arith.constant dense<0.000000e+00> : vector<128xf32>
    %181 = vector.multi_reduction <add>, %180, %cst_30 [1] : vector<128x8xf32> to vector<128xf32>
    %182 = vector.shape_cast %181 : vector<128xf32> to vector<128x1xf32>
    %183 = tpu.reciprocal %182 {approx = true} : vector<128x1xf32> -> vector<128x1xf32>
    %184 = vector.broadcast %183 : vector<128x1xf32> to vector<128x8xf32>
    %185 = arith.mulf %180, %184 : vector<128x8xf32>
    %c7 = arith.constant 7 : index
    %186 = memref.load %arg4[%c7] : memref<8xf32, #tpu.memory_space<smem>>
    %187 = vector.broadcast %186 : f32 to vector<128x8xf32>
    %188 = arith.mulf %187, %185 : vector<128x8xf32>
    %189 = arith.addf %166, %188 : vector<128x8xf32>
    %cst_31 = arith.constant 0.000000e+00 : f32
    %190 = vector.broadcast %cst_31 : f32 to vector<128x128xf32>
    %191 = vector.extract_strided_slice %189 {offsets = [0, 0], sizes = [128, 1], strides = [1, 1]} : vector<128x8xf32> to vector<128x1xf32>
    %192 = arith.index_cast %4 : i32 to index
    %c0_32 = arith.constant 0 : index
    %193 = vector.load %arg1[%192, %c0_32] : memref<128x1024xf32, #tpu.memory_space<vmem>>, vector<128x128xf32>
    %194 = vector.broadcast %191 : vector<128x1xf32> to vector<128x128xf32>
    %195 = arith.mulf %194, %193 : vector<128x128xf32>
    %196 = arith.addf %190, %195 : vector<128x128xf32>
    %197 = vector.extract_strided_slice %189 {offsets = [0, 1], sizes = [128, 1], strides = [1, 1]} : vector<128x8xf32> to vector<128x1xf32>
    %198 = arith.index_cast %4 : i32 to index
    %c128_33 = arith.constant 128 : index
    %199 = vector.load %arg1[%198, %c128_33] : memref<128x1024xf32, #tpu.memory_space<vmem>>, vector<128x128xf32>
    %200 = vector.broadcast %197 : vector<128x1xf32> to vector<128x128xf32>
    %201 = arith.mulf %200, %199 : vector<128x128xf32>
    %202 = arith.addf %196, %201 : vector<128x128xf32>
    %203 = vector.extract_strided_slice %189 {offsets = [0, 2], sizes = [128, 1], strides = [1, 1]} : vector<128x8xf32> to vector<128x1xf32>
    %204 = arith.index_cast %4 : i32 to index
    %c256_34 = arith.constant 256 : index
    %205 = vector.load %arg1[%204, %c256_34] : memref<128x1024xf32, #tpu.memory_space<vmem>>, vector<128x128xf32>
    %206 = vector.broadcast %203 : vector<128x1xf32> to vector<128x128xf32>
    %207 = arith.mulf %206, %205 : vector<128x128xf32>
    %208 = arith.addf %202, %207 : vector<128x128xf32>
    %209 = vector.extract_strided_slice %189 {offsets = [0, 3], sizes = [128, 1], strides = [1, 1]} : vector<128x8xf32> to vector<128x1xf32>
    %210 = arith.index_cast %4 : i32 to index
    %c384_35 = arith.constant 384 : index
    %211 = vector.load %arg1[%210, %c384_35] : memref<128x1024xf32, #tpu.memory_space<vmem>>, vector<128x128xf32>
    %212 = vector.broadcast %209 : vector<128x1xf32> to vector<128x128xf32>
    %213 = arith.mulf %212, %211 : vector<128x128xf32>
    %214 = arith.addf %208, %213 : vector<128x128xf32>
    %215 = vector.extract_strided_slice %189 {offsets = [0, 4], sizes = [128, 1], strides = [1, 1]} : vector<128x8xf32> to vector<128x1xf32>
    %216 = arith.index_cast %4 : i32 to index
    %c512_36 = arith.constant 512 : index
    %217 = vector.load %arg1[%216, %c512_36] : memref<128x1024xf32, #tpu.memory_space<vmem>>, vector<128x128xf32>
    %218 = vector.broadcast %215 : vector<128x1xf32> to vector<128x128xf32>
    %219 = arith.mulf %218, %217 : vector<128x128xf32>
    %220 = arith.addf %214, %219 : vector<128x128xf32>
    %221 = vector.extract_strided_slice %189 {offsets = [0, 5], sizes = [128, 1], strides = [1, 1]} : vector<128x8xf32> to vector<128x1xf32>
    %222 = arith.index_cast %4 : i32 to index
    %c640_37 = arith.constant 640 : index
    %223 = vector.load %arg1[%222, %c640_37] : memref<128x1024xf32, #tpu.memory_space<vmem>>, vector<128x128xf32>
    %224 = vector.broadcast %221 : vector<128x1xf32> to vector<128x128xf32>
    %225 = arith.mulf %224, %223 : vector<128x128xf32>
    %226 = arith.addf %220, %225 : vector<128x128xf32>
    %227 = vector.extract_strided_slice %189 {offsets = [0, 6], sizes = [128, 1], strides = [1, 1]} : vector<128x8xf32> to vector<128x1xf32>
    %228 = arith.index_cast %4 : i32 to index
    %c768_38 = arith.constant 768 : index
    %229 = vector.load %arg1[%228, %c768_38] : memref<128x1024xf32, #tpu.memory_space<vmem>>, vector<128x128xf32>
    %230 = vector.broadcast %227 : vector<128x1xf32> to vector<128x128xf32>
    %231 = arith.mulf %230, %229 : vector<128x128xf32>
    %232 = arith.addf %226, %231 : vector<128x128xf32>
    %233 = vector.extract_strided_slice %189 {offsets = [0, 7], sizes = [128, 1], strides = [1, 1]} : vector<128x8xf32> to vector<128x1xf32>
    %234 = arith.index_cast %4 : i32 to index
    %c896_39 = arith.constant 896 : index
    %235 = vector.load %arg1[%234, %c896_39] : memref<128x1024xf32, #tpu.memory_space<vmem>>, vector<128x128xf32>
    %236 = vector.broadcast %233 : vector<128x1xf32> to vector<128x128xf32>
    %237 = arith.mulf %236, %235 : vector<128x128xf32>
    %238 = arith.addf %232, %237 : vector<128x128xf32>
    %239 = vector.broadcast %2 : f32 to vector<128x128xf32>
    %240 = arith.addf %238, %239 : vector<128x128xf32>
    %241 = arith.index_cast %4 : i32 to index
    %c0_40 = arith.constant 0 : index
    %242 = vector.load %arg6[%241, %c0_40] : memref<128x128xf32, #tpu.memory_space<vmem>>, vector<128x128xf32>
    tpu.vector_store %arg6[%241, %c0_40], %240 {strides = array<i32>} : memref<128x128xf32, #tpu.memory_space<vmem>>, vector<128x128xf32>,
    %c1_i32 = arith.constant 1 : i32
    return
  }
  func.func @transform_0(%arg0: i32) -> (i32, i32) {
    %c0_i32 = arith.constant 0 : i32
    %c0_i32_0 = arith.constant 0 : i32
    return %arg0, %c0_i32 : i32, i32
  }
  func.func @transform_1(%arg0: i32) -> (i32, i32, i32) {
    %c0_i32 = arith.constant 0 : i32
    %c0_i32_0 = arith.constant 0 : i32
    %c0_i32_1 = arith.constant 0 : i32
    %c0_i32_2 = arith.constant 0 : i32
    return %c0_i32, %c0_i32_0, %c0_i32_1 : i32, i32, i32
  }
  func.func @transform_2(%arg0: i32) -> (i32, i32) {
    %c0_i32 = arith.constant 0 : i32
    %c0_i32_0 = arith.constant 0 : i32
    %c0_i32_1 = arith.constant 0 : i32
    return %c0_i32, %c0_i32_0 : i32, i32
  }
  func.func @transform_3(%arg0: i32) -> i32 {
    %c0_i32 = arith.constant 0 : i32
    %c0_i32_0 = arith.constant 0 : i32
    return %c0_i32 : i32
  }
  func.func @transform_4(%arg0: i32) -> i32 {
    %c0_i32 = arith.constant 0 : i32
    %c0_i32_0 = arith.constant 0 : i32
    return %c0_i32 : i32
  }
  func.func @transform_5(%arg0: i32) -> (i32, i32) {
    %c0_i32 = arith.constant 0 : i32
    %c0_i32_0 = arith.constant 0 : i32
    return %arg0, %c0_i32 : i32, i32
  }
}

</mosaic_0001>

<llo_original>
// kernel: tpu_custom_call.1
$region0: #{tpu_custom_call.1}
  #allocation0 [shape = 'u32[]', space=smem, size = 0x4, offset = 0x4, fixed_abs, tag = 'smem constant byte address 0x4 - core index']
  #allocation1 [shape = 'u32[144,128]{1,0:T(1,128)}', space=vmem, size = 0x12000, scoped, tag = 'internal scratch']
  #allocation2 [shape = 'f32[1]{0:T(128)S(6)}', space=smem, size = 0x200, scoped, tag = 'scoped memory for tpu_custom_call.1']
  %s0 = inlined_call_operand.hbm [shape: f32[256,1024], index: 0, kind: input, shape index: {}]
  %s1 = inlined_call_operand.hbm [shape: bf16[8,8,128], index: 1, kind: input, shape index: {}]
  %s2 = inlined_call_operand.vmem [shape: f32[8,8], index: 2, kind: input, shape index: {}]
  %s3 = inlined_call_operand.vmem [shape: f32[8], index: 3, kind: input, shape index: {}]
  %s4 = inlined_call_operand.<no memory space> [shape: f32[1], index: 4, kind: input, shape index: {}]
  %s5 = inlined_call_operand.hbm [shape: f32[256,128], index: 5, kind: output, shape index: {}]
  %s6 = sld [smem:[#allocation0]]
  $region65: #{tpu_custom_call.1} parent=0
    _
  %s8 = ssub.s32 1, %s6
  %s9 = scalar_select 0, %s8, %s6
  %10 = sst [smem:[#allocation2]] %s4
  $region1: #{tpu_custom_call.1} parent=0
    #allocation3 [shape = 'u8[1048576]{0}', space=vmem, size = 0x100000, scoped, tag = 'input window, operand 0']
    #allocation4 [shape = 's32[2]{0}', space=sflag, size = 0x8, scoped, tag = 'scoped memory for tpu_custom_call.1']
    #allocation5 [shape = 's32[2]{0}', space=sflag, size = 0x8, scoped, tag = 'scoped memory for tpu_custom_call.1']
    #allocation6 [shape = 's32[2]{0}', space=sflag, size = 0x8, scoped, tag = 'scoped memory for tpu_custom_call.1']
    #allocation7 [shape = 'u8[16384]{0}', space=vmem, size = 0x4000, scoped, tag = 'input window, operand 1, single buffered']
    #allocation8 [shape = 's32[1]{0}', space=sflag, size = 0x4, scoped, tag = 'scoped memory for tpu_custom_call.1']
    #allocation9 [shape = 'u8[512]{0}', space=smem, size = 0x200, scoped, tag = 'input window, operand 3, single buffered']
    #allocation10 [shape = 'u8[131072]{0}', space=vmem, size = 0x20000, scoped, tag = 'output window, operand 0']
    %11 = vsyncpa [#allocation4], 0
    %s12 = scalar_lea.sflag [#allocation4], 1
    %13 = vsyncpa %s12, 0
    %14 = vsyncpa [#allocation8], 0
    %15 = vsyncpa [#allocation6], 0
    %16 = vsyncpa [#allocation5], 0
    %s17 = scalar_lea.sflag [#allocation5], 1
    %18 = vsyncpa %s17, 0
    loop: start=0, step=1, limit=4
    $region2: #{tpu_custom_call.1} parent=1 // loop_pre_header
      _
    $region3: #{tpu_custom_call.1} parent=1 // loop_header
      %s20 = sphi 0, %s24
      %p21 = scmp.ge.s32.totalorder %s20, 4
      %s30 = sphi 0, %s32
      %s33 = sphi 0, %s30
      %s34 = sphi 0, %s33
      %s50 = sphi 0, %s34
      %s54 = sphi 0, %s54
      %s56 = sphi 0, %s54
      %s57 = sphi 0, %s56
      %s71 = sphi 0, %s57
      %s75 = sphi 0, %s75
      %s77 = sphi 0, %s75
      %s78 = sphi 0, %s77
      %s92 = sphi 0, %s78
      %s96 = sphi 0, %s96
      %s98 = sphi 0, %s96
      %s99 = sphi 0, %s98
      %s113 = sphi 0, %s99
      %s117 = sphi 0, %s117
      %s119 = sphi 0, %s117
      %s120 = sphi 0, %s119
      %s134 = sphi 0, %s120
      %s140 = sphi 0, %s142
      %s143 = sphi 0, %s140
      %s144 = sphi 0, %s143
      %s160 = sphi 0, %s144
    $region4: #{tpu_custom_call.1} parent=1 // loop_header_branch
      %23 = sbr.rel (%p21) target = $region8
    $region5: #{tpu_custom_call.1} parent=1 // loop_body
      %s25 = ssub.s32 %s20, 1
      %s26 = ssub.s32 %s20, 2
      %s27 = sadd.s32 %s20, 1
      %s28 = ssub.s32 %s20, %s27
      %p29 = scmp.eq.s32.totalorder %s28, 0
      %s31 = sadd.s32 %s30, 1
      %s32 = scalar_select %p29, %s30, %s31
      %p35 = pneg %p29
      %p36 = scmp.eq.s32.totalorder %s20, 1
      %p37 = por %p35, %p36
      %p38 = scmp.ne.s32.totalorder %s30, %s33
      %p39 = scmp.eq.s32.totalorder %s20, 0
      %p40 = por %p38, %p39
      %p41 = scmp.ne.s32.totalorder %s30, %s33
      %p42 = scmp.eq.s32.totalorder %s25, 1
      %p43 = por %p41, %p42
      %p44 = scmp.ne.s32.totalorder %s33, %s34
      %p45 = scmp.eq.s32.totalorder %s25, 0
      %p46 = por %p44, %p45
      %p47 = scmp.ne.s32.totalorder %s33, %s34
      %p48 = scmp.eq.s32.totalorder %s26, 1
      %p49 = por %p47, %p48
      %p51 = scmp.ne.s32.totalorder %s34, %s50
      %p52 = scmp.eq.s32.totalorder %s26, 0
      %p53 = por %p51, %p52
      %s55 = sadd.s32 %s54, 1
      %p58 = scmp.eq.s32.totalorder %s20, 1
      %p59 = scmp.ne.s32.totalorder %s54, %s56
      %p60 = scmp.eq.s32.totalorder %s20, 0
      %p61 = por %p59, %p60
      %p62 = scmp.ne.s32.totalorder %s54, %s56
      %p63 = scmp.eq.s32.totalorder %s25, 1
      %p64 = por %p62, %p63
      %p65 = scmp.ne.s32.totalorder %s56, %s57
      %p66 = scmp.eq.s32.totalorder %s25, 0
      %p67 = por %p65, %p66
      %p68 = scmp.ne.s32.totalorder %s56, %s57
      %p69 = scmp.eq.s32.totalorder %s26, 1
      %p70 = por %p68, %p69
      %p72 = scmp.ne.s32.totalorder %s57, %s71
      %p73 = scmp.eq.s32.totalorder %s26, 0
      %p74 = por %p72, %p73
      %s76 = sadd.s32 %s75, 1
      %p79 = scmp.eq.s32.totalorder %s20, 1
      %p80 = scmp.ne.s32.totalorder %s75, %s77
      %p81 = scmp.eq.s32.totalorder %s20, 0
      %p82 = por %p80, %p81
      %p83 = scmp.ne.s32.totalorder %s75, %s77
      %p84 = scmp.eq.s32.totalorder %s25, 1
      %p85 = por %p83, %p84
      %p86 = scmp.ne.s32.totalorder %s77, %s78
      %p87 = scmp.eq.s32.totalorder %s25, 0
      %p88 = por %p86, %p87
      %p89 = scmp.ne.s32.totalorder %s77, %s78
      %p90 = scmp.eq.s32.totalorder %s26, 1
      %p91 = por %p89, %p90
      %p93 = scmp.ne.s32.totalorder %s78, %s92
      %p94 = scmp.eq.s32.totalorder %s26, 0
      %p95 = por %p93, %p94
      %s97 = sadd.s32 %s96, 1
      %p100 = scmp.eq.s32.totalorder %s20, 1
      %p101 = scmp.ne.s32.totalorder %s96, %s98
      %p102 = scmp.eq.s32.totalorder %s20, 0
      %p103 = por %p101, %p102
      %p104 = scmp.ne.s32.totalorder %s96, %s98
      %p105 = scmp.eq.s32.totalorder %s25, 1
      %p106 = por %p104, %p105
      %p107 = scmp.ne.s32.totalorder %s98, %s99
      %p108 = scmp.eq.s32.totalorder %s25, 0
      %p109 = por %p107, %p108
      %p110 = scmp.ne.s32.totalorder %s98, %s99
      %p111 = scmp.eq.s32.totalorder %s26, 1
      %p112 = por %p110, %p111
      %p114 = scmp.ne.s32.totalorder %s99, %s113
      %p115 = scmp.eq.s32.totalorder %s26, 0
      %p116 = por %p114, %p115
      %s118 = sadd.s32 %s117, 1
      %p121 = scmp.eq.s32.totalorder %s20, 1
      %p122 = scmp.ne.s32.totalorder %s117, %s119
      %p123 = scmp.eq.s32.totalorder %s20, 0
      %p124 = por %p122, %p123
      %p125 = scmp.ne.s32.totalorder %s117, %s119
      %p126 = scmp.eq.s32.totalorder %s25, 1
      %p127 = por %p125, %p126
      %p128 = scmp.ne.s32.totalorder %s119, %s120
      %p129 = scmp.eq.s32.totalorder %s25, 0
      %p130 = por %p128, %p129
      %p131 = scmp.ne.s32.totalorder %s119, %s120
      %p132 = scmp.eq.s32.totalorder %s26, 1
      %p133 = por %p131, %p132
      %p135 = scmp.ne.s32.totalorder %s120, %s134
      %p136 = scmp.eq.s32.totalorder %s26, 0
      %p137 = por %p135, %p136
      %s138 = ssub.s32 %s20, %s27
      %p139 = scmp.eq.s32.totalorder %s138, 0
      %s141 = sadd.s32 %s140, 1
      %s142 = scalar_select %p139, %s140, %s141
      %p145 = pneg %p139
      %p146 = scmp.eq.s32.totalorder %s20, 1
      %p147 = por %p145, %p146
      %p148 = scmp.ne.s32.totalorder %s140, %s143
      %p149 = scmp.eq.s32.totalorder %s20, 0
      %p150 = por %p148, %p149
      %p151 = scmp.ne.s32.totalorder %s140, %s143
      %p152 = scmp.eq.s32.totalorder %s25, 1
      %p153 = por %p151, %p152
      %p154 = scmp.ne.s32.totalorder %s143, %s144
      %p155 = scmp.eq.s32.totalorder %s25, 0
      %p156 = por %p154, %p155
      %p157 = scmp.ne.s32.totalorder %s143, %s144
      %p158 = scmp.eq.s32.totalorder %s26, 1
      %p159 = por %p157, %p158
      %p161 = scmp.ne.s32.totalorder %s144, %s160
      %p162 = scmp.eq.s32.totalorder %s26, 0
      %p163 = por %p161, %p162
      %p164 = scmp.le.s32.totalorder 1, %s20
      %p165 = scmp.lt.s32.totalorder %s20, 3
      %p166 = pnand %p164, %p165
      %p167 = pneg %p166
      // Predicated region
      $region9: #{tpu_custom_call.1} parent=5 // pred_check
        _
      $region10: #{tpu_custom_call.1} parent=5 // pred_check_branch
        %169 = sbr.rel (%p166) target = $region12
      $region11: #{tpu_custom_call.1} parent=5 // pred_region
        %s170 = ssub.s32 %s20, 1
        // Predicated region
        $region13: #{tpu_custom_call.1} parent=11 // pred_check
          %p171 = pneg %p67
        $region14: #{tpu_custom_call.1} parent=11 // pred_check_branch
          %173 = sbr.rel (%p171) target = $region16
        $region15: #{tpu_custom_call.1} parent=11 // pred_region
          %s175 = ssub.s32 512, 512
          %176 = vsyncadd [#allocation8], %s175
          %s177 = sshll.u32 [#allocation7], 4
          %s178 = int_to_ptr.vmem [resolvable:$true] %s177
          %183 = dma.hbm_to_vmem [thread:$0]  %s1, 512, %s178, [#allocation8], 64, 64, 4
        $region16: #{tpu_custom_call.1} parent=11 // pred_fallthru
          _
        // Predicated region
        $region17: #{tpu_custom_call.1} parent=11 // pred_check
          %p184 = pneg %p88
        $region18: #{tpu_custom_call.1} parent=11 // pred_check_branch
          %186 = sbr.rel (%p184) target = $region20
        $region19: #{tpu_custom_call.1} parent=11 // pred_region
          _
        $region20: #{tpu_custom_call.1} parent=11 // pred_fallthru
          _
        // Predicated region
        $region21: #{tpu_custom_call.1} parent=11 // pred_check
          %p187 = pneg %p109
        $region22: #{tpu_custom_call.1} parent=11 // pred_check_branch
          %189 = sbr.rel (%p187) target = $region24
        $region23: #{tpu_custom_call.1} parent=11 // pred_region
          %s191 = ssub.s32 16, 16
          %192 = vsyncadd [#allocation6], %s191
          %s194 = sshll.u32 %s3, 4
          %s195 = int_to_ptr.vmem [resolvable:$true] %s194
          %197 = dma.vmem_to_smem %s195, 16, [#allocation9], [#allocation6]
        $region24: #{tpu_custom_call.1} parent=11 // pred_fallthru
          _
        // Predicated region
        $region25: #{tpu_custom_call.1} parent=11 // pred_check
          %p198 = pneg %p130
        $region26: #{tpu_custom_call.1} parent=11 // pred_check_branch
          %200 = sbr.rel (%p198) target = $region28
        $region27: #{tpu_custom_call.1} parent=11 // pred_region
          _
        $region28: #{tpu_custom_call.1} parent=11 // pred_fallthru
          _
      $region12: #{tpu_custom_call.1} parent=5 // pred_fallthru
        _
      %p201 = scmp.lt.s32.totalorder %s20, 2
      // Predicated region
      $region29: #{tpu_custom_call.1} parent=5 // pred_check
        %p202 = pneg %p201
      $region30: #{tpu_custom_call.1} parent=5 // pred_check_branch
        %204 = sbr.rel (%p202) target = $region32
      $region31: #{tpu_custom_call.1} parent=5 // pred_region
        // Predicated region
        $region33: #{tpu_custom_call.1} parent=31 // pred_check
          %p205 = pneg %p40
        $region34: #{tpu_custom_call.1} parent=31 // pred_check_branch
          %207 = sbr.rel (%p205) target = $region36
        $region35: #{tpu_custom_call.1} parent=31 // pred_region
          %s208 = sand.u32 %s30, 1
          %s209 = scalar_lea.sflag [#allocation4], %s208
          %s210 = sand.u32 %s30, 1
          %s211 = smul.addr %s210, 1024
          %s212 = scalar_lea.vmem [#allocation3], %s211
          %s213 = smul.u32 16, %s20
          %s215 = ssub.s32 16384, 16384
          %216 = vsyncadd %s209, %s215
          %s217 = smul.addr %s213, 8
          %s218 = smul.addr %s217, 128
          %s219 = scalar_lea.hbm %s0, %s218
          %s220 = sshll.u32 %s212, 4
          %s221 = int_to_ptr.vmem [resolvable:$true] %s220
          %226 = dma.hbm_to_vmem [thread:$0]  %s219, 16384, %s221, %s209, 1024, 1024, 64
        $region36: #{tpu_custom_call.1} parent=31 // pred_fallthru
          _
      $region32: #{tpu_custom_call.1} parent=5 // pred_fallthru
        _
      %p227 = scmp.le.s32.totalorder 1, %s20
      %p228 = scmp.lt.s32.totalorder %s20, 3
      %p229 = pnand %p227, %p228
      %p230 = pneg %p229
      // Predicated region
      $region37: #{tpu_custom_call.1} parent=5 // pred_check
        _
      $region38: #{tpu_custom_call.1} parent=5 // pred_check_branch
        %232 = sbr.rel (%p229) target = $region40
      $region39: #{tpu_custom_call.1} parent=5 // pred_region
        %s233 = ssub.s32 %s20, 1
        %s234 = sand.u32 %s33, 1
        %s235 = scalar_lea.sflag [#allocation4], %s234
        %s236 = sand.u32 %s33, 1
        %s237 = smul.addr %s236, 1024
        %s238 = scalar_lea.vmem [#allocation3], %s237
        // Predicated region
        $region41: #{tpu_custom_call.1} parent=39 // pred_check
          %p239 = pneg %p46
        $region42: #{tpu_custom_call.1} parent=39 // pred_check_branch
          %241 = sbr.rel (%p239) target = $region44
        $region43: #{tpu_custom_call.1} parent=39 // pred_region
          %242 = dma.done %s235, 16384
        $region44: #{tpu_custom_call.1} parent=39 // pred_fallthru
          _
        // Predicated region
        $region45: #{tpu_custom_call.1} parent=39 // pred_check
          %p243 = pneg %p67
        $region46: #{tpu_custom_call.1} parent=39 // pred_check_branch
          %245 = sbr.rel (%p243) target = $region48
        $region47: #{tpu_custom_call.1} parent=39 // pred_region
          %246 = dma.done [#allocation8], 512
        $region48: #{tpu_custom_call.1} parent=39 // pred_fallthru
          _
        // Predicated region
        $region49: #{tpu_custom_call.1} parent=39 // pred_check
          %p247 = pneg %p109
        $region50: #{tpu_custom_call.1} parent=39 // pred_check_branch
          %249 = sbr.rel (%p247) target = $region52
        $region51: #{tpu_custom_call.1} parent=39 // pred_region
          %250 = dma.done [#allocation6], 16
        $region52: #{tpu_custom_call.1} parent=39 // pred_fallthru
          _
        %251 = sfence
        %s252 = sand.u32 %s33, 1
        %s253 = scalar_lea.sflag [#allocation4], %s252
        %s254 = sand.u32 %s33, 1
        %s255 = smul.addr %s254, 1024
        %s256 = scalar_lea.vmem [#allocation3], %s255
        %p257 = pneg %p46
        %p258 = pneg %p43
        %p259 = pneg %p67
        %p260 = pneg %p64
        %p261 = pneg %p88
        %p262 = pneg %p85
        %p263 = pneg %p109
        %p264 = pneg %p106
        %p265 = pneg %p130
        %p266 = pneg %p127
        %p267 = pneg %p156
        %p268 = pneg %p153
        %s269 = sand.u32 %s143, 1
        %s270 = scalar_lea.sflag [#allocation5], %s269
        %s271 = sand.u32 %s143, 1
        %s272 = smul.addr %s271, 128
        %s273 = scalar_lea.vmem [#allocation10], %s272
        %s274 = smul.u32 16, %s25
        %s275 = smul.u32 16, %s25
        %v277 = vld [vmem:[#allocation7] sm:$0xf]
        %v278 = vld [vmem:[#allocation7 + $0x4] sm:$0xf]
        %v279 = vld [vmem:[#allocation7 + $0x8] sm:$0xf]
        %v280 = vld [vmem:[#allocation7 + $0xc] sm:$0xf]
        %v281 = vld [vmem:[#allocation7 + $0x10] sm:$0xf]
        %v282 = vld [vmem:[#allocation7 + $0x14] sm:$0xf]
        %v283 = vld [vmem:[#allocation7 + $0x18] sm:$0xf]
        %v284 = vld [vmem:[#allocation7 + $0x1c] sm:$0xf]
        %v285 = vld [vmem:[%s2] sm:$0xff]
        %s286 = sld [smem:[#allocation2]]
        %s287 = smul.u32 0, 8
        %s288 = smul.addr %s287, 8
        %s289 = scalar_lea.vmem %s238, %s288 [#allocation3]
        %v290 = vld [vmem:[%s289] sm:$0xff]
        %v291 = vld [vmem:[%s289 + $0x40] sm:$0xff]
        %v292 = vld [vmem:[%s289 + $0x80] sm:$0xff]
        %v293 = vld [vmem:[%s289 + $0xc0] sm:$0xff]
        %v294 = vld [vmem:[%s289 + $0x100] sm:$0xff]
        %v295 = vld [vmem:[%s289 + $0x140] sm:$0xff]
        %v296 = vld [vmem:[%s289 + $0x180] sm:$0xff]
        %v297 = vld [vmem:[%s289 + $0x1c0] sm:$0xff]
        %v298 = vld [vmem:[%s289 + $0x200] sm:$0xff]
        %v299 = vld [vmem:[%s289 + $0x240] sm:$0xff]
        %v300 = vld [vmem:[%s289 + $0x280] sm:$0xff]
        %v301 = vld [vmem:[%s289 + $0x2c0] sm:$0xff]
        %v302 = vld [vmem:[%s289 + $0x300] sm:$0xff]
        %v303 = vld [vmem:[%s289 + $0x340] sm:$0xff]
        %v304 = vld [vmem:[%s289 + $0x380] sm:$0xff]
        %v305 = vld [vmem:[%s289 + $0x3c0] sm:$0xff]
        %v306 = vpack.c.bf16 %v291, %v290
        %v307 = vpack.c.bf16 %v293, %v292
        %v308 = vpack.c.bf16 %v295, %v294
        %v309 = vpack.c.bf16 %v297, %v296
        %v310 = vpack.c.bf16 %v299, %v298
        %v311 = vpack.c.bf16 %v301, %v300
        %v312 = vpack.c.bf16 %v303, %v302
        %v313 = vpack.c.bf16 %v305, %v304
        %v314 = vlaneseq
        %v315 = vshrl.u32 %v314, 7
        %v316 = vsub.s32 0, %v315
        %v317 = vrot.slane %v285, %v316
        %318 = vmatprep.subr.bf16.mxu0 0
        %319 = vmatpush1.bf16.xpose.msra.mxu0 %v277
        %320 = vmatprep.subr.bf16.mxu0 0
        %321 = vmatpush1.bf16.xpose.msra.mxu0 0
        %322 = vmatprep.subr.bf16.mxu0 0
        %323 = vmatpush1.bf16.xpose.msra.mxu0 0
        %324 = vmatprep.subr.bf16.mxu0 0
        %325 = vmatpush1.bf16.xpose.msra.mxu0 0
        %326 = vmatprep.subr.bf16.mxu0 0
        %327 = vmatpush1.bf16.xpose.msra.mxu0 0
        %328 = vmatprep.subr.bf16.mxu0 0
        %329 = vmatpush1.bf16.xpose.msra.mxu0 0
        %330 = vmatprep.subr.bf16.mxu0 0
        %331 = vmatpush1.bf16.xpose.msra.mxu0 0
        %332 = vmatprep.subr.bf16.mxu0 0
        %333 = vmatpush1.bf16.xpose.msra.mxu0 0
        %334 = vmatprep.subr.bf16.mxu0 0
        %335 = vmatpush1.bf16.xpose.msra.mxu0 0
        %336 = vmatprep.subr.bf16.mxu0 0
        %337 = vmatpush1.bf16.xpose.msra.mxu0 0
        %338 = vmatprep.subr.bf16.mxu0 0
        %339 = vmatpush1.bf16.xpose.msra.mxu0 0
        %340 = vmatprep.subr.bf16.mxu0 0
        %341 = vmatpush1.bf16.xpose.msra.mxu0 0
        %342 = vmatprep.subr.bf16.mxu0 0
        %343 = vmatpush1.bf16.xpose.msra.mxu0 0
        %344 = vmatprep.subr.bf16.mxu0 0
        %345 = vmatpush1.bf16.xpose.msra.mxu0 0
        %346 = vmatprep.subr.bf16.mxu0 0
        %347 = vmatpush1.bf16.xpose.msra.mxu0 0
        %348 = vmatprep.subr.bf16.mxu0 0
        %349 = vmatpush1.bf16.xpose.msra.mxu0 0
        %350 = vmatprep.mubr.bf16.mxu0 0
        %351 = vmatmul.mubr.bf16.gmra.mrb[0].mxu0 %v306
        %v352 = vpop.f32.mrb[0].mxu0
        %v353 = vadd.f32 %v317, %v352
        %v354 = vpop.f32.mrb[0].mxu0
        %v355 = vpop.f32.mrb[0].mxu0
        %v356 = vadd.f32 %v317, %v355
        %v357 = vpop.f32.mrb[0].mxu0
        %358 = vmatprep.mubr.bf16.mxu0 0
        %359 = vmatmul.mubr.bf16.gmra.mrb[0].mxu0 %v307
        %v360 = vpop.f32.mrb[0].mxu0
        %v361 = vadd.f32 %v317, %v360
        %v362 = vpop.f32.mrb[0].mxu0
        %v363 = vpop.f32.mrb[0].mxu0
        %v364 = vadd.f32 %v317, %v363
        %v365 = vpop.f32.mrb[0].mxu0
        %366 = vmatprep.mubr.bf16.mxu0 0
        %367 = vmatmul.mubr.bf16.gmra.mrb[0].mxu0 %v308
        %v368 = vpop.f32.mrb[0].mxu0
        %v369 = vadd.f32 %v317, %v368
        %v370 = vpop.f32.mrb[0].mxu0
        %v371 = vpop.f32.mrb[0].mxu0
        %v372 = vadd.f32 %v317, %v371
        %v373 = vpop.f32.mrb[0].mxu0
        %374 = vmatprep.mubr.bf16.mxu0 0
        %375 = vmatmul.mubr.bf16.gmra.mrb[0].mxu0 %v309
        %v376 = vpop.f32.mrb[0].mxu0
        %v377 = vadd.f32 %v317, %v376
        %v378 = vpop.f32.mrb[0].mxu0
        %v379 = vpop.f32.mrb[0].mxu0
        %v380 = vadd.f32 %v317, %v379
        %v381 = vpop.f32.mrb[0].mxu0
        %382 = vmatprep.mubr.bf16.mxu0 0
        %383 = vmatmul.mubr.bf16.gmra.mrb[0].mxu0 %v310
        %v384 = vpop.f32.mrb[0].mxu0
        %v385 = vadd.f32 %v317, %v384
        %v386 = vpop.f32.mrb[0].mxu0
        %v387 = vpop.f32.mrb[0].mxu0
        %v388 = vadd.f32 %v317, %v387
        %v389 = vpop.f32.mrb[0].mxu0
        %390 = vmatprep.mubr.bf16.mxu0 0
        %391 = vmatmul.mubr.bf16.gmra.mrb[0].mxu0 %v311
        %v392 = vpop.f32.mrb[0].mxu0
        %v393 = vadd.f32 %v317, %v392
        %v394 = vpop.f32.mrb[0].mxu0
        %v395 = vpop.f32.mrb[0].mxu0
        %v396 = vadd.f32 %v317, %v395
        %v397 = vpop.f32.mrb[0].mxu0
        %398 = vmatprep.mubr.bf16.mxu0 0
        %399 = vmatmul.mubr.bf16.gmra.mrb[0].mxu0 %v312
        %v400 = vpop.f32.mrb[0].mxu0
        %v401 = vadd.f32 %v317, %v400
        %v402 = vpop.f32.mrb[0].mxu0
        %v403 = vpop.f32.mrb[0].mxu0
        %v404 = vadd.f32 %v317, %v403
        %v405 = vpop.f32.mrb[0].mxu0
        %406 = vmatprep.mubr.bf16.mxu0 0
        %407 = vmatmul.mubr.bf16.gmra.mrb[0].mxu0 %v313
        %v408 = vpop.f32.mrb[0].mxu0
        %v409 = vadd.f32 %v317, %v408
        %v410 = vpop.f32.mrb[0].mxu0
        %v411 = vpop.f32.mrb[0].mxu0
        %v412 = vadd.f32 %v317, %v411
        %v413 = vpop.f32.mrb[0].mxu0
        %414 = vdwg.mxu0
        %vm415 = vcmask 64512
        %v416 = vsel %vm415, %v353, -inf
        %417 = vmax.xlane.f32.xlu0 %v416
        %v418 = vpop.xlane.xlu0 %417
        %v419 = vsel %vm415, %v356, -inf
        %420 = vmax.xlane.f32.xlu0 %v419
        %v421 = vpop.xlane.xlu0 %420
        %v422 = vsel %vm415, %v361, -inf
        %423 = vmax.xlane.f32.xlu0 %v422
        %v424 = vpop.xlane.xlu0 %423
        %v425 = vsel %vm415, %v364, -inf
        %426 = vmax.xlane.f32.xlu0 %v425
        %v427 = vpop.xlane.xlu0 %426
        %v428 = vsel %vm415, %v369, -inf
        %429 = vmax.xlane.f32.xlu0 %v428
        %v430 = vpop.xlane.xlu0 %429
        %v431 = vsel %vm415, %v372, -inf
        %432 = vmax.xlane.f32.xlu0 %v431
        %v433 = vpop.xlane.xlu0 %432
        %v434 = vsel %vm415, %v377, -inf
        %435 = vmax.xlane.f32.xlu0 %v434
        %v436 = vpop.xlane.xlu0 %435
        %v437 = vsel %vm415, %v380, -inf
        %438 = vmax.xlane.f32.xlu0 %v437
        %v439 = vpop.xlane.xlu0 %438
        %v440 = vsel %vm415, %v385, -inf
        %441 = vmax.xlane.f32.xlu0 %v440
        %v442 = vpop.xlane.xlu0 %441
        %v443 = vsel %vm415, %v388, -inf
        %444 = vmax.xlane.f32.xlu0 %v443
        %v445 = vpop.xlane.xlu0 %444
        %v446 = vsel %vm415, %v393, -inf
        %447 = vmax.xlane.f32.xlu0 %v446
        %v448 = vpop.xlane.xlu0 %447
        %v449 = vsel %vm415, %v396, -inf
        %450 = vmax.xlane.f32.xlu0 %v449
        %v451 = vpop.xlane.xlu0 %450
        %v452 = vsel %vm415, %v401, -inf
        %453 = vmax.xlane.f32.xlu0 %v452
        %v454 = vpop.xlane.xlu0 %453
        %v455 = vsel %vm415, %v404, -inf
        %456 = vmax.xlane.f32.xlu0 %v455
        %v457 = vpop.xlane.xlu0 %456
        %v458 = vsel %vm415, %v409, -inf
        %459 = vmax.xlane.f32.xlu0 %v458
        %v460 = vpop.xlane.xlu0 %459
        %v461 = vsel %vm415, %v412, -inf
        %462 = vmax.xlane.f32.xlu0 %v461
        %v463 = vpop.xlane.xlu0 %462
        %v464 = vsub.f32 %v353, %v418
        %v465 = vsub.f32 %v356, %v421
        %v466 = vsub.f32 %v361, %v424
        %v467 = vsub.f32 %v364, %v427
        %v468 = vsub.f32 %v369, %v430
        %v469 = vsub.f32 %v372, %v433
        %v470 = vsub.f32 %v377, %v436
        %v471 = vsub.f32 %v380, %v439
        %v472 = vsub.f32 %v385, %v442
        %v473 = vsub.f32 %v388, %v445
        %v474 = vsub.f32 %v393, %v448
        %v475 = vsub.f32 %v396, %v451
        %v476 = vsub.f32 %v401, %v454
        %v477 = vsub.f32 %v404, %v457
        %v478 = vsub.f32 %v409, %v460
        %v479 = vsub.f32 %v412, %v463
        %v480 = vmul.f32 %v464, 1.442695
        %v481 = vpow.pop %v480
        %v482 = vmul.f32 %v465, 1.442695
        %v483 = vpow.pop %v482
        %v484 = vmul.f32 %v466, 1.442695
        %v485 = vpow.pop %v484
        %v486 = vmul.f32 %v467, 1.442695
        %v487 = vpow.pop %v486
        %v488 = vmul.f32 %v468, 1.442695
        %v489 = vpow.pop %v488
        %v490 = vmul.f32 %v469, 1.442695
        %v491 = vpow.pop %v490
        %v492 = vmul.f32 %v470, 1.442695
        %v493 = vpow.pop %v492
        %v494 = vmul.f32 %v471, 1.442695
        %v495 = vpow.pop %v494
        %v496 = vmul.f32 %v472, 1.442695
        %v497 = vpow.pop %v496
        %v498 = vmul.f32 %v473, 1.442695
        %v499 = vpow.pop %v498
        %v500 = vmul.f32 %v474, 1.442695
        %v501 = vpow.pop %v500
        %v502 = vmul.f32 %v475, 1.442695
        %v503 = vpow.pop %v502
        %v504 = vmul.f32 %v476, 1.442695
        %v505 = vpow.pop %v504
        %v506 = vmul.f32 %v477, 1.442695
        %v507 = vpow.pop %v506
        %v508 = vmul.f32 %v478, 1.442695
        %v509 = vpow.pop %v508
        %v510 = vmul.f32 %v479, 1.442695
        %v511 = vpow.pop %v510
        %v512 = vsel %vm415, %v481, 0.0
        %513 = vadd.xlane.f32.xlu0 %v512
        %v514 = vpop.xlane.xlu0 %513
        %v515 = vsel %vm415, %v483, 0.0
        %516 = vadd.xlane.f32.xlu0 %v515
        %v517 = vpop.xlane.xlu0 %516
        %v518 = vsel %vm415, %v485, 0.0
        %519 = vadd.xlane.f32.xlu0 %v518
        %v520 = vpop.xlane.xlu0 %519
        %v521 = vsel %vm415, %v487, 0.0
        %522 = vadd.xlane.f32.xlu0 %v521
        %v523 = vpop.xlane.xlu0 %522
        %v524 = vsel %vm415, %v489, 0.0
        %525 = vadd.xlane.f32.xlu0 %v524
        %v526 = vpop.xlane.xlu0 %525
        %v527 = vsel %vm415, %v491, 0.0
        %528 = vadd.xlane.f32.xlu0 %v527
        %v529 = vpop.xlane.xlu0 %528
        %v530 = vsel %vm415, %v493, 0.0
        %531 = vadd.xlane.f32.xlu0 %v530
        %v532 = vpop.xlane.xlu0 %531
        %v533 = vsel %vm415, %v495, 0.0
        %534 = vadd.xlane.f32.xlu0 %v533
        %v535 = vpop.xlane.xlu0 %534
        %v536 = vsel %vm415, %v497, 0.0
        %537 = vadd.xlane.f32.xlu0 %v536
        %v538 = vpop.xlane.xlu0 %537
        %v539 = vsel %vm415, %v499, 0.0
        %540 = vadd.xlane.f32.xlu0 %v539
        %v541 = vpop.xlane.xlu0 %540
        %v542 = vsel %vm415, %v501, 0.0
        %543 = vadd.xlane.f32.xlu0 %v542
        %v544 = vpop.xlane.xlu0 %543
        %v545 = vsel %vm415, %v503, 0.0
        %546 = vadd.xlane.f32.xlu0 %v545
        %v547 = vpop.xlane.xlu0 %546
        %v548 = vsel %vm415, %v505, 0.0
        %549 = vadd.xlane.f32.xlu0 %v548
        %v550 = vpop.xlane.xlu0 %549
        %v551 = vsel %vm415, %v507, 0.0
        %552 = vadd.xlane.f32.xlu0 %v551
        %v553 = vpop.xlane.xlu0 %552
        %v554 = vsel %vm415, %v509, 0.0
        %555 = vadd.xlane.f32.xlu0 %v554
        %v556 = vpop.xlane.xlu0 %555
        %v557 = vsel %vm415, %v511, 0.0
        %558 = vadd.xlane.f32.xlu0 %v557
        %v559 = vpop.xlane.xlu0 %558
        %v560 = vrcp.pop %v514
        %v561 = vrcp.pop %v517
        %v562 = vrcp.pop %v520
        %v563 = vrcp.pop %v523
        %v564 = vrcp.pop %v526
        %v565 = vrcp.pop %v529
        %v566 = vrcp.pop %v532
        %v567 = vrcp.pop %v535
        %v568 = vrcp.pop %v538
        %v569 = vrcp.pop %v541
        %v570 = vrcp.pop %v544
        %v571 = vrcp.pop %v547
        %v572 = vrcp.pop %v550
        %v573 = vrcp.pop %v553
        %v574 = vrcp.pop %v556
        %v575 = vrcp.pop %v559
        %v576 = vmul.f32 %v481, %v560
        %v577 = vmul.f32 %v483, %v561
        %v578 = vmul.f32 %v485, %v562
        %v579 = vmul.f32 %v487, %v563
        %v580 = vmul.f32 %v489, %v564
        %v581 = vmul.f32 %v491, %v565
        %v582 = vmul.f32 %v493, %v566
        %v583 = vmul.f32 %v495, %v567
        %v584 = vmul.f32 %v497, %v568
        %v585 = vmul.f32 %v499, %v569
        %v586 = vmul.f32 %v501, %v570
        %v587 = vmul.f32 %v503, %v571
        %v588 = vmul.f32 %v505, %v572
        %v589 = vmul.f32 %v507, %v573
        %v590 = vmul.f32 %v509, %v574
        %v591 = vmul.f32 %v511, %v575
        %s592 = sld [smem:[#allocation9]]
        %v593 = vstv %s592
        %v594 = vmul.f32 %v593, %v576
        %v595 = vmul.f32 %v593, %v577
        %v596 = vmul.f32 %v593, %v578
        %v597 = vmul.f32 %v593, %v579
        %v598 = vmul.f32 %v593, %v580
        %v599 = vmul.f32 %v593, %v581
        %v600 = vmul.f32 %v593, %v582
        %v601 = vmul.f32 %v593, %v583
        %v602 = vmul.f32 %v593, %v584
        %v603 = vmul.f32 %v593, %v585
        %v604 = vmul.f32 %v593, %v586
        %v605 = vmul.f32 %v593, %v587
        %v606 = vmul.f32 %v593, %v588
        %v607 = vmul.f32 %v593, %v589
        %v608 = vmul.f32 %v593, %v590
        %v609 = vmul.f32 %v593, %v591
        %v610 = vadd.f32 %v594, 0.0
        %v611 = vadd.f32 %v595, 0.0
        %v612 = vadd.f32 %v596, 0.0
        %v613 = vadd.f32 %v597, 0.0
        %v614 = vadd.f32 %v598, 0.0
        %v615 = vadd.f32 %v599, 0.0
        %v616 = vadd.f32 %v600, 0.0
        %v617 = vadd.f32 %v601, 0.0
        %v618 = vadd.f32 %v602, 0.0
        %v619 = vadd.f32 %v603, 0.0
        %v620 = vadd.f32 %v604, 0.0
        %v621 = vadd.f32 %v605, 0.0
        %v622 = vadd.f32 %v606, 0.0
        %v623 = vadd.f32 %v607, 0.0
        %v624 = vadd.f32 %v608, 0.0
        %v625 = vadd.f32 %v609, 0.0
        %v626 = vld [vmem:[%s289 + $0x8] sm:$0xff]
        %v627 = vld [vmem:[%s289 + $0x48] sm:$0xff]
        %v628 = vld [vmem:[%s289 + $0x88] sm:$0xff]
        %v629 = vld [vmem:[%s289 + $0xc8] sm:$0xff]
        %v630 = vld [vmem:[%s289 + $0x108] sm:$0xff]
        %v631 = vld [vmem:[%s289 + $0x148] sm:$0xff]
        %v632 = vld [vmem:[%s289 + $0x188] sm:$0xff]
        %v633 = vld [vmem:[%s289 + $0x1c8] sm:$0xff]
        %v634 = vld [vmem:[%s289 + $0x208] sm:$0xff]
        %v635 = vld [vmem:[%s289 + $0x248] sm:$0xff]
        %v636 = vld [vmem:[%s289 + $0x288] sm:$0xff]
        %v637 = vld [vmem:[%s289 + $0x2c8] sm:$0xff]
        %v638 = vld [vmem:[%s289 + $0x308] sm:$0xff]
        %v639 = vld [vmem:[%s289 + $0x348] sm:$0xff]
        %v640 = vld [vmem:[%s289 + $0x388] sm:$0xff]
        %v641 = vld [vmem:[%s289 + $0x3c8] sm:$0xff]
        %v642 = vpack.c.bf16 %v627, %v626
        %v643 = vpack.c.bf16 %v629, %v628
        %v644 = vpack.c.bf16 %v631, %v630
        %v645 = vpack.c.bf16 %v633, %v632
        %v646 = vpack.c.bf16 %v635, %v634
        %v647 = vpack.c.bf16 %v637, %v636
        %v648 = vpack.c.bf16 %v639, %v638
        %v649 = vpack.c.bf16 %v641, %v640
        %v650 = vlaneseq
        %v651 = vshrl.u32 %v650, 7
        %v652 = vsub.s32 1, %v651
        %v653 = vrot.slane %v285, %v652
        %654 = vmatprep.subr.bf16.mxu0 0
        %655 = vmatpush1.bf16.xpose.msra.mxu0 %v278
        %656 = vmatprep.subr.bf16.mxu0 0
        %657 = vmatpush1.bf16.xpose.msra.mxu0 0
        %658 = vmatprep.subr.bf16.mxu0 0
        %659 = vmatpush1.bf16.xpose.msra.mxu0 0
        %660 = vmatprep.subr.bf16.mxu0 0
        %661 = vmatpush1.bf16.xpose.msra.mxu0 0
        %662 = vmatprep.subr.bf16.mxu0 0
        %663 = vmatpush1.bf16.xpose.msra.mxu0 0
        %664 = vmatprep.subr.bf16.mxu0 0
        %665 = vmatpush1.bf16.xpose.msra.mxu0 0
        %666 = vmatprep.subr.bf16.mxu0 0
        %667 = vmatpush1.bf16.xpose.msra.mxu0 0
        %668 = vmatprep.subr.bf16.mxu0 0
        %669 = vmatpush1.bf16.xpose.msra.mxu0 0
        %670 = vmatprep.subr.bf16.mxu0 0
        %671 = vmatpush1.bf16.xpose.msra.mxu0 0
        %672 = vmatprep.subr.bf16.mxu0 0
        %673 = vmatpush1.bf16.xpose.msra.mxu0 0
        %674 = vmatprep.subr.bf16.mxu0 0
        %675 = vmatpush1.bf16.xpose.msra.mxu0 0
        %676 = vmatprep.subr.bf16.mxu0 0
        %677 = vmatpush1.bf16.xpose.msra.mxu0 0
        %678 = vmatprep.subr.bf16.mxu0 0
        %679 = vmatpush1.bf16.xpose.msra.mxu0 0
        %680 = vmatprep.subr.bf16.mxu0 0
        %681 = vmatpush1.bf16.xpose.msra.mxu0 0
        %682 = vmatprep.subr.bf16.mxu0 0
        %683 = vmatpush1.bf16.xpose.msra.mxu0 0
        %684 = vmatprep.subr.bf16.mxu0 0
        %685 = vmatpush1.bf16.xpose.msra.mxu0 0
        %686 = vmatprep.mubr.bf16.mxu0 0
        %687 = vmatmul.mubr.bf16.gmra.mrb[0].mxu0 %v642
        %v688 = vpop.f32.mrb[0].mxu0
        %v689 = vadd.f32 %v653, %v688
        %v690 = vpop.f32.mrb[0].mxu0
        %v691 = vpop.f32.mrb[0].mxu0
        %v692 = vadd.f32 %v653, %v691
        %v693 = vpop.f32.mrb[0].mxu0
        %694 = vmatprep.mubr.bf16.mxu0 0
        %695 = vmatmul.mubr.bf16.gmra.mrb[0].mxu0 %v643
        %v696 = vpop.f32.mrb[0].mxu0
        %v697 = vadd.f32 %v653, %v696
        %v698 = vpop.f32.mrb[0].mxu0
        %v699 = vpop.f32.mrb[0].mxu0
        %v700 = vadd.f32 %v653, %v699
        %v701 = vpop.f32.mrb[0].mxu0
        %702 = vmatprep.mubr.bf16.mxu0 0
        %703 = vmatmul.mubr.bf16.gmra.mrb[0].mxu0 %v644
        %v704 = vpop.f32.mrb[0].mxu0
        %v705 = vadd.f32 %v653, %v704
        %v706 = vpop.f32.mrb[0].mxu0
        %v707 = vpop.f32.mrb[0].mxu0
        %v708 = vadd.f32 %v653, %v707
        %v709 = vpop.f32.mrb[0].mxu0
        %710 = vmatprep.mubr.bf16.mxu0 0
        %711 = vmatmul.mubr.bf16.gmra.mrb[0].mxu0 %v645
        %v712 = vpop.f32.mrb[0].mxu0
        %v713 = vadd.f32 %v653, %v712
        %v714 = vpop.f32.mrb[0].mxu0
        %v715 = vpop.f32.mrb[0].mxu0
        %v716 = vadd.f32 %v653, %v715
        %v717 = vpop.f32.mrb[0].mxu0
        %718 = vmatprep.mubr.bf16.mxu0 0
        %719 = vmatmul.mubr.bf16.gmra.mrb[0].mxu0 %v646
        %v720 = vpop.f32.mrb[0].mxu0
        %v721 = vadd.f32 %v653, %v720
        %v722 = vpop.f32.mrb[0].mxu0
        %v723 = vpop.f32.mrb[0].mxu0
        %v724 = vadd.f32 %v653, %v723
        %v725 = vpop.f32.mrb[0].mxu0
        %726 = vmatprep.mubr.bf16.mxu0 0
        %727 = vmatmul.mubr.bf16.gmra.mrb[0].mxu0 %v647
        %v728 = vpop.f32.mrb[0].mxu0
        %v729 = vadd.f32 %v653, %v728
        %v730 = vpop.f32.mrb[0].mxu0
        %v731 = vpop.f32.mrb[0].mxu0
        %v732 = vadd.f32 %v653, %v731
        %v733 = vpop.f32.mrb[0].mxu0
        %734 = vmatprep.mubr.bf16.mxu0 0
        %735 = vmatmul.mubr.bf16.gmra.mrb[0].mxu0 %v648
        %v736 = vpop.f32.mrb[0].mxu0
        %v737 = vadd.f32 %v653, %v736
        %v738 = vpop.f32.mrb[0].mxu0
        %v739 = vpop.f32.mrb[0].mxu0
        %v740 = vadd.f32 %v653, %v739
        %v741 = vpop.f32.mrb[0].mxu0
        %742 = vmatprep.mubr.bf16.mxu0 0
        %743 = vmatmul.mubr.bf16.gmra.mrb[0].mxu0 %v649
        %v744 = vpop.f32.mrb[0].mxu0
        %v745 = vadd.f32 %v653, %v744
        %v746 = vpop.f32.mrb[0].mxu0
        %v747 = vpop.f32.mrb[0].mxu0
        %v748 = vadd.f32 %v653, %v747
        %v749 = vpop.f32.mrb[0].mxu0
        %750 = vdwg.mxu0
        %v751 = vsel %vm415, %v689, -inf
        %752 = vmax.xlane.f32.xlu0 %v751
        %v753 = vpop.xlane.xlu0 %752
        %v754 = vsel %vm415, %v692, -inf
        %755 = vmax.xlane.f32.xlu0 %v754
        %v756 = vpop.xlane.xlu0 %755
        %v757 = vsel %vm415, %v697, -inf
        %758 = vmax.xlane.f32.xlu0 %v757
        %v759 = vpop.xlane.xlu0 %758
        %v760 = vsel %vm415, %v700, -inf
        %761 = vmax.xlane.f32.xlu0 %v760
        %v762 = vpop.xlane.xlu0 %761
        %v763 = vsel %vm415, %v705, -inf
        %764 = vmax.xlane.f32.xlu0 %v763
        %v765 = vpop.xlane.xlu0 %764
        %v766 = vsel %vm415, %v708, -inf
        %767 = vmax.xlane.f32.xlu0 %v766
        %v768 = vpop.xlane.xlu0 %767
        %v769 = vsel %vm415, %v713, -inf
        %770 = vmax.xlane.f32.xlu0 %v769
        %v771 = vpop.xlane.xlu0 %770
        %v772 = vsel %vm415, %v716, -inf
        %773 = vmax.xlane.f32.xlu0 %v772
        %v774 = vpop.xlane.xlu0 %773
        %v775 = vsel %vm415, %v721, -inf
        %776 = vmax.xlane.f32.xlu0 %v775
        %v777 = vpop.xlane.xlu0 %776
        %v778 = vsel %vm415, %v724, -inf
        %779 = vmax.xlane.f32.xlu0 %v778
        %v780 = vpop.xlane.xlu0 %779
        %v781 = vsel %vm415, %v729, -inf
        %782 = vmax.xlane.f32.xlu0 %v781
        %v783 = vpop.xlane.xlu0 %782
        %v784 = vsel %vm415, %v732, -inf
        %785 = vmax.xlane.f32.xlu0 %v784
        %v786 = vpop.xlane.xlu0 %785
        %v787 = vsel %vm415, %v737, -inf
        %788 = vmax.xlane.f32.xlu0 %v787
        %v789 = vpop.xlane.xlu0 %788
        %v790 = vsel %vm415, %v740, -inf
        %791 = vmax.xlane.f32.xlu0 %v790
        %v792 = vpop.xlane.xlu0 %791
        %v793 = vsel %vm415, %v745, -inf
        %794 = vmax.xlane.f32.xlu0 %v793
        %v795 = vpop.xlane.xlu0 %794
        %v796 = vsel %vm415, %v748, -inf
        %797 = vmax.xlane.f32.xlu0 %v796
        %v798 = vpop.xlane.xlu0 %797
        %v799 = vsub.f32 %v689, %v753
        %v800 = vsub.f32 %v692, %v756
        %v801 = vsub.f32 %v697, %v759
        %v802 = vsub.f32 %v700, %v762
        %v803 = vsub.f32 %v705, %v765
        %v804 = vsub.f32 %v708, %v768
        %v805 = vsub.f32 %v713, %v771
        %v806 = vsub.f32 %v716, %v774
        %v807 = vsub.f32 %v721, %v777
        %v808 = vsub.f32 %v724, %v780
        %v809 = vsub.f32 %v729, %v783
        %v810 = vsub.f32 %v732, %v786
        %v811 = vsub.f32 %v737, %v789
        %v812 = vsub.f32 %v740, %v792
        %v813 = vsub.f32 %v745, %v795
        %v814 = vsub.f32 %v748, %v798
        %v815 = vmul.f32 %v799, 1.442695
        %v816 = vpow.pop %v815
        %v817 = vmul.f32 %v800, 1.442695
        %v818 = vpow.pop %v817
        %v819 = vmul.f32 %v801, 1.442695
        %v820 = vpow.pop %v819
        %v821 = vmul.f32 %v802, 1.442695
        %v822 = vpow.pop %v821
        %v823 = vmul.f32 %v803, 1.442695
        %v824 = vpow.pop %v823
        %v825 = vmul.f32 %v804, 1.442695
        %v826 = vpow.pop %v825
        %v827 = vmul.f32 %v805, 1.442695
        %v828 = vpow.pop %v827
        %v829 = vmul.f32 %v806, 1.442695
        %v830 = vpow.pop %v829
        %v831 = vmul.f32 %v807, 1.442695
        %v832 = vpow.pop %v831
        %v833 = vmul.f32 %v808, 1.442695
        %v834 = vpow.pop %v833
        %v835 = vmul.f32 %v809, 1.442695
        %v836 = vpow.pop %v835
        %v837 = vmul.f32 %v810, 1.442695
        %v838 = vpow.pop %v837
        %v839 = vmul.f32 %v811, 1.442695
        %v840 = vpow.pop %v839
        %v841 = vmul.f32 %v812, 1.442695
        %v842 = vpow.pop %v841
        %v843 = vmul.f32 %v813, 1.442695
        %v844 = vpow.pop %v843
        %v845 = vmul.f32 %v814, 1.442695
        %v846 = vpow.pop %v845
        %v847 = vsel %vm415, %v816, 0.0
        %848 = vadd.xlane.f32.xlu0 %v847
        %v849 = vpop.xlane.xlu0 %848
        %v850 = vsel %vm415, %v818, 0.0
        %851 = vadd.xlane.f32.xlu0 %v850
        %v852 = vpop.xlane.xlu0 %851
        %v853 = vsel %vm415, %v820, 0.0
        %854 = vadd.xlane.f32.xlu0 %v853
        %v855 = vpop.xlane.xlu0 %854
        %v856 = vsel %vm415, %v822, 0.0
        %857 = vadd.xlane.f32.xlu0 %v856
        %v858 = vpop.xlane.xlu0 %857
        %v859 = vsel %vm415, %v824, 0.0
        %860 = vadd.xlane.f32.xlu0 %v859
        %v861 = vpop.xlane.xlu0 %860
        %v862 = vsel %vm415, %v826, 0.0
        %863 = vadd.xlane.f32.xlu0 %v862
        %v864 = vpop.xlane.xlu0 %863
        %v865 = vsel %vm415, %v828, 0.0
        %866 = vadd.xlane.f32.xlu0 %v865
        %v867 = vpop.xlane.xlu0 %866
        %v868 = vsel %vm415, %v830, 0.0
        %869 = vadd.xlane.f32.xlu0 %v868
        %v870 = vpop.xlane.xlu0 %869
        %v871 = vsel %vm415, %v832, 0.0
        %872 = vadd.xlane.f32.xlu0 %v871
        %v873 = vpop.xlane.xlu0 %872
        %v874 = vsel %vm415, %v834, 0.0
        %875 = vadd.xlane.f32.xlu0 %v874
        %v876 = vpop.xlane.xlu0 %875
        %v877 = vsel %vm415, %v836, 0.0
        %878 = vadd.xlane.f32.xlu0 %v877
        %v879 = vpop.xlane.xlu0 %878
        %v880 = vsel %vm415, %v838, 0.0
        %881 = vadd.xlane.f32.xlu0 %v880
        %v882 = vpop.xlane.xlu0 %881
        %v883 = vsel %vm415, %v840, 0.0
        %884 = vadd.xlane.f32.xlu0 %v883
        %v885 = vpop.xlane.xlu0 %884
        %v886 = vsel %vm415, %v842, 0.0
        %887 = vadd.xlane.f32.xlu0 %v886
        %v888 = vpop.xlane.xlu0 %887
        %v889 = vsel %vm415, %v844, 0.0
        %890 = vadd.xlane.f32.xlu0 %v889
        %v891 = vpop.xlane.xlu0 %890
        %v892 = vsel %vm415, %v846, 0.0
        %893 = vadd.xlane.f32.xlu0 %v892
        %v894 = vpop.xlane.xlu0 %893
        %v895 = vrcp.pop %v849
        %v896 = vrcp.pop %v852
        %v897 = vrcp.pop %v855
        %v898 = vrcp.pop %v858
        %v899 = vrcp.pop %v861
        %v900 = vrcp.pop %v864
        %v901 = vrcp.pop %v867
        %v902 = vrcp.pop %v870
        %v903 = vrcp.pop %v873
        %v904 = vrcp.pop %v876
        %v905 = vrcp.pop %v879
        %v906 = vrcp.pop %v882
        %v907 = vrcp.pop %v885
        %v908 = vrcp.pop %v888
        %v909 = vrcp.pop %v891
        %v910 = vrcp.pop %v894
        %v911 = vmul.f32 %v816, %v895
        %v912 = vmul.f32 %v818, %v896
        %v913 = vmul.f32 %v820, %v897
        %v914 = vmul.f32 %v822, %v898
        %v915 = vmul.f32 %v824, %v899
        %v916 = vmul.f32 %v826, %v900
        %v917 = vmul.f32 %v828, %v901
        %v918 = vmul.f32 %v830, %v902
        %v919 = vmul.f32 %v832, %v903
        %v920 = vmul.f32 %v834, %v904
        %v921 = vmul.f32 %v836, %v905
        %v922 = vmul.f32 %v838, %v906
        %v923 = vmul.f32 %v840, %v907
        %v924 = vmul.f32 %v842, %v908
        %v925 = vmul.f32 %v844, %v909
        %v926 = vmul.f32 %v846, %v910
        %s927 = sld [smem:[#allocation9 + $0x1]]
        %v928 = vstv %s927
        %v929 = vmul.f32 %v928, %v911
        %v930 = vmul.f32 %v928, %v912
        %v931 = vmul.f32 %v928, %v913
        %v932 = vmul.f32 %v928, %v914
        %v933 = vmul.f32 %v928, %v915
        %v934 = vmul.f32 %v928, %v916
        %v935 = vmul.f32 %v928, %v917
        %v936 = vmul.f32 %v928, %v918
        %v937 = vmul.f32 %v928, %v919
        %v938 = vmul.f32 %v928, %v920
        %v939 = vmul.f32 %v928, %v921
        %v940 = vmul.f32 %v928, %v922
        %v941 = vmul.f32 %v928, %v923
        %v942 = vmul.f32 %v928, %v924
        %v943 = vmul.f32 %v928, %v925
        %v944 = vmul.f32 %v928, %v926
        %v945 = vadd.f32 %v610, %v929
        %v946 = vadd.f32 %v611, %v930
        %v947 = vadd.f32 %v612, %v931
        %v948 = vadd.f32 %v613, %v932
        %v949 = vadd.f32 %v614, %v933
        %v950 = vadd.f32 %v615, %v934
        %v951 = vadd.f32 %v616, %v935
        %v952 = vadd.f32 %v617, %v936
        %v953 = vadd.f32 %v618, %v937
        %v954 = vadd.f32 %v619, %v938
        %v955 = vadd.f32 %v620, %v939
        %v956 = vadd.f32 %v621, %v940
        %v957 = vadd.f32 %v622, %v941
        %v958 = vadd.f32 %v623, %v942
        %v959 = vadd.f32 %v624, %v943
        %v960 = vadd.f32 %v625, %v944
        %v961 = vld [vmem:[%s289 + $0x10] sm:$0xff]
        %v962 = vld [vmem:[%s289 + $0x50] sm:$0xff]
        %v963 = vld [vmem:[%s289 + $0x90] sm:$0xff]
        %v964 = vld [vmem:[%s289 + $0xd0] sm:$0xff]
        %v965 = vld [vmem:[%s289 + $0x110] sm:$0xff]
        %v966 = vld [vmem:[%s289 + $0x150] sm:$0xff]
        %v967 = vld [vmem:[%s289 + $0x190] sm:$0xff]
        %v968 = vld [vmem:[%s289 + $0x1d0] sm:$0xff]
        %v969 = vld [vmem:[%s289 + $0x210] sm:$0xff]
        %v970 = vld [vmem:[%s289 + $0x250] sm:$0xff]
        %v971 = vld [vmem:[%s289 + $0x290] sm:$0xff]
        %v972 = vld [vmem:[%s289 + $0x2d0] sm:$0xff]
        %v973 = vld [vmem:[%s289 + $0x310] sm:$0xff]
        %v974 = vld [vmem:[%s289 + $0x350] sm:$0xff]
        %v975 = vld [vmem:[%s289 + $0x390] sm:$0xff]
        %v976 = vld [vmem:[%s289 + $0x3d0] sm:$0xff]
        %v977 = vpack.c.bf16 %v962, %v961
        %v978 = vpack.c.bf16 %v964, %v963
        %v979 = vpack.c.bf16 %v966, %v965
        %v980 = vpack.c.bf16 %v968, %v967
        %v981 = vpack.c.bf16 %v970, %v969
        %v982 = vpack.c.bf16 %v972, %v971
        %v983 = vpack.c.bf16 %v974, %v973
        %v984 = vpack.c.bf16 %v976, %v975
        %v985 = vlaneseq
        %v986 = vshrl.u32 %v985, 7
        %v987 = vsub.s32 2, %v986
        %v988 = vrot.slane %v285, %v987
        %989 = vmatprep.subr.bf16.mxu0 0
        %990 = vmatpush1.bf16.xpose.msra.mxu0 %v279
        %991 = vmatprep.subr.bf16.mxu0 0
        %992 = vmatpush1.bf16.xpose.msra.mxu0 0
        %993 = vmatprep.subr.bf16.mxu0 0
        %994 = vmatpush1.bf16.xpose.msra.mxu0 0
        %995 = vmatprep.subr.bf16.mxu0 0
        %996 = vmatpush1.bf16.xpose.msra.mxu0 0
        %997 = vmatprep.subr.bf16.mxu0 0
        %998 = vmatpush1.bf16.xpose.msra.mxu0 0
        %999 = vmatprep.subr.bf16.mxu0 0
        %1000 = vmatpush1.bf16.xpose.msra.mxu0 0
        %1001 = vmatprep.subr.bf16.mxu0 0
        %1002 = vmatpush1.bf16.xpose.msra.mxu0 0
        %1003 = vmatprep.subr.bf16.mxu0 0
        %1004 = vmatpush1.bf16.xpose.msra.mxu0 0
        %1005 = vmatprep.subr.bf16.mxu0 0
        %1006 = vmatpush1.bf16.xpose.msra.mxu0 0
        %1007 = vmatprep.subr.bf16.mxu0 0
        %1008 = vmatpush1.bf16.xpose.msra.mxu0 0
        %1009 = vmatprep.subr.bf16.mxu0 0
        %1010 = vmatpush1.bf16.xpose.msra.mxu0 0
        %1011 = vmatprep.subr.bf16.mxu0 0
        %1012 = vmatpush1.bf16.xpose.msra.mxu0 0
        %1013 = vmatprep.subr.bf16.mxu0 0
        %1014 = vmatpush1.bf16.xpose.msra.mxu0 0
        %1015 = vmatprep.subr.bf16.mxu0 0
        %1016 = vmatpush1.bf16.xpose.msra.mxu0 0
        %1017 = vmatprep.subr.bf16.mxu0 0
        %1018 = vmatpush1.bf16.xpose.msra.mxu0 0
        %1019 = vmatprep.subr.bf16.mxu0 0
        %1020 = vmatpush1.bf16.xpose.msra.mxu0 0
        %1021 = vmatprep.mubr.bf16.mxu0 0
        %1022 = vmatmul.mubr.bf16.gmra.mrb[0].mxu0 %v977
        %v1023 = vpop.f32.mrb[0].mxu0
        %v1024 = vadd.f32 %v988, %v1023
        %v1025 = vpop.f32.mrb[0].mxu0
        %v1026 = vpop.f32.mrb[0].mxu0
        %v1027 = vadd.f32 %v988, %v1026
        %v1028 = vpop.f32.mrb[0].mxu0
        %1029 = vmatprep.mubr.bf16.mxu0 0
        %1030 = vmatmul.mubr.bf16.gmra.mrb[0].mxu0 %v978
        %v1031 = vpop.f32.mrb[0].mxu0
        %v1032 = vadd.f32 %v988, %v1031
        %v1033 = vpop.f32.mrb[0].mxu0
        %v1034 = vpop.f32.mrb[0].mxu0
        %v1035 = vadd.f32 %v988, %v1034
        %v1036 = vpop.f32.mrb[0].mxu0
        %1037 = vmatprep.mubr.bf16.mxu0 0
        %1038 = vmatmul.mubr.bf16.gmra.mrb[0].mxu0 %v979
        %v1039 = vpop.f32.mrb[0].mxu0
        %v1040 = vadd.f32 %v988, %v1039
        %v1041 = vpop.f32.mrb[0].mxu0
        %v1042 = vpop.f32.mrb[0].mxu0
        %v1043 = vadd.f32 %v988, %v1042
        %v1044 = vpop.f32.mrb[0].mxu0
        %1045 = vmatprep.mubr.bf16.mxu0 0
        %1046 = vmatmul.mubr.bf16.gmra.mrb[0].mxu0 %v980
        %v1047 = vpop.f32.mrb[0].mxu0
        %v1048 = vadd.f32 %v988, %v1047
        %v1049 = vpop.f32.mrb[0].mxu0
        %v1050 = vpop.f32.mrb[0].mxu0
        %v1051 = vadd.f32 %v988, %v1050
        %v1052 = vpop.f32.mrb[0].mxu0
        %1053 = vmatprep.mubr.bf16.mxu0 0
        %1054 = vmatmul.mubr.bf16.gmra.mrb[0].mxu0 %v981
        %v1055 = vpop.f32.mrb[0].mxu0
        %v1056 = vadd.f32 %v988, %v1055
        %v1057 = vpop.f32.mrb[0].mxu0
        %v1058 = vpop.f32.mrb[0].mxu0
        %v1059 = vadd.f32 %v988, %v1058
        %v1060 = vpop.f32.mrb[0].mxu0
        %1061 = vmatprep.mubr.bf16.mxu0 0
        %1062 = vmatmul.mubr.bf16.gmra.mrb[0].mxu0 %v982
        %v1063 = vpop.f32.mrb[0].mxu0
        %v1064 = vadd.f32 %v988, %v1063
        %v1065 = vpop.f32.mrb[0].mxu0
        %v1066 = vpop.f32.mrb[0].mxu0
        %v1067 = vadd.f32 %v988, %v1066
        %v1068 = vpop.f32.mrb[0].mxu0
        %1069 = vmatprep.mubr.bf16.mxu0 0
        %1070 = vmatmul.mubr.bf16.gmra.mrb[0].mxu0 %v983
        %v1071 = vpop.f32.mrb[0].mxu0
        %v1072 = vadd.f32 %v988, %v1071
        %v1073 = vpop.f32.mrb[0].mxu0
        %v1074 = vpop.f32.mrb[0].mxu0
        %v1075 = vadd.f32 %v988, %v1074
        %v1076 = vpop.f32.mrb[0].mxu0
        %1077 = vmatprep.mubr.bf16.mxu0 0
        %1078 = vmatmul.mubr.bf16.gmra.mrb[0].mxu0 %v984
        %v1079 = vpop.f32.mrb[0].mxu0
        %v1080 = vadd.f32 %v988, %v1079
        %v1081 = vpop.f32.mrb[0].mxu0
        %v1082 = vpop.f32.mrb[0].mxu0
        %v1083 = vadd.f32 %v988, %v1082
        %v1084 = vpop.f32.mrb[0].mxu0
        %1085 = vdwg.mxu0
        %v1086 = vsel %vm415, %v1024, -inf
        %1087 = vmax.xlane.f32.xlu0 %v1086
        %v1088 = vpop.xlane.xlu0 %1087
        %v1089 = vsel %vm415, %v1027, -inf
        %1090 = vmax.xlane.f32.xlu0 %v1089
        %v1091 = vpop.xlane.xlu0 %1090
        %v1092 = vsel %vm415, %v1032, -inf
        %1093 = vmax.xlane.f32.xlu0 %v1092
        %v1094 = vpop.xlane.xlu0 %1093
        %v1095 = vsel %vm415, %v1035, -inf
        %1096 = vmax.xlane.f32.xlu0 %v1095
        %v1097 = vpop.xlane.xlu0 %1096
        %v1098 = vsel %vm415, %v1040, -inf
        %1099 = vmax.xlane.f32.xlu0 %v1098
        %v1100 = vpop.xlane.xlu0 %1099
        %v1101 = vsel %vm415, %v1043, -inf
        %1102 = vmax.xlane.f32.xlu0 %v1101
        %v1103 = vpop.xlane.xlu0 %1102
        %v1104 = vsel %vm415, %v1048, -inf
        %1105 = vmax.xlane.f32.xlu0 %v1104
        %v1106 = vpop.xlane.xlu0 %1105
        %v1107 = vsel %vm415, %v1051, -inf
        %1108 = vmax.xlane.f32.xlu0 %v1107
        %v1109 = vpop.xlane.xlu0 %1108
        %v1110 = vsel %vm415, %v1056, -inf
        %1111 = vmax.xlane.f32.xlu0 %v1110
        %v1112 = vpop.xlane.xlu0 %1111
        %v1113 = vsel %vm415, %v1059, -inf
        %1114 = vmax.xlane.f32.xlu0 %v1113
        %v1115 = vpop.xlane.xlu0 %1114
        %v1116 = vsel %vm415, %v1064, -inf
        %1117 = vmax.xlane.f32.xlu0 %v1116
        %v1118 = vpop.xlane.xlu0 %1117
        %v1119 = vsel %vm415, %v1067, -inf
        %1120 = vmax.xlane.f32.xlu0 %v1119
        %v1121 = vpop.xlane.xlu0 %1120
        %v1122 = vsel %vm415, %v1072, -inf
        %1123 = vmax.xlane.f32.xlu0 %v1122
        %v1124 = vpop.xlane.xlu0 %1123
        %v1125 = vsel %vm415, %v1075, -inf
        %1126 = vmax.xlane.f32.xlu0 %v1125
        %v1127 = vpop.xlane.xlu0 %1126
        %v1128 = vsel %vm415, %v1080, -inf
        %1129 = vmax.xlane.f32.xlu0 %v1128
        %v1130 = vpop.xlane.xlu0 %1129
        %v1131 = vsel %vm415, %v1083, -inf
        %1132 = vmax.xlane.f32.xlu0 %v1131
        %v1133 = vpop.xlane.xlu0 %1132
        %v1134 = vsub.f32 %v1024, %v1088
        %v1135 = vsub.f32 %v1027, %v1091
        %v1136 = vsub.f32 %v1032, %v1094
        %v1137 = vsub.f32 %v1035, %v1097
        %v1138 = vsub.f32 %v1040, %v1100
        %v1139 = vsub.f32 %v1043, %v1103
        %v1140 = vsub.f32 %v1048, %v1106
        %v1141 = vsub.f32 %v1051, %v1109
        %v1142 = vsub.f32 %v1056, %v1112
        %v1143 = vsub.f32 %v1059, %v1115
        %v1144 = vsub.f32 %v1064, %v1118
        %v1145 = vsub.f32 %v1067, %v1121
        %v1146 = vsub.f32 %v1072, %v1124
        %v1147 = vsub.f32 %v1075, %v1127
        %v1148 = vsub.f32 %v1080, %v1130
        %v1149 = vsub.f32 %v1083, %v1133
        %v1150 = vmul.f32 %v1134, 1.442695
        %v1151 = vpow.pop %v1150
        %v1152 = vmul.f32 %v1135, 1.442695
        %v1153 = vpow.pop %v1152
        %v1154 = vmul.f32 %v1136, 1.442695
        %v1155 = vpow.pop %v1154
        %v1156 = vmul.f32 %v1137, 1.442695
        %v1157 = vpow.pop %v1156
        %v1158 = vmul.f32 %v1138, 1.442695
        %v1159 = vpow.pop %v1158
        %v1160 = vmul.f32 %v1139, 1.442695
        %v1161 = vpow.pop %v1160
        %v1162 = vmul.f32 %v1140, 1.442695
        %v1163 = vpow.pop %v1162
        %v1164 = vmul.f32 %v1141, 1.442695
        %v1165 = vpow.pop %v1164
        %v1166 = vmul.f32 %v1142, 1.442695
        %v1167 = vpow.pop %v1166
        %v1168 = vmul.f32 %v1143, 1.442695
        %v1169 = vpow.pop %v1168
        %v1170 = vmul.f32 %v1144, 1.442695
        %v1171 = vpow.pop %v1170
        %v1172 = vmul.f32 %v1145, 1.442695
        %v1173 = vpow.pop %v1172
        %v1174 = vmul.f32 %v1146, 1.442695
        %v1175 = vpow.pop %v1174
        %v1176 = vmul.f32 %v1147, 1.442695
        %v1177 = vpow.pop %v1176
        %v1178 = vmul.f32 %v1148, 1.442695
        %v1179 = vpow.pop %v1178
        %v1180 = vmul.f32 %v1149, 1.442695
        %v1181 = vpow.pop %v1180
        %v1182 = vsel %vm415, %v1151, 0.0
        %1183 = vadd.xlane.f32.xlu0 %v1182
        %v1184 = vpop.xlane.xlu0 %1183
        %v1185 = vsel %vm415, %v1153, 0.0
        %1186 = vadd.xlane.f32.xlu0 %v1185
        %v1187 = vpop.xlane.xlu0 %1186
        %v1188 = vsel %vm415, %v1155, 0.0
        %1189 = vadd.xlane.f32.xlu0 %v1188
        %v1190 = vpop.xlane.xlu0 %1189
        %v1191 = vsel %vm415, %v1157, 0.0
        %1192 = vadd.xlane.f32.xlu0 %v1191
        %v1193 = vpop.xlane.xlu0 %1192
        %v1194 = vsel %vm415, %v1159, 0.0
        %1195 = vadd.xlane.f32.xlu0 %v1194
        %v1196 = vpop.xlane.xlu0 %1195
        %v1197 = vsel %vm415, %v1161, 0.0
        %1198 = vadd.xlane.f32.xlu0 %v1197
        %v1199 = vpop.xlane.xlu0 %1198
        %v1200 = vsel %vm415, %v1163, 0.0
        %1201 = vadd.xlane.f32.xlu0 %v1200
        %v1202 = vpop.xlane.xlu0 %1201
        %v1203 = vsel %vm415, %v1165, 0.0
        %1204 = vadd.xlane.f32.xlu0 %v1203
        %v1205 = vpop.xlane.xlu0 %1204
        %v1206 = vsel %vm415, %v1167, 0.0
        %1207 = vadd.xlane.f32.xlu0 %v1206
        %v1208 = vpop.xlane.xlu0 %1207
        %v1209 = vsel %vm415, %v1169, 0.0
        %1210 = vadd.xlane.f32.xlu0 %v1209
        %v1211 = vpop.xlane.xlu0 %1210
        %v1212 = vsel %vm415, %v1171, 0.0
        %1213 = vadd.xlane.f32.xlu0 %v1212
        %v1214 = vpop.xlane.xlu0 %1213
        %v1215 = vsel %vm415, %v1173, 0.0
        %1216 = vadd.xlane.f32.xlu0 %v1215
        %v1217 = vpop.xlane.xlu0 %1216
        %v1218 = vsel %vm415, %v1175, 0.0
        %1219 = vadd.xlane.f32.xlu0 %v1218
        %v1220 = vpop.xlane.xlu0 %1219
        %v1221 = vsel %vm415, %v1177, 0.0
        %1222 = vadd.xlane.f32.xlu0 %v1221
        %v1223 = vpop.xlane.xlu0 %1222
        %v1224 = vsel %vm415, %v1179, 0.0
        %1225 = vadd.xlane.f32.xlu0 %v1224
        %v1226 = vpop.xlane.xlu0 %1225
        %v1227 = vsel %vm415, %v1181, 0.0
        %1228 = vadd.xlane.f32.xlu0 %v1227
        %v1229 = vpop.xlane.xlu0 %1228
        %v1230 = vrcp.pop %v1184
        %v1231 = vrcp.pop %v1187
        %v1232 = vrcp.pop %v1190
        %v1233 = vrcp.pop %v1193
        %v1234 = vrcp.pop %v1196
        %v1235 = vrcp.pop %v1199
        %v1236 = vrcp.pop %v1202
        %v1237 = vrcp.pop %v1205
        %v1238 = vrcp.pop %v1208
        %v1239 = vrcp.pop %v1211
        %v1240 = vrcp.pop %v1214
        %v1241 = vrcp.pop %v1217
        %v1242 = vrcp.pop %v1220
        %v1243 = vrcp.pop %v1223
        %v1244 = vrcp.pop %v1226
        %v1245 = vrcp.pop %v1229
        %v1246 = vmul.f32 %v1151, %v1230
        %v1247 = vmul.f32 %v1153, %v1231
        %v1248 = vmul.f32 %v1155, %v1232
        %v1249 = vmul.f32 %v1157, %v1233
        %v1250 = vmul.f32 %v1159, %v1234
        %v1251 = vmul.f32 %v1161, %v1235
        %v1252 = vmul.f32 %v1163, %v1236
        %v1253 = vmul.f32 %v1165, %v1237
        %v1254 = vmul.f32 %v1167, %v1238
        %v1255 = vmul.f32 %v1169, %v1239
        %v1256 = vmul.f32 %v1171, %v1240
        %v1257 = vmul.f32 %v1173, %v1241
        %v1258 = vmul.f32 %v1175, %v1242
        %v1259 = vmul.f32 %v1177, %v1243
        %v1260 = vmul.f32 %v1179, %v1244
        %v1261 = vmul.f32 %v1181, %v1245
        %s1262 = sld [smem:[#allocation9 + $0x2]]
        %v1263 = vstv %s1262
        %v1264 = vmul.f32 %v1263, %v1246
        %v1265 = vmul.f32 %v1263, %v1247
        %v1266 = vmul.f32 %v1263, %v1248
        %v1267 = vmul.f32 %v1263, %v1249
        %v1268 = vmul.f32 %v1263, %v1250
        %v1269 = vmul.f32 %v1263, %v1251
        %v1270 = vmul.f32 %v1263, %v1252
        %v1271 = vmul.f32 %v1263, %v1253
        %v1272 = vmul.f32 %v1263, %v1254
        %v1273 = vmul.f32 %v1263, %v1255
        %v1274 = vmul.f32 %v1263, %v1256
        %v1275 = vmul.f32 %v1263, %v1257
        %v1276 = vmul.f32 %v1263, %v1258
        %v1277 = vmul.f32 %v1263, %v1259
        %v1278 = vmul.f32 %v1263, %v1260
        %v1279 = vmul.f32 %v1263, %v1261
        %v1280 = vadd.f32 %v945, %v1264
        %v1281 = vadd.f32 %v946, %v1265
        %v1282 = vadd.f32 %v947, %v1266
        %v1283 = vadd.f32 %v948, %v1267
        %v1284 = vadd.f32 %v949, %v1268
        %v1285 = vadd.f32 %v950, %v1269
        %v1286 = vadd.f32 %v951, %v1270
        %v1287 = vadd.f32 %v952, %v1271
        %v1288 = vadd.f32 %v953, %v1272
        %v1289 = vadd.f32 %v954, %v1273
        %v1290 = vadd.f32 %v955, %v1274
        %v1291 = vadd.f32 %v956, %v1275
        %v1292 = vadd.f32 %v957, %v1276
        %v1293 = vadd.f32 %v958, %v1277
        %v1294 = vadd.f32 %v959, %v1278
        %v1295 = vadd.f32 %v960, %v1279
        %v1296 = vld [vmem:[%s289 + $0x18] sm:$0xff]
        %v1297 = vld [vmem:[%s289 + $0x58] sm:$0xff]
        %v1298 = vld [vmem:[%s289 + $0x98] sm:$0xff]
        %v1299 = vld [vmem:[%s289 + $0xd8] sm:$0xff]
        %v1300 = vld [vmem:[%s289 + $0x118] sm:$0xff]
        %v1301 = vld [vmem:[%s289 + $0x158] sm:$0xff]
        %v1302 = vld [vmem:[%s289 + $0x198] sm:$0xff]
        %v1303 = vld [vmem:[%s289 + $0x1d8] sm:$0xff]
        %v1304 = vld [vmem:[%s289 + $0x218] sm:$0xff]
        %v1305 = vld [vmem:[%s289 + $0x258] sm:$0xff]
        %v1306 = vld [vmem:[%s289 + $0x298] sm:$0xff]
        %v1307 = vld [vmem:[%s289 + $0x2d8] sm:$0xff]
        %v1308 = vld [vmem:[%s289 + $0x318] sm:$0xff]
        %v1309 = vld [vmem:[%s289 + $0x358] sm:$0xff]
        %v1310 = vld [vmem:[%s289 + $0x398] sm:$0xff]
        %v1311 = vld [vmem:[%s289 + $0x3d8] sm:$0xff]
        %v1312 = vpack.c.bf16 %v1297, %v1296
        %v1313 = vpack.c.bf16 %v1299, %v1298
        %v1314 = vpack.c.bf16 %v1301, %v1300
        %v1315 = vpack.c.bf16 %v1303, %v1302
        %v1316 = vpack.c.bf16 %v1305, %v1304
        %v1317 = vpack.c.bf16 %v1307, %v1306
        %v1318 = vpack.c.bf16 %v1309, %v1308
        %v1319 = vpack.c.bf16 %v1311, %v1310
        %v1320 = vlaneseq
        %v1321 = vshrl.u32 %v1320, 7
        %v1322 = vsub.s32 3, %v1321
        %v1323 = vrot.slane %v285, %v1322
        %1324 = vmatprep.subr.bf16.mxu0 0
        %1325 = vmatpush1.bf16.xpose.msra.mxu0 %v280
        %1326 = vmatprep.subr.bf16.mxu0 0
        %1327 = vmatpush1.bf16.xpose.msra.mxu0 0
        %1328 = vmatprep.subr.bf16.mxu0 0
        %1329 = vmatpush1.bf16.xpose.msra.mxu0 0
        %1330 = vmatprep.subr.bf16.mxu0 0
        %1331 = vmatpush1.bf16.xpose.msra.mxu0 0
        %1332 = vmatprep.subr.bf16.mxu0 0
        %1333 = vmatpush1.bf16.xpose.msra.mxu0 0
        %1334 = vmatprep.subr.bf16.mxu0 0
        %1335 = vmatpush1.bf16.xpose.msra.mxu0 0
        %1336 = vmatprep.subr.bf16.mxu0 0
        %1337 = vmatpush1.bf16.xpose.msra.mxu0 0
        %1338 = vmatprep.subr.bf16.mxu0 0
        %1339 = vmatpush1.bf16.xpose.msra.mxu0 0
        %1340 = vmatprep.subr.bf16.mxu0 0
        %1341 = vmatpush1.bf16.xpose.msra.mxu0 0
        %1342 = vmatprep.subr.bf16.mxu0 0
        %1343 = vmatpush1.bf16.xpose.msra.mxu0 0
        %1344 = vmatprep.subr.bf16.mxu0 0
        %1345 = vmatpush1.bf16.xpose.msra.mxu0 0
        %1346 = vmatprep.subr.bf16.mxu0 0
        %1347 = vmatpush1.bf16.xpose.msra.mxu0 0
        %1348 = vmatprep.subr.bf16.mxu0 0
        %1349 = vmatpush1.bf16.xpose.msra.mxu0 0
        %1350 = vmatprep.subr.bf16.mxu0 0
        %1351 = vmatpush1.bf16.xpose.msra.mxu0 0
        %1352 = vmatprep.subr.bf16.mxu0 0
        %1353 = vmatpush1.bf16.xpose.msra.mxu0 0
        %1354 = vmatprep.subr.bf16.mxu0 0
        %1355 = vmatpush1.bf16.xpose.msra.mxu0 0
        %1356 = vmatprep.mubr.bf16.mxu0 0
        %1357 = vmatmul.mubr.bf16.gmra.mrb[0].mxu0 %v1312
        %v1358 = vpop.f32.mrb[0].mxu0
        %v1359 = vadd.f32 %v1323, %v1358
        %v1360 = vpop.f32.mrb[0].mxu0
        %v1361 = vpop.f32.mrb[0].mxu0
        %v1362 = vadd.f32 %v1323, %v1361
        %v1363 = vpop.f32.mrb[0].mxu0
        %1364 = vmatprep.mubr.bf16.mxu0 0
        %1365 = vmatmul.mubr.bf16.gmra.mrb[0].mxu0 %v1313
        %v1366 = vpop.f32.mrb[0].mxu0
        %v1367 = vadd.f32 %v1323, %v1366
        %v1368 = vpop.f32.mrb[0].mxu0
        %v1369 = vpop.f32.mrb[0].mxu0
        %v1370 = vadd.f32 %v1323, %v1369
        %v1371 = vpop.f32.mrb[0].mxu0
        %1372 = vmatprep.mubr.bf16.mxu0 0
        %1373 = vmatmul.mubr.bf16.gmra.mrb[0].mxu0 %v1314
        %v1374 = vpop.f32.mrb[0].mxu0
        %v1375 = vadd.f32 %v1323, %v1374
        %v1376 = vpop.f32.mrb[0].mxu0
        %v1377 = vpop.f32.mrb[0].mxu0
        %v1378 = vadd.f32 %v1323, %v1377
        %v1379 = vpop.f32.mrb[0].mxu0
        %1380 = vmatprep.mubr.bf16.mxu0 0
        %1381 = vmatmul.mubr.bf16.gmra.mrb[0].mxu0 %v1315
        %v1382 = vpop.f32.mrb[0].mxu0
        %v1383 = vadd.f32 %v1323, %v1382
        %v1384 = vpop.f32.mrb[0].mxu0
        %v1385 = vpop.f32.mrb[0].mxu0
        %v1386 = vadd.f32 %v1323, %v1385
        %v1387 = vpop.f32.mrb[0].mxu0
        %1388 = vmatprep.mubr.bf16.mxu0 0
        %1389 = vmatmul.mubr.bf16.gmra.mrb[0].mxu0 %v1316
        %v1390 = vpop.f32.mrb[0].mxu0
        %v1391 = vadd.f32 %v1323, %v1390
        %v1392 = vpop.f32.mrb[0].mxu0
        %v1393 = vpop.f32.mrb[0].mxu0
        %v1394 = vadd.f32 %v1323, %v1393
        %v1395 = vpop.f32.mrb[0].mxu0
        %1396 = vmatprep.mubr.bf16.mxu0 0
        %1397 = vmatmul.mubr.bf16.gmra.mrb[0].mxu0 %v1317
        %v1398 = vpop.f32.mrb[0].mxu0
        %v1399 = vadd.f32 %v1323, %v1398
        %v1400 = vpop.f32.mrb[0].mxu0
        %v1401 = vpop.f32.mrb[0].mxu0
        %v1402 = vadd.f32 %v1323, %v1401
        %v1403 = vpop.f32.mrb[0].mxu0
        %1404 = vmatprep.mubr.bf16.mxu0 0
        %1405 = vmatmul.mubr.bf16.gmra.mrb[0].mxu0 %v1318
        %v1406 = vpop.f32.mrb[0].mxu0
        %v1407 = vadd.f32 %v1323, %v1406
        %v1408 = vpop.f32.mrb[0].mxu0
        %v1409 = vpop.f32.mrb[0].mxu0
        %v1410 = vadd.f32 %v1323, %v1409
        %v1411 = vpop.f32.mrb[0].mxu0
        %1412 = vmatprep.mubr.bf16.mxu0 0
        %1413 = vmatmul.mubr.bf16.gmra.mrb[0].mxu0 %v1319
        %v1414 = vpop.f32.mrb[0].mxu0
        %v1415 = vadd.f32 %v1323, %v1414
        %v1416 = vpop.f32.mrb[0].mxu0
        %v1417 = vpop.f32.mrb[0].mxu0
        %v1418 = vadd.f32 %v1323, %v1417
        %v1419 = vpop.f32.mrb[0].mxu0
        %1420 = vdwg.mxu0
        %v1421 = vsel %vm415, %v1359, -inf
        %1422 = vmax.xlane.f32.xlu0 %v1421
        %v1423 = vpop.xlane.xlu0 %1422
        %v1424 = vsel %vm415, %v1362, -inf
        %1425 = vmax.xlane.f32.xlu0 %v1424
        %v1426 = vpop.xlane.xlu0 %1425
        %v1427 = vsel %vm415, %v1367, -inf
        %1428 = vmax.xlane.f32.xlu0 %v1427
        %v1429 = vpop.xlane.xlu0 %1428
        %v1430 = vsel %vm415, %v1370, -inf
        %1431 = vmax.xlane.f32.xlu0 %v1430
        %v1432 = vpop.xlane.xlu0 %1431
        %v1433 = vsel %vm415, %v1375, -inf
        %1434 = vmax.xlane.f32.xlu0 %v1433
        %v1435 = vpop.xlane.xlu0 %1434
        %v1436 = vsel %vm415, %v1378, -inf
        %1437 = vmax.xlane.f32.xlu0 %v1436
        %v1438 = vpop.xlane.xlu0 %1437
        %v1439 = vsel %vm415, %v1383, -inf
        %1440 = vmax.xlane.f32.xlu0 %v1439
        %v1441 = vpop.xlane.xlu0 %1440
        %v1442 = vsel %vm415, %v1386, -inf
        %1443 = vmax.xlane.f32.xlu0 %v1442
        %v1444 = vpop.xlane.xlu0 %1443
        %v1445 = vsel %vm415, %v1391, -inf
        %1446 = vmax.xlane.f32.xlu0 %v1445
        %v1447 = vpop.xlane.xlu0 %1446
        %v1448 = vsel %vm415, %v1394, -inf
        %1449 = vmax.xlane.f32.xlu0 %v1448
        %v1450 = vpop.xlane.xlu0 %1449
        %v1451 = vsel %vm415, %v1399, -inf
        %1452 = vmax.xlane.f32.xlu0 %v1451
        %v1453 = vpop.xlane.xlu0 %1452
        %v1454 = vsel %vm415, %v1402, -inf
        %1455 = vmax.xlane.f32.xlu0 %v1454
        %v1456 = vpop.xlane.xlu0 %1455
        %v1457 = vsel %vm415, %v1407, -inf
        %1458 = vmax.xlane.f32.xlu0 %v1457
        %v1459 = vpop.xlane.xlu0 %1458
        %v1460 = vsel %vm415, %v1410, -inf
        %1461 = vmax.xlane.f32.xlu0 %v1460
        %v1462 = vpop.xlane.xlu0 %1461
        %v1463 = vsel %vm415, %v1415, -inf
        %1464 = vmax.xlane.f32.xlu0 %v1463
        %v1465 = vpop.xlane.xlu0 %1464
        %v1466 = vsel %vm415, %v1418, -inf
        %1467 = vmax.xlane.f32.xlu0 %v1466
        %v1468 = vpop.xlane.xlu0 %1467
        %v1469 = vsub.f32 %v1359, %v1423
        %v1470 = vsub.f32 %v1362, %v1426
        %v1471 = vsub.f32 %v1367, %v1429
        %v1472 = vsub.f32 %v1370, %v1432
        %v1473 = vsub.f32 %v1375, %v1435
        %v1474 = vsub.f32 %v1378, %v1438
        %v1475 = vsub.f32 %v1383, %v1441
        %v1476 = vsub.f32 %v1386, %v1444
        %v1477 = vsub.f32 %v1391, %v1447
        %v1478 = vsub.f32 %v1394, %v1450
        %v1479 = vsub.f32 %v1399, %v1453
        %v1480 = vsub.f32 %v1402, %v1456
        %v1481 = vsub.f32 %v1407, %v1459
        %v1482 = vsub.f32 %v1410, %v1462
        %v1483 = vsub.f32 %v1415, %v1465
        %v1484 = vsub.f32 %v1418, %v1468
        %v1485 = vmul.f32 %v1469, 1.442695
        %v1486 = vpow.pop %v1485
        %v1487 = vmul.f32 %v1470, 1.442695
        %v1488 = vpow.pop %v1487
        %v1489 = vmul.f32 %v1471, 1.442695
        %v1490 = vpow.pop %v1489
        %v1491 = vmul.f32 %v1472, 1.442695
        %v1492 = vpow.pop %v1491
        %v1493 = vmul.f32 %v1473, 1.442695
        %v1494 = vpow.pop %v1493
        %v1495 = vmul.f32 %v1474, 1.442695
        %v1496 = vpow.pop %v1495
        %v1497 = vmul.f32 %v1475, 1.442695
        %v1498 = vpow.pop %v1497
        %v1499 = vmul.f32 %v1476, 1.442695
        %v1500 = vpow.pop %v1499
        %v1501 = vmul.f32 %v1477, 1.442695
        %v1502 = vpow.pop %v1501
        %v1503 = vmul.f32 %v1478, 1.442695
        %v1504 = vpow.pop %v1503
        %v1505 = vmul.f32 %v1479, 1.442695
        %v1506 = vpow.pop %v1505
        %v1507 = vmul.f32 %v1480, 1.442695
        %v1508 = vpow.pop %v1507
        %v1509 = vmul.f32 %v1481, 1.442695
        %v1510 = vpow.pop %v1509
        %v1511 = vmul.f32 %v1482, 1.442695
        %v1512 = vpow.pop %v1511
        %v1513 = vmul.f32 %v1483, 1.442695
        %v1514 = vpow.pop %v1513
        %v1515 = vmul.f32 %v1484, 1.442695
        %v1516 = vpow.pop %v1515
        %v1517 = vsel %vm415, %v1486, 0.0
        %1518 = vadd.xlane.f32.xlu0 %v1517
        %v1519 = vpop.xlane.xlu0 %1518
        %v1520 = vsel %vm415, %v1488, 0.0
        %1521 = vadd.xlane.f32.xlu0 %v1520
        %v1522 = vpop.xlane.xlu0 %1521
        %v1523 = vsel %vm415, %v1490, 0.0
        %1524 = vadd.xlane.f32.xlu0 %v1523
        %v1525 = vpop.xlane.xlu0 %1524
        %v1526 = vsel %vm415, %v1492, 0.0
        %1527 = vadd.xlane.f32.xlu0 %v1526
        %v1528 = vpop.xlane.xlu0 %1527
        %v1529 = vsel %vm415, %v1494, 0.0
        %1530 = vadd.xlane.f32.xlu0 %v1529
        %v1531 = vpop.xlane.xlu0 %1530
        %v1532 = vsel %vm415, %v1496, 0.0
        %1533 = vadd.xlane.f32.xlu0 %v1532
        %v1534 = vpop.xlane.xlu0 %1533
        %v1535 = vsel %vm415, %v1498, 0.0
        %1536 = vadd.xlane.f32.xlu0 %v1535
        %v1537 = vpop.xlane.xlu0 %1536
        %v1538 = vsel %vm415, %v1500, 0.0
        %1539 = vadd.xlane.f32.xlu0 %v1538
        %v1540 = vpop.xlane.xlu0 %1539
        %v1541 = vsel %vm415, %v1502, 0.0
        %1542 = vadd.xlane.f32.xlu0 %v1541
        %v1543 = vpop.xlane.xlu0 %1542
        %v1544 = vsel %vm415, %v1504, 0.0
        %1545 = vadd.xlane.f32.xlu0 %v1544
        %v1546 = vpop.xlane.xlu0 %1545
        %v1547 = vsel %vm415, %v1506, 0.0
        %1548 = vadd.xlane.f32.xlu0 %v1547
        %v1549 = vpop.xlane.xlu0 %1548
        %v1550 = vsel %vm415, %v1508, 0.0
        %1551 = vadd.xlane.f32.xlu0 %v1550
        %v1552 = vpop.xlane.xlu0 %1551
        %v1553 = vsel %vm415, %v1510, 0.0
        %1554 = vadd.xlane.f32.xlu0 %v1553
        %v1555 = vpop.xlane.xlu0 %1554
        %v1556 = vsel %vm415, %v1512, 0.0
        %1557 = vadd.xlane.f32.xlu0 %v1556
        %v1558 = vpop.xlane.xlu0 %1557
        %v1559 = vsel %vm415, %v1514, 0.0
        %1560 = vadd.xlane.f32.xlu0 %v1559
        %v1561 = vpop.xlane.xlu0 %1560
        %v1562 = vsel %vm415, %v1516, 0.0
        %1563 = vadd.xlane.f32.xlu0 %v1562
        %v1564 = vpop.xlane.xlu0 %1563
        %v1565 = vrcp.pop %v1519
        %v1566 = vrcp.pop %v1522
        %v1567 = vrcp.pop %v1525
        %v1568 = vrcp.pop %v1528
        %v1569 = vrcp.pop %v1531
        %v1570 = vrcp.pop %v1534
        %v1571 = vrcp.pop %v1537
        %v1572 = vrcp.pop %v1540
        %v1573 = vrcp.pop %v1543
        %v1574 = vrcp.pop %v1546
        %v1575 = vrcp.pop %v1549
        %v1576 = vrcp.pop %v1552
        %v1577 = vrcp.pop %v1555
        %v1578 = vrcp.pop %v1558
        %v1579 = vrcp.pop %v1561
        %v1580 = vrcp.pop %v1564
        %v1581 = vmul.f32 %v1486, %v1565
        %v1582 = vmul.f32 %v1488, %v1566
        %v1583 = vmul.f32 %v1490, %v1567
        %v1584 = vmul.f32 %v1492, %v1568
        %v1585 = vmul.f32 %v1494, %v1569
        %v1586 = vmul.f32 %v1496, %v1570
        %v1587 = vmul.f32 %v1498, %v1571
        %v1588 = vmul.f32 %v1500, %v1572
        %v1589 = vmul.f32 %v1502, %v1573
        %v1590 = vmul.f32 %v1504, %v1574
        %v1591 = vmul.f32 %v1506, %v1575
        %v1592 = vmul.f32 %v1508, %v1576
        %v1593 = vmul.f32 %v1510, %v1577
        %v1594 = vmul.f32 %v1512, %v1578
        %v1595 = vmul.f32 %v1514, %v1579
        %v1596 = vmul.f32 %v1516, %v1580
        %s1597 = sld [smem:[#allocation9 + $0x3]]
        %v1598 = vstv %s1597
        %v1599 = vmul.f32 %v1598, %v1581
        %v1600 = vmul.f32 %v1598, %v1582
        %v1601 = vmul.f32 %v1598, %v1583
        %v1602 = vmul.f32 %v1598, %v1584
        %v1603 = vmul.f32 %v1598, %v1585
        %v1604 = vmul.f32 %v1598, %v1586
        %v1605 = vmul.f32 %v1598, %v1587
        %v1606 = vmul.f32 %v1598, %v1588
        %v1607 = vmul.f32 %v1598, %v1589
        %v1608 = vmul.f32 %v1598, %v1590
        %v1609 = vmul.f32 %v1598, %v1591
        %v1610 = vmul.f32 %v1598, %v1592
        %v1611 = vmul.f32 %v1598, %v1593
        %v1612 = vmul.f32 %v1598, %v1594
        %v1613 = vmul.f32 %v1598, %v1595
        %v1614 = vmul.f32 %v1598, %v1596
        %v1615 = vadd.f32 %v1280, %v1599
        %v1616 = vadd.f32 %v1281, %v1600
        %v1617 = vadd.f32 %v1282, %v1601
        %v1618 = vadd.f32 %v1283, %v1602
        %v1619 = vadd.f32 %v1284, %v1603
        %v1620 = vadd.f32 %v1285, %v1604
        %v1621 = vadd.f32 %v1286, %v1605
        %v1622 = vadd.f32 %v1287, %v1606
        %v1623 = vadd.f32 %v1288, %v1607
        %v1624 = vadd.f32 %v1289, %v1608
        %v1625 = vadd.f32 %v1290, %v1609
        %v1626 = vadd.f32 %v1291, %v1610
        %v1627 = vadd.f32 %v1292, %v1611
        %v1628 = vadd.f32 %v1293, %v1612
        %v1629 = vadd.f32 %v1294, %v1613
        %v1630 = vadd.f32 %v1295, %v1614
        %v1631 = vld [vmem:[%s289 + $0x20] sm:$0xff]
        %v1632 = vld [vmem:[%s289 + $0x60] sm:$0xff]
        %v1633 = vld [vmem:[%s289 + $0xa0] sm:$0xff]
        %v1634 = vld [vmem:[%s289 + $0xe0] sm:$0xff]
        %v1635 = vld [vmem:[%s289 + $0x120] sm:$0xff]
        %v1636 = vld [vmem:[%s289 + $0x160] sm:$0xff]
        %v1637 = vld [vmem:[%s289 + $0x1a0] sm:$0xff]
        %v1638 = vld [vmem:[%s289 + $0x1e0] sm:$0xff]
        %v1639 = vld [vmem:[%s289 + $0x220] sm:$0xff]
        %v1640 = vld [vmem:[%s289 + $0x260] sm:$0xff]
        %v1641 = vld [vmem:[%s289 + $0x2a0] sm:$0xff]
        %v1642 = vld [vmem:[%s289 + $0x2e0] sm:$0xff]
        %v1643 = vld [vmem:[%s289 + $0x320] sm:$0xff]
        %v1644 = vld [vmem:[%s289 + $0x360] sm:$0xff]
        %v1645 = vld [vmem:[%s289 + $0x3a0] sm:$0xff]
        %v1646 = vld [vmem:[%s289 + $0x3e0] sm:$0xff]
        %v1647 = vpack.c.bf16 %v1632, %v1631
        %v1648 = vpack.c.bf16 %v1634, %v1633
        %v1649 = vpack.c.bf16 %v1636, %v1635
        %v1650 = vpack.c.bf16 %v1638, %v1637
        %v1651 = vpack.c.bf16 %v1640, %v1639
        %v1652 = vpack.c.bf16 %v1642, %v1641
        %v1653 = vpack.c.bf16 %v1644, %v1643
        %v1654 = vpack.c.bf16 %v1646, %v1645
        %v1655 = vlaneseq
        %v1656 = vshrl.u32 %v1655, 7
        %v1657 = vsub.s32 4, %v1656
        %v1658 = vrot.slane %v285, %v1657
        %1659 = vmatprep.subr.bf16.mxu0 0
        %1660 = vmatpush1.bf16.xpose.msra.mxu0 %v281
        %1661 = vmatprep.subr.bf16.mxu0 0
        %1662 = vmatpush1.bf16.xpose.msra.mxu0 0
        %1663 = vmatprep.subr.bf16.mxu0 0
        %1664 = vmatpush1.bf16.xpose.msra.mxu0 0
        %1665 = vmatprep.subr.bf16.mxu0 0
        %1666 = vmatpush1.bf16.xpose.msra.mxu0 0
        %1667 = vmatprep.subr.bf16.mxu0 0
        %1668 = vmatpush1.bf16.xpose.msra.mxu0 0
        %1669 = vmatprep.subr.bf16.mxu0 0
        %1670 = vmatpush1.bf16.xpose.msra.mxu0 0
        %1671 = vmatprep.subr.bf16.mxu0 0
        %1672 = vmatpush1.bf16.xpose.msra.mxu0 0
        %1673 = vmatprep.subr.bf16.mxu0 0
        %1674 = vmatpush1.bf16.xpose.msra.mxu0 0
        %1675 = vmatprep.subr.bf16.mxu0 0
        %1676 = vmatpush1.bf16.xpose.msra.mxu0 0
        %1677 = vmatprep.subr.bf16.mxu0 0
        %1678 = vmatpush1.bf16.xpose.msra.mxu0 0
        %1679 = vmatprep.subr.bf16.mxu0 0
        %1680 = vmatpush1.bf16.xpose.msra.mxu0 0
        %1681 = vmatprep.subr.bf16.mxu0 0
        %1682 = vmatpush1.bf16.xpose.msra.mxu0 0
        %1683 = vmatprep.subr.bf16.mxu0 0
        %1684 = vmatpush1.bf16.xpose.msra.mxu0 0
        %1685 = vmatprep.subr.bf16.mxu0 0
        %1686 = vmatpush1.bf16.xpose.msra.mxu0 0
        %1687 = vmatprep.subr.bf16.mxu0 0
        %1688 = vmatpush1.bf16.xpose.msra.mxu0 0
        %1689 = vmatprep.subr.bf16.mxu0 0
        %1690 = vmatpush1.bf16.xpose.msra.mxu0 0
        %1691 = vmatprep.mubr.bf16.mxu0 0
        %1692 = vmatmul.mubr.bf16.gmra.mrb[0].mxu0 %v1647
        %v1693 = vpop.f32.mrb[0].mxu0
        %v1694 = vadd.f32 %v1658, %v1693
        %v1695 = vpop.f32.mrb[0].mxu0
        %v1696 = vpop.f32.mrb[0].mxu0
        %v1697 = vadd.f32 %v1658, %v1696
        %v1698 = vpop.f32.mrb[0].mxu0
        %1699 = vmatprep.mubr.bf16.mxu0 0
        %1700 = vmatmul.mubr.bf16.gmra.mrb[0].mxu0 %v1648
        %v1701 = vpop.f32.mrb[0].mxu0
        %v1702 = vadd.f32 %v1658, %v1701
        %v1703 = vpop.f32.mrb[0].mxu0
        %v1704 = vpop.f32.mrb[0].mxu0
        %v1705 = vadd.f32 %v1658, %v1704
        %v1706 = vpop.f32.mrb[0].mxu0
        %1707 = vmatprep.mubr.bf16.mxu0 0
        %1708 = vmatmul.mubr.bf16.gmra.mrb[0].mxu0 %v1649
        %v1709 = vpop.f32.mrb[0].mxu0
        %v1710 = vadd.f32 %v1658, %v1709
        %v1711 = vpop.f32.mrb[0].mxu0
        %v1712 = vpop.f32.mrb[0].mxu0
        %v1713 = vadd.f32 %v1658, %v1712
        %v1714 = vpop.f32.mrb[0].mxu0
        %1715 = vmatprep.mubr.bf16.mxu0 0
        %1716 = vmatmul.mubr.bf16.gmra.mrb[0].mxu0 %v1650
        %v1717 = vpop.f32.mrb[0].mxu0
        %v1718 = vadd.f32 %v1658, %v1717
        %v1719 = vpop.f32.mrb[0].mxu0
        %v1720 = vpop.f32.mrb[0].mxu0
        %v1721 = vadd.f32 %v1658, %v1720
        %v1722 = vpop.f32.mrb[0].mxu0
        %1723 = vmatprep.mubr.bf16.mxu0 0
        %1724 = vmatmul.mubr.bf16.gmra.mrb[0].mxu0 %v1651
        %v1725 = vpop.f32.mrb[0].mxu0
        %v1726 = vadd.f32 %v1658, %v1725
        %v1727 = vpop.f32.mrb[0].mxu0
        %v1728 = vpop.f32.mrb[0].mxu0
        %v1729 = vadd.f32 %v1658, %v1728
        %v1730 = vpop.f32.mrb[0].mxu0
        %1731 = vmatprep.mubr.bf16.mxu0 0
        %1732 = vmatmul.mubr.bf16.gmra.mrb[0].mxu0 %v1652
        %v1733 = vpop.f32.mrb[0].mxu0
        %v1734 = vadd.f32 %v1658, %v1733
        %v1735 = vpop.f32.mrb[0].mxu0
        %v1736 = vpop.f32.mrb[0].mxu0
        %v1737 = vadd.f32 %v1658, %v1736
        %v1738 = vpop.f32.mrb[0].mxu0
        %1739 = vmatprep.mubr.bf16.mxu0 0
        %1740 = vmatmul.mubr.bf16.gmra.mrb[0].mxu0 %v1653
        %v1741 = vpop.f32.mrb[0].mxu0
        %v1742 = vadd.f32 %v1658, %v1741
        %v1743 = vpop.f32.mrb[0].mxu0
        %v1744 = vpop.f32.mrb[0].mxu0
        %v1745 = vadd.f32 %v1658, %v1744
        %v1746 = vpop.f32.mrb[0].mxu0
        %1747 = vmatprep.mubr.bf16.mxu0 0
        %1748 = vmatmul.mubr.bf16.gmra.mrb[0].mxu0 %v1654
        %v1749 = vpop.f32.mrb[0].mxu0
        %v1750 = vadd.f32 %v1658, %v1749
        %v1751 = vpop.f32.mrb[0].mxu0
        %v1752 = vpop.f32.mrb[0].mxu0
        %v1753 = vadd.f32 %v1658, %v1752
        %v1754 = vpop.f32.mrb[0].mxu0
        %1755 = vdwg.mxu0
        %v1756 = vsel %vm415, %v1694, -inf
        %1757 = vmax.xlane.f32.xlu0 %v1756
        %v1758 = vpop.xlane.xlu0 %1757
        %v1759 = vsel %vm415, %v1697, -inf
        %1760 = vmax.xlane.f32.xlu0 %v1759
        %v1761 = vpop.xlane.xlu0 %1760
        %v1762 = vsel %vm415, %v1702, -inf
        %1763 = vmax.xlane.f32.xlu0 %v1762
        %v1764 = vpop.xlane.xlu0 %1763
        %v1765 = vsel %vm415, %v1705, -inf
        %1766 = vmax.xlane.f32.xlu0 %v1765
        %v1767 = vpop.xlane.xlu0 %1766
        %v1768 = vsel %vm415, %v1710, -inf
        %1769 = vmax.xlane.f32.xlu0 %v1768
        %v1770 = vpop.xlane.xlu0 %1769
        %v1771 = vsel %vm415, %v1713, -inf
        %1772 = vmax.xlane.f32.xlu0 %v1771
        %v1773 = vpop.xlane.xlu0 %1772
        %v1774 = vsel %vm415, %v1718, -inf
        %1775 = vmax.xlane.f32.xlu0 %v1774
        %v1776 = vpop.xlane.xlu0 %1775
        %v1777 = vsel %vm415, %v1721, -inf
        %1778 = vmax.xlane.f32.xlu0 %v1777
        %v1779 = vpop.xlane.xlu0 %1778
        %v1780 = vsel %vm415, %v1726, -inf
        %1781 = vmax.xlane.f32.xlu0 %v1780
        %v1782 = vpop.xlane.xlu0 %1781
        %v1783 = vsel %vm415, %v1729, -inf
        %1784 = vmax.xlane.f32.xlu0 %v1783
        %v1785 = vpop.xlane.xlu0 %1784
        %v1786 = vsel %vm415, %v1734, -inf
        %1787 = vmax.xlane.f32.xlu0 %v1786
        %v1788 = vpop.xlane.xlu0 %1787
        %v1789 = vsel %vm415, %v1737, -inf
        %1790 = vmax.xlane.f32.xlu0 %v1789
        %v1791 = vpop.xlane.xlu0 %1790
        %v1792 = vsel %vm415, %v1742, -inf
        %1793 = vmax.xlane.f32.xlu0 %v1792
        %v1794 = vpop.xlane.xlu0 %1793
        %v1795 = vsel %vm415, %v1745, -inf
        %1796 = vmax.xlane.f32.xlu0 %v1795
        %v1797 = vpop.xlane.xlu0 %1796
        %v1798 = vsel %vm415, %v1750, -inf
        %1799 = vmax.xlane.f32.xlu0 %v1798
        %v1800 = vpop.xlane.xlu0 %1799
        %v1801 = vsel %vm415, %v1753, -inf
        %1802 = vmax.xlane.f32.xlu0 %v1801
        %v1803 = vpop.xlane.xlu0 %1802
        %v1804 = vsub.f32 %v1694, %v1758
        %v1805 = vsub.f32 %v1697, %v1761
        %v1806 = vsub.f32 %v1702, %v1764
        %v1807 = vsub.f32 %v1705, %v1767
        %v1808 = vsub.f32 %v1710, %v1770
        %v1809 = vsub.f32 %v1713, %v1773
        %v1810 = vsub.f32 %v1718, %v1776
        %v1811 = vsub.f32 %v1721, %v1779
        %v1812 = vsub.f32 %v1726, %v1782
        %v1813 = vsub.f32 %v1729, %v1785
        %v1814 = vsub.f32 %v1734, %v1788
        %v1815 = vsub.f32 %v1737, %v1791
        %v1816 = vsub.f32 %v1742, %v1794
        %v1817 = vsub.f32 %v1745, %v1797
        %v1818 = vsub.f32 %v1750, %v1800
        %v1819 = vsub.f32 %v1753, %v1803
        %v1820 = vmul.f32 %v1804, 1.442695
        %v1821 = vpow.pop %v1820
        %v1822 = vmul.f32 %v1805, 1.442695
        %v1823 = vpow.pop %v1822
        %v1824 = vmul.f32 %v1806, 1.442695
        %v1825 = vpow.pop %v1824
        %v1826 = vmul.f32 %v1807, 1.442695
        %v1827 = vpow.pop %v1826
        %v1828 = vmul.f32 %v1808, 1.442695
        %v1829 = vpow.pop %v1828
        %v1830 = vmul.f32 %v1809, 1.442695
        %v1831 = vpow.pop %v1830
        %v1832 = vmul.f32 %v1810, 1.442695
        %v1833 = vpow.pop %v1832
        %v1834 = vmul.f32 %v1811, 1.442695
        %v1835 = vpow.pop %v1834
        %v1836 = vmul.f32 %v1812, 1.442695
        %v1837 = vpow.pop %v1836
        %v1838 = vmul.f32 %v1813, 1.442695
        %v1839 = vpow.pop %v1838
        %v1840 = vmul.f32 %v1814, 1.442695
        %v1841 = vpow.pop %v1840
        %v1842 = vmul.f32 %v1815, 1.442695
        %v1843 = vpow.pop %v1842
        %v1844 = vmul.f32 %v1816, 1.442695
        %v1845 = vpow.pop %v1844
        %v1846 = vmul.f32 %v1817, 1.442695
        %v1847 = vpow.pop %v1846
        %v1848 = vmul.f32 %v1818, 1.442695
        %v1849 = vpow.pop %v1848
        %v1850 = vmul.f32 %v1819, 1.442695
        %v1851 = vpow.pop %v1850
        %v1852 = vsel %vm415, %v1821, 0.0
        %1853 = vadd.xlane.f32.xlu0 %v1852
        %v1854 = vpop.xlane.xlu0 %1853
        %v1855 = vsel %vm415, %v1823, 0.0
        %1856 = vadd.xlane.f32.xlu0 %v1855
        %v1857 = vpop.xlane.xlu0 %1856
        %v1858 = vsel %vm415, %v1825, 0.0
        %1859 = vadd.xlane.f32.xlu0 %v1858
        %v1860 = vpop.xlane.xlu0 %1859
        %v1861 = vsel %vm415, %v1827, 0.0
        %1862 = vadd.xlane.f32.xlu0 %v1861
        %v1863 = vpop.xlane.xlu0 %1862
        %v1864 = vsel %vm415, %v1829, 0.0
        %1865 = vadd.xlane.f32.xlu0 %v1864
        %v1866 = vpop.xlane.xlu0 %1865
        %v1867 = vsel %vm415, %v1831, 0.0
        %1868 = vadd.xlane.f32.xlu0 %v1867
        %v1869 = vpop.xlane.xlu0 %1868
        %v1870 = vsel %vm415, %v1833, 0.0
        %1871 = vadd.xlane.f32.xlu0 %v1870
        %v1872 = vpop.xlane.xlu0 %1871
        %v1873 = vsel %vm415, %v1835, 0.0
        %1874 = vadd.xlane.f32.xlu0 %v1873
        %v1875 = vpop.xlane.xlu0 %1874
        %v1876 = vsel %vm415, %v1837, 0.0
        %1877 = vadd.xlane.f32.xlu0 %v1876
        %v1878 = vpop.xlane.xlu0 %1877
        %v1879 = vsel %vm415, %v1839, 0.0
        %1880 = vadd.xlane.f32.xlu0 %v1879
        %v1881 = vpop.xlane.xlu0 %1880
        %v1882 = vsel %vm415, %v1841, 0.0
        %1883 = vadd.xlane.f32.xlu0 %v1882
        %v1884 = vpop.xlane.xlu0 %1883
        %v1885 = vsel %vm415, %v1843, 0.0
        %1886 = vadd.xlane.f32.xlu0 %v1885
        %v1887 = vpop.xlane.xlu0 %1886
        %v1888 = vsel %vm415, %v1845, 0.0
        %1889 = vadd.xlane.f32.xlu0 %v1888
        %v1890 = vpop.xlane.xlu0 %1889
        %v1891 = vsel %vm415, %v1847, 0.0
        %1892 = vadd.xlane.f32.xlu0 %v1891
        %v1893 = vpop.xlane.xlu0 %1892
        %v1894 = vsel %vm415, %v1849, 0.0
        %1895 = vadd.xlane.f32.xlu0 %v1894
        %v1896 = vpop.xlane.xlu0 %1895
        %v1897 = vsel %vm415, %v1851, 0.0
        %1898 = vadd.xlane.f32.xlu0 %v1897
        %v1899 = vpop.xlane.xlu0 %1898
        %v1900 = vrcp.pop %v1854
        %v1901 = vrcp.pop %v1857
        %v1902 = vrcp.pop %v1860
        %v1903 = vrcp.pop %v1863
        %v1904 = vrcp.pop %v1866
        %v1905 = vrcp.pop %v1869
        %v1906 = vrcp.pop %v1872
        %v1907 = vrcp.pop %v1875
        %v1908 = vrcp.pop %v1878
        %v1909 = vrcp.pop %v1881
        %v1910 = vrcp.pop %v1884
        %v1911 = vrcp.pop %v1887
        %v1912 = vrcp.pop %v1890
        %v1913 = vrcp.pop %v1893
        %v1914 = vrcp.pop %v1896
        %v1915 = vrcp.pop %v1899
        %v1916 = vmul.f32 %v1821, %v1900
        %v1917 = vmul.f32 %v1823, %v1901
        %v1918 = vmul.f32 %v1825, %v1902
        %v1919 = vmul.f32 %v1827, %v1903
        %v1920 = vmul.f32 %v1829, %v1904
        %v1921 = vmul.f32 %v1831, %v1905
        %v1922 = vmul.f32 %v1833, %v1906
        %v1923 = vmul.f32 %v1835, %v1907
        %v1924 = vmul.f32 %v1837, %v1908
        %v1925 = vmul.f32 %v1839, %v1909
        %v1926 = vmul.f32 %v1841, %v1910
        %v1927 = vmul.f32 %v1843, %v1911
        %v1928 = vmul.f32 %v1845, %v1912
        %v1929 = vmul.f32 %v1847, %v1913
        %v1930 = vmul.f32 %v1849, %v1914
        %v1931 = vmul.f32 %v1851, %v1915
        %s1932 = sld [smem:[#allocation9 + $0x4]]
        %v1933 = vstv %s1932
        %v1934 = vmul.f32 %v1933, %v1916
        %v1935 = vmul.f32 %v1933, %v1917
        %v1936 = vmul.f32 %v1933, %v1918
        %v1937 = vmul.f32 %v1933, %v1919
        %v1938 = vmul.f32 %v1933, %v1920
        %v1939 = vmul.f32 %v1933, %v1921
        %v1940 = vmul.f32 %v1933, %v1922
        %v1941 = vmul.f32 %v1933, %v1923
        %v1942 = vmul.f32 %v1933, %v1924
        %v1943 = vmul.f32 %v1933, %v1925
        %v1944 = vmul.f32 %v1933, %v1926
        %v1945 = vmul.f32 %v1933, %v1927
        %v1946 = vmul.f32 %v1933, %v1928
        %v1947 = vmul.f32 %v1933, %v1929
        %v1948 = vmul.f32 %v1933, %v1930
        %v1949 = vmul.f32 %v1933, %v1931
        %v1950 = vadd.f32 %v1615, %v1934
        %v1951 = vadd.f32 %v1616, %v1935
        %v1952 = vadd.f32 %v1617, %v1936
        %v1953 = vadd.f32 %v1618, %v1937
        %v1954 = vadd.f32 %v1619, %v1938
        %v1955 = vadd.f32 %v1620, %v1939
        %v1956 = vadd.f32 %v1621, %v1940
        %v1957 = vadd.f32 %v1622, %v1941
        %v1958 = vadd.f32 %v1623, %v1942
        %v1959 = vadd.f32 %v1624, %v1943
        %v1960 = vadd.f32 %v1625, %v1944
        %v1961 = vadd.f32 %v1626, %v1945
        %v1962 = vadd.f32 %v1627, %v1946
        %v1963 = vadd.f32 %v1628, %v1947
        %v1964 = vadd.f32 %v1629, %v1948
        %v1965 = vadd.f32 %v1630, %v1949
        %v1966 = vld [vmem:[%s289 + $0x28] sm:$0xff]
        %v1967 = vld [vmem:[%s289 + $0x68] sm:$0xff]
        %v1968 = vld [vmem:[%s289 + $0xa8] sm:$0xff]
        %v1969 = vld [vmem:[%s289 + $0xe8] sm:$0xff]
        %v1970 = vld [vmem:[%s289 + $0x128] sm:$0xff]
        %v1971 = vld [vmem:[%s289 + $0x168] sm:$0xff]
        %v1972 = vld [vmem:[%s289 + $0x1a8] sm:$0xff]
        %v1973 = vld [vmem:[%s289 + $0x1e8] sm:$0xff]
        %v1974 = vld [vmem:[%s289 + $0x228] sm:$0xff]
        %v1975 = vld [vmem:[%s289 + $0x268] sm:$0xff]
        %v1976 = vld [vmem:[%s289 + $0x2a8] sm:$0xff]
        %v1977 = vld [vmem:[%s289 + $0x2e8] sm:$0xff]
        %v1978 = vld [vmem:[%s289 + $0x328] sm:$0xff]
        %v1979 = vld [vmem:[%s289 + $0x368] sm:$0xff]
        %v1980 = vld [vmem:[%s289 + $0x3a8] sm:$0xff]
        %v1981 = vld [vmem:[%s289 + $0x3e8] sm:$0xff]
        %v1982 = vpack.c.bf16 %v1967, %v1966
        %v1983 = vpack.c.bf16 %v1969, %v1968
        %v1984 = vpack.c.bf16 %v1971, %v1970
        %v1985 = vpack.c.bf16 %v1973, %v1972
        %v1986 = vpack.c.bf16 %v1975, %v1974
        %v1987 = vpack.c.bf16 %v1977, %v1976
        %v1988 = vpack.c.bf16 %v1979, %v1978
        %v1989 = vpack.c.bf16 %v1981, %v1980
        %v1990 = vlaneseq
        %v1991 = vshrl.u32 %v1990, 7
        %v1992 = vsub.s32 5, %v1991
        %v1993 = vrot.slane %v285, %v1992
        %1994 = vmatprep.subr.bf16.mxu0 0
        %1995 = vmatpush1.bf16.xpose.msra.mxu0 %v282
        %1996 = vmatprep.subr.bf16.mxu0 0
        %1997 = vmatpush1.bf16.xpose.msra.mxu0 0
        %1998 = vmatprep.subr.bf16.mxu0 0
        %1999 = vmatpush1.bf16.xpose.msra.mxu0 0
        %2000 = vmatprep.subr.bf16.mxu0 0
        %2001 = vmatpush1.bf16.xpose.msra.mxu0 0
        %2002 = vmatprep.subr.bf16.mxu0 0
        %2003 = vmatpush1.bf16.xpose.msra.mxu0 0
        %2004 = vmatprep.subr.bf16.mxu0 0
        %2005 = vmatpush1.bf16.xpose.msra.mxu0 0
        %2006 = vmatprep.subr.bf16.mxu0 0
        %2007 = vmatpush1.bf16.xpose.msra.mxu0 0
        %2008 = vmatprep.subr.bf16.mxu0 0
        %2009 = vmatpush1.bf16.xpose.msra.mxu0 0
        %2010 = vmatprep.subr.bf16.mxu0 0
        %2011 = vmatpush1.bf16.xpose.msra.mxu0 0
        %2012 = vmatprep.subr.bf16.mxu0 0
        %2013 = vmatpush1.bf16.xpose.msra.mxu0 0
        %2014 = vmatprep.subr.bf16.mxu0 0
        %2015 = vmatpush1.bf16.xpose.msra.mxu0 0
        %2016 = vmatprep.subr.bf16.mxu0 0
        %2017 = vmatpush1.bf16.xpose.msra.mxu0 0
        %2018 = vmatprep.subr.bf16.mxu0 0
        %2019 = vmatpush1.bf16.xpose.msra.mxu0 0
        %2020 = vmatprep.subr.bf16.mxu0 0
        %2021 = vmatpush1.bf16.xpose.msra.mxu0 0
        %2022 = vmatprep.subr.bf16.mxu0 0
        %2023 = vmatpush1.bf16.xpose.msra.mxu0 0
        %2024 = vmatprep.subr.bf16.mxu0 0
        %2025 = vmatpush1.bf16.xpose.msra.mxu0 0
        %2026 = vmatprep.mubr.bf16.mxu0 0
        %2027 = vmatmul.mubr.bf16.gmra.mrb[0].mxu0 %v1982
        %v2028 = vpop.f32.mrb[0].mxu0
        %v2029 = vadd.f32 %v1993, %v2028
        %v2030 = vpop.f32.mrb[0].mxu0
        %v2031 = vpop.f32.mrb[0].mxu0
        %v2032 = vadd.f32 %v1993, %v2031
        %v2033 = vpop.f32.mrb[0].mxu0
        %2034 = vmatprep.mubr.bf16.mxu0 0
        %2035 = vmatmul.mubr.bf16.gmra.mrb[0].mxu0 %v1983
        %v2036 = vpop.f32.mrb[0].mxu0
        %v2037 = vadd.f32 %v1993, %v2036
        %v2038 = vpop.f32.mrb[0].mxu0
        %v2039 = vpop.f32.mrb[0].mxu0
        %v2040 = vadd.f32 %v1993, %v2039
        %v2041 = vpop.f32.mrb[0].mxu0
        %2042 = vmatprep.mubr.bf16.mxu0 0
        %2043 = vmatmul.mubr.bf16.gmra.mrb[0].mxu0 %v1984
        %v2044 = vpop.f32.mrb[0].mxu0
        %v2045 = vadd.f32 %v1993, %v2044
        %v2046 = vpop.f32.mrb[0].mxu0
        %v2047 = vpop.f32.mrb[0].mxu0
        %v2048 = vadd.f32 %v1993, %v2047
        %v2049 = vpop.f32.mrb[0].mxu0
        %2050 = vmatprep.mubr.bf16.mxu0 0
        %2051 = vmatmul.mubr.bf16.gmra.mrb[0].mxu0 %v1985
        %v2052 = vpop.f32.mrb[0].mxu0
        %v2053 = vadd.f32 %v1993, %v2052
        %v2054 = vpop.f32.mrb[0].mxu0
        %v2055 = vpop.f32.mrb[0].mxu0
        %v2056 = vadd.f32 %v1993, %v2055
        %v2057 = vpop.f32.mrb[0].mxu0
        %2058 = vmatprep.mubr.bf16.mxu0 0
        %2059 = vmatmul.mubr.bf16.gmra.mrb[0].mxu0 %v1986
        %v2060 = vpop.f32.mrb[0].mxu0
        %v2061 = vadd.f32 %v1993, %v2060
        %v2062 = vpop.f32.mrb[0].mxu0
        %v2063 = vpop.f32.mrb[0].mxu0
        %v2064 = vadd.f32 %v1993, %v2063
        %v2065 = vpop.f32.mrb[0].mxu0
        %2066 = vmatprep.mubr.bf16.mxu0 0
        %2067 = vmatmul.mubr.bf16.gmra.mrb[0].mxu0 %v1987
        %v2068 = vpop.f32.mrb[0].mxu0
        %v2069 = vadd.f32 %v1993, %v2068
        %v2070 = vpop.f32.mrb[0].mxu0
        %v2071 = vpop.f32.mrb[0].mxu0
        %v2072 = vadd.f32 %v1993, %v2071
        %v2073 = vpop.f32.mrb[0].mxu0
        %2074 = vmatprep.mubr.bf16.mxu0 0
        %2075 = vmatmul.mubr.bf16.gmra.mrb[0].mxu0 %v1988
        %v2076 = vpop.f32.mrb[0].mxu0
        %v2077 = vadd.f32 %v1993, %v2076
        %v2078 = vpop.f32.mrb[0].mxu0
        %v2079 = vpop.f32.mrb[0].mxu0
        %v2080 = vadd.f32 %v1993, %v2079
        %v2081 = vpop.f32.mrb[0].mxu0
        %2082 = vmatprep.mubr.bf16.mxu0 0
        %2083 = vmatmul.mubr.bf16.gmra.mrb[0].mxu0 %v1989
        %v2084 = vpop.f32.mrb[0].mxu0
        %v2085 = vadd.f32 %v1993, %v2084
        %v2086 = vpop.f32.mrb[0].mxu0
        %v2087 = vpop.f32.mrb[0].mxu0
        %v2088 = vadd.f32 %v1993, %v2087
        %v2089 = vpop.f32.mrb[0].mxu0
        %2090 = vdwg.mxu0
        %v2091 = vsel %vm415, %v2029, -inf
        %2092 = vmax.xlane.f32.xlu0 %v2091
        %v2093 = vpop.xlane.xlu0 %2092
        %v2094 = vsel %vm415, %v2032, -inf
        %2095 = vmax.xlane.f32.xlu0 %v2094
        %v2096 = vpop.xlane.xlu0 %2095
        %v2097 = vsel %vm415, %v2037, -inf
        %2098 = vmax.xlane.f32.xlu0 %v2097
        %v2099 = vpop.xlane.xlu0 %2098
        %v2100 = vsel %vm415, %v2040, -inf
        %2101 = vmax.xlane.f32.xlu0 %v2100
        %v2102 = vpop.xlane.xlu0 %2101
        %v2103 = vsel %vm415, %v2045, -inf
        %2104 = vmax.xlane.f32.xlu0 %v2103
        %v2105 = vpop.xlane.xlu0 %2104
        %v2106 = vsel %vm415, %v2048, -inf
        %2107 = vmax.xlane.f32.xlu0 %v2106
        %v2108 = vpop.xlane.xlu0 %2107
        %v2109 = vsel %vm415, %v2053, -inf
        %2110 = vmax.xlane.f32.xlu0 %v2109
        %v2111 = vpop.xlane.xlu0 %2110
        %v2112 = vsel %vm415, %v2056, -inf
        %2113 = vmax.xlane.f32.xlu0 %v2112
        %v2114 = vpop.xlane.xlu0 %2113
        %v2115 = vsel %vm415, %v2061, -inf
        %2116 = vmax.xlane.f32.xlu0 %v2115
        %v2117 = vpop.xlane.xlu0 %2116
        %v2118 = vsel %vm415, %v2064, -inf
        %2119 = vmax.xlane.f32.xlu0 %v2118
        %v2120 = vpop.xlane.xlu0 %2119
        %v2121 = vsel %vm415, %v2069, -inf
        %2122 = vmax.xlane.f32.xlu0 %v2121
        %v2123 = vpop.xlane.xlu0 %2122
        %v2124 = vsel %vm415, %v2072, -inf
        %2125 = vmax.xlane.f32.xlu0 %v2124
        %v2126 = vpop.xlane.xlu0 %2125
        %v2127 = vsel %vm415, %v2077, -inf
        %2128 = vmax.xlane.f32.xlu0 %v2127
        %v2129 = vpop.xlane.xlu0 %2128
        %v2130 = vsel %vm415, %v2080, -inf
        %2131 = vmax.xlane.f32.xlu0 %v2130
        %v2132 = vpop.xlane.xlu0 %2131
        %v2133 = vsel %vm415, %v2085, -inf
        %2134 = vmax.xlane.f32.xlu0 %v2133
        %v2135 = vpop.xlane.xlu0 %2134
        %v2136 = vsel %vm415, %v2088, -inf
        %2137 = vmax.xlane.f32.xlu0 %v2136
        %v2138 = vpop.xlane.xlu0 %2137
        %v2139 = vsub.f32 %v2029, %v2093
        %v2140 = vsub.f32 %v2032, %v2096
        %v2141 = vsub.f32 %v2037, %v2099
        %v2142 = vsub.f32 %v2040, %v2102
        %v2143 = vsub.f32 %v2045, %v2105
        %v2144 = vsub.f32 %v2048, %v2108
        %v2145 = vsub.f32 %v2053, %v2111
        %v2146 = vsub.f32 %v2056, %v2114
        %v2147 = vsub.f32 %v2061, %v2117
        %v2148 = vsub.f32 %v2064, %v2120
        %v2149 = vsub.f32 %v2069, %v2123
        %v2150 = vsub.f32 %v2072, %v2126
        %v2151 = vsub.f32 %v2077, %v2129
        %v2152 = vsub.f32 %v2080, %v2132
        %v2153 = vsub.f32 %v2085, %v2135
        %v2154 = vsub.f32 %v2088, %v2138
        %v2155 = vmul.f32 %v2139, 1.442695
        %v2156 = vpow.pop %v2155
        %v2157 = vmul.f32 %v2140, 1.442695
        %v2158 = vpow.pop %v2157
        %v2159 = vmul.f32 %v2141, 1.442695
        %v2160 = vpow.pop %v2159
        %v2161 = vmul.f32 %v2142, 1.442695
        %v2162 = vpow.pop %v2161
        %v2163 = vmul.f32 %v2143, 1.442695
        %v2164 = vpow.pop %v2163
        %v2165 = vmul.f32 %v2144, 1.442695
        %v2166 = vpow.pop %v2165
        %v2167 = vmul.f32 %v2145, 1.442695
        %v2168 = vpow.pop %v2167
        %v2169 = vmul.f32 %v2146, 1.442695
        %v2170 = vpow.pop %v2169
        %v2171 = vmul.f32 %v2147, 1.442695
        %v2172 = vpow.pop %v2171
        %v2173 = vmul.f32 %v2148, 1.442695
        %v2174 = vpow.pop %v2173
        %v2175 = vmul.f32 %v2149, 1.442695
        %v2176 = vpow.pop %v2175
        %v2177 = vmul.f32 %v2150, 1.442695
        %v2178 = vpow.pop %v2177
        %v2179 = vmul.f32 %v2151, 1.442695
        %v2180 = vpow.pop %v2179
        %v2181 = vmul.f32 %v2152, 1.442695
        %v2182 = vpow.pop %v2181
        %v2183 = vmul.f32 %v2153, 1.442695
        %v2184 = vpow.pop %v2183
        %v2185 = vmul.f32 %v2154, 1.442695
        %v2186 = vpow.pop %v2185
        %v2187 = vsel %vm415, %v2156, 0.0
        %2188 = vadd.xlane.f32.xlu0 %v2187
        %v2189 = vpop.xlane.xlu0 %2188
        %v2190 = vsel %vm415, %v2158, 0.0
        %2191 = vadd.xlane.f32.xlu0 %v2190
        %v2192 = vpop.xlane.xlu0 %2191
        %v2193 = vsel %vm415, %v2160, 0.0
        %2194 = vadd.xlane.f32.xlu0 %v2193
        %v2195 = vpop.xlane.xlu0 %2194
        %v2196 = vsel %vm415, %v2162, 0.0
        %2197 = vadd.xlane.f32.xlu0 %v2196
        %v2198 = vpop.xlane.xlu0 %2197
        %v2199 = vsel %vm415, %v2164, 0.0
        %2200 = vadd.xlane.f32.xlu0 %v2199
        %v2201 = vpop.xlane.xlu0 %2200
        %v2202 = vsel %vm415, %v2166, 0.0
        %2203 = vadd.xlane.f32.xlu0 %v2202
        %v2204 = vpop.xlane.xlu0 %2203
        %v2205 = vsel %vm415, %v2168, 0.0
        %2206 = vadd.xlane.f32.xlu0 %v2205
        %v2207 = vpop.xlane.xlu0 %2206
        %v2208 = vsel %vm415, %v2170, 0.0
        %2209 = vadd.xlane.f32.xlu0 %v2208
        %v2210 = vpop.xlane.xlu0 %2209
        %v2211 = vsel %vm415, %v2172, 0.0
        %2212 = vadd.xlane.f32.xlu0 %v2211
        %v2213 = vpop.xlane.xlu0 %2212
        %v2214 = vsel %vm415, %v2174, 0.0
        %2215 = vadd.xlane.f32.xlu0 %v2214
        %v2216 = vpop.xlane.xlu0 %2215
        %v2217 = vsel %vm415, %v2176, 0.0
        %2218 = vadd.xlane.f32.xlu0 %v2217
        %v2219 = vpop.xlane.xlu0 %2218
        %v2220 = vsel %vm415, %v2178, 0.0
        %2221 = vadd.xlane.f32.xlu0 %v2220
        %v2222 = vpop.xlane.xlu0 %2221
        %v2223 = vsel %vm415, %v2180, 0.0
        %2224 = vadd.xlane.f32.xlu0 %v2223
        %v2225 = vpop.xlane.xlu0 %2224
        %v2226 = vsel %vm415, %v2182, 0.0
        %2227 = vadd.xlane.f32.xlu0 %v2226
        %v2228 = vpop.xlane.xlu0 %2227
        %v2229 = vsel %vm415, %v2184, 0.0
        %2230 = vadd.xlane.f32.xlu0 %v2229
        %v2231 = vpop.xlane.xlu0 %2230
        %v2232 = vsel %vm415, %v2186, 0.0
        %2233 = vadd.xlane.f32.xlu0 %v2232
        %v2234 = vpop.xlane.xlu0 %2233
        %v2235 = vrcp.pop %v2189
        %v2236 = vrcp.pop %v2192
        %v2237 = vrcp.pop %v2195
        %v2238 = vrcp.pop %v2198
        %v2239 = vrcp.pop %v2201
        %v2240 = vrcp.pop %v2204
        %v2241 = vrcp.pop %v2207
        %v2242 = vrcp.pop %v2210
        %v2243 = vrcp.pop %v2213
        %v2244 = vrcp.pop %v2216
        %v2245 = vrcp.pop %v2219
        %v2246 = vrcp.pop %v2222
        %v2247 = vrcp.pop %v2225
        %v2248 = vrcp.pop %v2228
        %v2249 = vrcp.pop %v2231
        %v2250 = vrcp.pop %v2234
        %v2251 = vmul.f32 %v2156, %v2235
        %v2252 = vmul.f32 %v2158, %v2236
        %v2253 = vmul.f32 %v2160, %v2237
        %v2254 = vmul.f32 %v2162, %v2238
        %v2255 = vmul.f32 %v2164, %v2239
        %v2256 = vmul.f32 %v2166, %v2240
        %v2257 = vmul.f32 %v2168, %v2241
        %v2258 = vmul.f32 %v2170, %v2242
        %v2259 = vmul.f32 %v2172, %v2243
        %v2260 = vmul.f32 %v2174, %v2244
        %v2261 = vmul.f32 %v2176, %v2245
        %v2262 = vmul.f32 %v2178, %v2246
        %v2263 = vmul.f32 %v2180, %v2247
        %v2264 = vmul.f32 %v2182, %v2248
        %v2265 = vmul.f32 %v2184, %v2249
        %v2266 = vmul.f32 %v2186, %v2250
        %s2267 = sld [smem:[#allocation9 + $0x5]]
        %v2268 = vstv %s2267
        %v2269 = vmul.f32 %v2268, %v2251
        %v2270 = vmul.f32 %v2268, %v2252
        %v2271 = vmul.f32 %v2268, %v2253
        %v2272 = vmul.f32 %v2268, %v2254
        %v2273 = vmul.f32 %v2268, %v2255
        %v2274 = vmul.f32 %v2268, %v2256
        %v2275 = vmul.f32 %v2268, %v2257
        %v2276 = vmul.f32 %v2268, %v2258
        %v2277 = vmul.f32 %v2268, %v2259
        %v2278 = vmul.f32 %v2268, %v2260
        %v2279 = vmul.f32 %v2268, %v2261
        %v2280 = vmul.f32 %v2268, %v2262
        %v2281 = vmul.f32 %v2268, %v2263
        %v2282 = vmul.f32 %v2268, %v2264
        %v2283 = vmul.f32 %v2268, %v2265
        %v2284 = vmul.f32 %v2268, %v2266
        %v2285 = vadd.f32 %v1950, %v2269
        %v2286 = vadd.f32 %v1951, %v2270
        %v2287 = vadd.f32 %v1952, %v2271
        %v2288 = vadd.f32 %v1953, %v2272
        %v2289 = vadd.f32 %v1954, %v2273
        %v2290 = vadd.f32 %v1955, %v2274
        %v2291 = vadd.f32 %v1956, %v2275
        %v2292 = vadd.f32 %v1957, %v2276
        %v2293 = vadd.f32 %v1958, %v2277
        %v2294 = vadd.f32 %v1959, %v2278
        %v2295 = vadd.f32 %v1960, %v2279
        %v2296 = vadd.f32 %v1961, %v2280
        %v2297 = vadd.f32 %v1962, %v2281
        %v2298 = vadd.f32 %v1963, %v2282
        %v2299 = vadd.f32 %v1964, %v2283
        %v2300 = vadd.f32 %v1965, %v2284
        %v2301 = vld [vmem:[%s289 + $0x30] sm:$0xff]
        %v2302 = vld [vmem:[%s289 + $0x70] sm:$0xff]
        %v2303 = vld [vmem:[%s289 + $0xb0] sm:$0xff]
        %v2304 = vld [vmem:[%s289 + $0xf0] sm:$0xff]
        %v2305 = vld [vmem:[%s289 + $0x130] sm:$0xff]
        %v2306 = vld [vmem:[%s289 + $0x170] sm:$0xff]
        %v2307 = vld [vmem:[%s289 + $0x1b0] sm:$0xff]
        %v2308 = vld [vmem:[%s289 + $0x1f0] sm:$0xff]
        %v2309 = vld [vmem:[%s289 + $0x230] sm:$0xff]
        %v2310 = vld [vmem:[%s289 + $0x270] sm:$0xff]
        %v2311 = vld [vmem:[%s289 + $0x2b0] sm:$0xff]
        %v2312 = vld [vmem:[%s289 + $0x2f0] sm:$0xff]
        %v2313 = vld [vmem:[%s289 + $0x330] sm:$0xff]
        %v2314 = vld [vmem:[%s289 + $0x370] sm:$0xff]
        %v2315 = vld [vmem:[%s289 + $0x3b0] sm:$0xff]
        %v2316 = vld [vmem:[%s289 + $0x3f0] sm:$0xff]
        %v2317 = vpack.c.bf16 %v2302, %v2301
        %v2318 = vpack.c.bf16 %v2304, %v2303
        %v2319 = vpack.c.bf16 %v2306, %v2305
        %v2320 = vpack.c.bf16 %v2308, %v2307
        %v2321 = vpack.c.bf16 %v2310, %v2309
        %v2322 = vpack.c.bf16 %v2312, %v2311
        %v2323 = vpack.c.bf16 %v2314, %v2313
        %v2324 = vpack.c.bf16 %v2316, %v2315
        %v2325 = vlaneseq
        %v2326 = vshrl.u32 %v2325, 7
        %v2327 = vsub.s32 6, %v2326
        %v2328 = vrot.slane %v285, %v2327
        %2329 = vmatprep.subr.bf16.mxu0 0
        %2330 = vmatpush1.bf16.xpose.msra.mxu0 %v283
        %2331 = vmatprep.subr.bf16.mxu0 0
        %2332 = vmatpush1.bf16.xpose.msra.mxu0 0
        %2333 = vmatprep.subr.bf16.mxu0 0
        %2334 = vmatpush1.bf16.xpose.msra.mxu0 0
        %2335 = vmatprep.subr.bf16.mxu0 0
        %2336 = vmatpush1.bf16.xpose.msra.mxu0 0
        %2337 = vmatprep.subr.bf16.mxu0 0
        %2338 = vmatpush1.bf16.xpose.msra.mxu0 0
        %2339 = vmatprep.subr.bf16.mxu0 0
        %2340 = vmatpush1.bf16.xpose.msra.mxu0 0
        %2341 = vmatprep.subr.bf16.mxu0 0
        %2342 = vmatpush1.bf16.xpose.msra.mxu0 0
        %2343 = vmatprep.subr.bf16.mxu0 0
        %2344 = vmatpush1.bf16.xpose.msra.mxu0 0
        %2345 = vmatprep.subr.bf16.mxu0 0
        %2346 = vmatpush1.bf16.xpose.msra.mxu0 0
        %2347 = vmatprep.subr.bf16.mxu0 0
        %2348 = vmatpush1.bf16.xpose.msra.mxu0 0
        %2349 = vmatprep.subr.bf16.mxu0 0
        %2350 = vmatpush1.bf16.xpose.msra.mxu0 0
        %2351 = vmatprep.subr.bf16.mxu0 0
        %2352 = vmatpush1.bf16.xpose.msra.mxu0 0
        %2353 = vmatprep.subr.bf16.mxu0 0
        %2354 = vmatpush1.bf16.xpose.msra.mxu0 0
        %2355 = vmatprep.subr.bf16.mxu0 0
        %2356 = vmatpush1.bf16.xpose.msra.mxu0 0
        %2357 = vmatprep.subr.bf16.mxu0 0
        %2358 = vmatpush1.bf16.xpose.msra.mxu0 0
        %2359 = vmatprep.subr.bf16.mxu0 0
        %2360 = vmatpush1.bf16.xpose.msra.mxu0 0
        %2361 = vmatprep.mubr.bf16.mxu0 0
        %2362 = vmatmul.mubr.bf16.gmra.mrb[0].mxu0 %v2317
        %v2363 = vpop.f32.mrb[0].mxu0
        %v2364 = vadd.f32 %v2328, %v2363
        %v2365 = vpop.f32.mrb[0].mxu0
        %v2366 = vpop.f32.mrb[0].mxu0
        %v2367 = vadd.f32 %v2328, %v2366
        %v2368 = vpop.f32.mrb[0].mxu0
        %2369 = vmatprep.mubr.bf16.mxu0 0
        %2370 = vmatmul.mubr.bf16.gmra.mrb[0].mxu0 %v2318
        %v2371 = vpop.f32.mrb[0].mxu0
        %v2372 = vadd.f32 %v2328, %v2371
        %v2373 = vpop.f32.mrb[0].mxu0
        %v2374 = vpop.f32.mrb[0].mxu0
        %v2375 = vadd.f32 %v2328, %v2374
        %v2376 = vpop.f32.mrb[0].mxu0
        %2377 = vmatprep.mubr.bf16.mxu0 0
        %2378 = vmatmul.mubr.bf16.gmra.mrb[0].mxu0 %v2319
        %v2379 = vpop.f32.mrb[0].mxu0
        %v2380 = vadd.f32 %v2328, %v2379
        %v2381 = vpop.f32.mrb[0].mxu0
        %v2382 = vpop.f32.mrb[0].mxu0
        %v2383 = vadd.f32 %v2328, %v2382
        %v2384 = vpop.f32.mrb[0].mxu0
        %2385 = vmatprep.mubr.bf16.mxu0 0
        %2386 = vmatmul.mubr.bf16.gmra.mrb[0].mxu0 %v2320
        %v2387 = vpop.f32.mrb[0].mxu0
        %v2388 = vadd.f32 %v2328, %v2387
        %v2389 = vpop.f32.mrb[0].mxu0
        %v2390 = vpop.f32.mrb[0].mxu0
        %v2391 = vadd.f32 %v2328, %v2390
        %v2392 = vpop.f32.mrb[0].mxu0
        %2393 = vmatprep.mubr.bf16.mxu0 0
        %2394 = vmatmul.mubr.bf16.gmra.mrb[0].mxu0 %v2321
        %v2395 = vpop.f32.mrb[0].mxu0
        %v2396 = vadd.f32 %v2328, %v2395
        %v2397 = vpop.f32.mrb[0].mxu0
        %v2398 = vpop.f32.mrb[0].mxu0
        %v2399 = vadd.f32 %v2328, %v2398
        %v2400 = vpop.f32.mrb[0].mxu0
        %2401 = vmatprep.mubr.bf16.mxu0 0
        %2402 = vmatmul.mubr.bf16.gmra.mrb[0].mxu0 %v2322
        %v2403 = vpop.f32.mrb[0].mxu0
        %v2404 = vadd.f32 %v2328, %v2403
        %v2405 = vpop.f32.mrb[0].mxu0
        %v2406 = vpop.f32.mrb[0].mxu0
        %v2407 = vadd.f32 %v2328, %v2406
        %v2408 = vpop.f32.mrb[0].mxu0
        %2409 = vmatprep.mubr.bf16.mxu0 0
        %2410 = vmatmul.mubr.bf16.gmra.mrb[0].mxu0 %v2323
        %v2411 = vpop.f32.mrb[0].mxu0
        %v2412 = vadd.f32 %v2328, %v2411
        %v2413 = vpop.f32.mrb[0].mxu0
        %v2414 = vpop.f32.mrb[0].mxu0
        %v2415 = vadd.f32 %v2328, %v2414
        %v2416 = vpop.f32.mrb[0].mxu0
        %2417 = vmatprep.mubr.bf16.mxu0 0
        %2418 = vmatmul.mubr.bf16.gmra.mrb[0].mxu0 %v2324
        %v2419 = vpop.f32.mrb[0].mxu0
        %v2420 = vadd.f32 %v2328, %v2419
        %v2421 = vpop.f32.mrb[0].mxu0
        %v2422 = vpop.f32.mrb[0].mxu0
        %v2423 = vadd.f32 %v2328, %v2422
        %v2424 = vpop.f32.mrb[0].mxu0
        %2425 = vdwg.mxu0
        %v2426 = vsel %vm415, %v2364, -inf
        %2427 = vmax.xlane.f32.xlu0 %v2426
        %v2428 = vpop.xlane.xlu0 %2427
        %v2429 = vsel %vm415, %v2367, -inf
        %2430 = vmax.xlane.f32.xlu0 %v2429
        %v2431 = vpop.xlane.xlu0 %2430
        %v2432 = vsel %vm415, %v2372, -inf
        %2433 = vmax.xlane.f32.xlu0 %v2432
        %v2434 = vpop.xlane.xlu0 %2433
        %v2435 = vsel %vm415, %v2375, -inf
        %2436 = vmax.xlane.f32.xlu0 %v2435
        %v2437 = vpop.xlane.xlu0 %2436
        %v2438 = vsel %vm415, %v2380, -inf
        %2439 = vmax.xlane.f32.xlu0 %v2438
        %v2440 = vpop.xlane.xlu0 %2439
        %v2441 = vsel %vm415, %v2383, -inf
        %2442 = vmax.xlane.f32.xlu0 %v2441
        %v2443 = vpop.xlane.xlu0 %2442
        %v2444 = vsel %vm415, %v2388, -inf
        %2445 = vmax.xlane.f32.xlu0 %v2444
        %v2446 = vpop.xlane.xlu0 %2445
        %v2447 = vsel %vm415, %v2391, -inf
        %2448 = vmax.xlane.f32.xlu0 %v2447
        %v2449 = vpop.xlane.xlu0 %2448
        %v2450 = vsel %vm415, %v2396, -inf
        %2451 = vmax.xlane.f32.xlu0 %v2450
        %v2452 = vpop.xlane.xlu0 %2451
        %v2453 = vsel %vm415, %v2399, -inf
        %2454 = vmax.xlane.f32.xlu0 %v2453
        %v2455 = vpop.xlane.xlu0 %2454
        %v2456 = vsel %vm415, %v2404, -inf
        %2457 = vmax.xlane.f32.xlu0 %v2456
        %v2458 = vpop.xlane.xlu0 %2457
        %v2459 = vsel %vm415, %v2407, -inf
        %2460 = vmax.xlane.f32.xlu0 %v2459
        %v2461 = vpop.xlane.xlu0 %2460
        %v2462 = vsel %vm415, %v2412, -inf
        %2463 = vmax.xlane.f32.xlu0 %v2462
        %v2464 = vpop.xlane.xlu0 %2463
        %v2465 = vsel %vm415, %v2415, -inf
        %2466 = vmax.xlane.f32.xlu0 %v2465
        %v2467 = vpop.xlane.xlu0 %2466
        %v2468 = vsel %vm415, %v2420, -inf
        %2469 = vmax.xlane.f32.xlu0 %v2468
        %v2470 = vpop.xlane.xlu0 %2469
        %v2471 = vsel %vm415, %v2423, -inf
        %2472 = vmax.xlane.f32.xlu0 %v2471
        %v2473 = vpop.xlane.xlu0 %2472
        %v2474 = vsub.f32 %v2364, %v2428
        %v2475 = vsub.f32 %v2367, %v2431
        %v2476 = vsub.f32 %v2372, %v2434
        %v2477 = vsub.f32 %v2375, %v2437
        %v2478 = vsub.f32 %v2380, %v2440
        %v2479 = vsub.f32 %v2383, %v2443
        %v2480 = vsub.f32 %v2388, %v2446
        %v2481 = vsub.f32 %v2391, %v2449
        %v2482 = vsub.f32 %v2396, %v2452
        %v2483 = vsub.f32 %v2399, %v2455
        %v2484 = vsub.f32 %v2404, %v2458
        %v2485 = vsub.f32 %v2407, %v2461
        %v2486 = vsub.f32 %v2412, %v2464
        %v2487 = vsub.f32 %v2415, %v2467
        %v2488 = vsub.f32 %v2420, %v2470
        %v2489 = vsub.f32 %v2423, %v2473
        %v2490 = vmul.f32 %v2474, 1.442695
        %v2491 = vpow.pop %v2490
        %v2492 = vmul.f32 %v2475, 1.442695
        %v2493 = vpow.pop %v2492
        %v2494 = vmul.f32 %v2476, 1.442695
        %v2495 = vpow.pop %v2494
        %v2496 = vmul.f32 %v2477, 1.442695
        %v2497 = vpow.pop %v2496
        %v2498 = vmul.f32 %v2478, 1.442695
        %v2499 = vpow.pop %v2498
        %v2500 = vmul.f32 %v2479, 1.442695
        %v2501 = vpow.pop %v2500
        %v2502 = vmul.f32 %v2480, 1.442695
        %v2503 = vpow.pop %v2502
        %v2504 = vmul.f32 %v2481, 1.442695
        %v2505 = vpow.pop %v2504
        %v2506 = vmul.f32 %v2482, 1.442695
        %v2507 = vpow.pop %v2506
        %v2508 = vmul.f32 %v2483, 1.442695
        %v2509 = vpow.pop %v2508
        %v2510 = vmul.f32 %v2484, 1.442695
        %v2511 = vpow.pop %v2510
        %v2512 = vmul.f32 %v2485, 1.442695
        %v2513 = vpow.pop %v2512
        %v2514 = vmul.f32 %v2486, 1.442695
        %v2515 = vpow.pop %v2514
        %v2516 = vmul.f32 %v2487, 1.442695
        %v2517 = vpow.pop %v2516
        %v2518 = vmul.f32 %v2488, 1.442695
        %v2519 = vpow.pop %v2518
        %v2520 = vmul.f32 %v2489, 1.442695
        %v2521 = vpow.pop %v2520
        %v2522 = vsel %vm415, %v2491, 0.0
        %2523 = vadd.xlane.f32.xlu0 %v2522
        %v2524 = vpop.xlane.xlu0 %2523
        %v2525 = vsel %vm415, %v2493, 0.0
        %2526 = vadd.xlane.f32.xlu0 %v2525
        %v2527 = vpop.xlane.xlu0 %2526
        %v2528 = vsel %vm415, %v2495, 0.0
        %2529 = vadd.xlane.f32.xlu0 %v2528
        %v2530 = vpop.xlane.xlu0 %2529
        %v2531 = vsel %vm415, %v2497, 0.0
        %2532 = vadd.xlane.f32.xlu0 %v2531
        %v2533 = vpop.xlane.xlu0 %2532
        %v2534 = vsel %vm415, %v2499, 0.0
        %2535 = vadd.xlane.f32.xlu0 %v2534
        %v2536 = vpop.xlane.xlu0 %2535
        %v2537 = vsel %vm415, %v2501, 0.0
        %2538 = vadd.xlane.f32.xlu0 %v2537
        %v2539 = vpop.xlane.xlu0 %2538
        %v2540 = vsel %vm415, %v2503, 0.0
        %2541 = vadd.xlane.f32.xlu0 %v2540
        %v2542 = vpop.xlane.xlu0 %2541
        %v2543 = vsel %vm415, %v2505, 0.0
        %2544 = vadd.xlane.f32.xlu0 %v2543
        %v2545 = vpop.xlane.xlu0 %2544
        %v2546 = vsel %vm415, %v2507, 0.0
        %2547 = vadd.xlane.f32.xlu0 %v2546
        %v2548 = vpop.xlane.xlu0 %2547
        %v2549 = vsel %vm415, %v2509, 0.0
        %2550 = vadd.xlane.f32.xlu0 %v2549
        %v2551 = vpop.xlane.xlu0 %2550
        %v2552 = vsel %vm415, %v2511, 0.0
        %2553 = vadd.xlane.f32.xlu0 %v2552
        %v2554 = vpop.xlane.xlu0 %2553
        %v2555 = vsel %vm415, %v2513, 0.0
        %2556 = vadd.xlane.f32.xlu0 %v2555
        %v2557 = vpop.xlane.xlu0 %2556
        %v2558 = vsel %vm415, %v2515, 0.0
        %2559 = vadd.xlane.f32.xlu0 %v2558
        %v2560 = vpop.xlane.xlu0 %2559
        %v2561 = vsel %vm415, %v2517, 0.0
        %2562 = vadd.xlane.f32.xlu0 %v2561
        %v2563 = vpop.xlane.xlu0 %2562
        %v2564 = vsel %vm415, %v2519, 0.0
        %2565 = vadd.xlane.f32.xlu0 %v2564
        %v2566 = vpop.xlane.xlu0 %2565
        %v2567 = vsel %vm415, %v2521, 0.0
        %2568 = vadd.xlane.f32.xlu0 %v2567
        %v2569 = vpop.xlane.xlu0 %2568
        %v2570 = vrcp.pop %v2524
        %v2571 = vrcp.pop %v2527
        %v2572 = vrcp.pop %v2530
        %v2573 = vrcp.pop %v2533
        %v2574 = vrcp.pop %v2536
        %v2575 = vrcp.pop %v2539
        %v2576 = vrcp.pop %v2542
        %v2577 = vrcp.pop %v2545
        %v2578 = vrcp.pop %v2548
        %v2579 = vrcp.pop %v2551
        %v2580 = vrcp.pop %v2554
        %v2581 = vrcp.pop %v2557
        %v2582 = vrcp.pop %v2560
        %v2583 = vrcp.pop %v2563
        %v2584 = vrcp.pop %v2566
        %v2585 = vrcp.pop %v2569
        %v2586 = vmul.f32 %v2491, %v2570
        %v2587 = vmul.f32 %v2493, %v2571
        %v2588 = vmul.f32 %v2495, %v2572
        %v2589 = vmul.f32 %v2497, %v2573
        %v2590 = vmul.f32 %v2499, %v2574
        %v2591 = vmul.f32 %v2501, %v2575
        %v2592 = vmul.f32 %v2503, %v2576
        %v2593 = vmul.f32 %v2505, %v2577
        %v2594 = vmul.f32 %v2507, %v2578
        %v2595 = vmul.f32 %v2509, %v2579
        %v2596 = vmul.f32 %v2511, %v2580
        %v2597 = vmul.f32 %v2513, %v2581
        %v2598 = vmul.f32 %v2515, %v2582
        %v2599 = vmul.f32 %v2517, %v2583
        %v2600 = vmul.f32 %v2519, %v2584
        %v2601 = vmul.f32 %v2521, %v2585
        %s2602 = sld [smem:[#allocation9 + $0x6]]
        %v2603 = vstv %s2602
        %v2604 = vmul.f32 %v2603, %v2586
        %v2605 = vmul.f32 %v2603, %v2587
        %v2606 = vmul.f32 %v2603, %v2588
        %v2607 = vmul.f32 %v2603, %v2589
        %v2608 = vmul.f32 %v2603, %v2590
        %v2609 = vmul.f32 %v2603, %v2591
        %v2610 = vmul.f32 %v2603, %v2592
        %v2611 = vmul.f32 %v2603, %v2593
        %v2612 = vmul.f32 %v2603, %v2594
        %v2613 = vmul.f32 %v2603, %v2595
        %v2614 = vmul.f32 %v2603, %v2596
        %v2615 = vmul.f32 %v2603, %v2597
        %v2616 = vmul.f32 %v2603, %v2598
        %v2617 = vmul.f32 %v2603, %v2599
        %v2618 = vmul.f32 %v2603, %v2600
        %v2619 = vmul.f32 %v2603, %v2601
        %v2620 = vadd.f32 %v2285, %v2604
        %v2621 = vadd.f32 %v2286, %v2605
        %v2622 = vadd.f32 %v2287, %v2606
        %v2623 = vadd.f32 %v2288, %v2607
        %v2624 = vadd.f32 %v2289, %v2608
        %v2625 = vadd.f32 %v2290, %v2609
        %v2626 = vadd.f32 %v2291, %v2610
        %v2627 = vadd.f32 %v2292, %v2611
        %v2628 = vadd.f32 %v2293, %v2612
        %v2629 = vadd.f32 %v2294, %v2613
        %v2630 = vadd.f32 %v2295, %v2614
        %v2631 = vadd.f32 %v2296, %v2615
        %v2632 = vadd.f32 %v2297, %v2616
        %v2633 = vadd.f32 %v2298, %v2617
        %v2634 = vadd.f32 %v2299, %v2618
        %v2635 = vadd.f32 %v2300, %v2619
        %v2636 = vld [vmem:[%s289 + $0x38] sm:$0xff]
        %v2637 = vld [vmem:[%s289 + $0x78] sm:$0xff]
        %v2638 = vld [vmem:[%s289 + $0xb8] sm:$0xff]
        %v2639 = vld [vmem:[%s289 + $0xf8] sm:$0xff]
        %v2640 = vld [vmem:[%s289 + $0x138] sm:$0xff]
        %v2641 = vld [vmem:[%s289 + $0x178] sm:$0xff]
        %v2642 = vld [vmem:[%s289 + $0x1b8] sm:$0xff]
        %v2643 = vld [vmem:[%s289 + $0x1f8] sm:$0xff]
        %v2644 = vld [vmem:[%s289 + $0x238] sm:$0xff]
        %v2645 = vld [vmem:[%s289 + $0x278] sm:$0xff]
        %v2646 = vld [vmem:[%s289 + $0x2b8] sm:$0xff]
        %v2647 = vld [vmem:[%s289 + $0x2f8] sm:$0xff]
        %v2648 = vld [vmem:[%s289 + $0x338] sm:$0xff]
        %v2649 = vld [vmem:[%s289 + $0x378] sm:$0xff]
        %v2650 = vld [vmem:[%s289 + $0x3b8] sm:$0xff]
        %v2651 = vld [vmem:[%s289 + $0x3f8] sm:$0xff]
        %v2652 = vpack.c.bf16 %v2637, %v2636
        %v2653 = vpack.c.bf16 %v2639, %v2638
        %v2654 = vpack.c.bf16 %v2641, %v2640
        %v2655 = vpack.c.bf16 %v2643, %v2642
        %v2656 = vpack.c.bf16 %v2645, %v2644
        %v2657 = vpack.c.bf16 %v2647, %v2646
        %v2658 = vpack.c.bf16 %v2649, %v2648
        %v2659 = vpack.c.bf16 %v2651, %v2650
        %v2660 = vlaneseq
        %v2661 = vshrl.u32 %v2660, 7
        %v2662 = vsub.s32 7, %v2661
        %v2663 = vrot.slane %v285, %v2662
        %2664 = vmatprep.subr.bf16.mxu0 0
        %2665 = vmatpush1.bf16.xpose.msra.mxu0 %v284
        %2666 = vmatprep.subr.bf16.mxu0 0
        %2667 = vmatpush1.bf16.xpose.msra.mxu0 0
        %2668 = vmatprep.subr.bf16.mxu0 0
        %2669 = vmatpush1.bf16.xpose.msra.mxu0 0
        %2670 = vmatprep.subr.bf16.mxu0 0
        %2671 = vmatpush1.bf16.xpose.msra.mxu0 0
        %2672 = vmatprep.subr.bf16.mxu0 0
        %2673 = vmatpush1.bf16.xpose.msra.mxu0 0
        %2674 = vmatprep.subr.bf16.mxu0 0
        %2675 = vmatpush1.bf16.xpose.msra.mxu0 0
        %2676 = vmatprep.subr.bf16.mxu0 0
        %2677 = vmatpush1.bf16.xpose.msra.mxu0 0
        %2678 = vmatprep.subr.bf16.mxu0 0
        %2679 = vmatpush1.bf16.xpose.msra.mxu0 0
        %2680 = vmatprep.subr.bf16.mxu0 0
        %2681 = vmatpush1.bf16.xpose.msra.mxu0 0
        %2682 = vmatprep.subr.bf16.mxu0 0
        %2683 = vmatpush1.bf16.xpose.msra.mxu0 0
        %2684 = vmatprep.subr.bf16.mxu0 0
        %2685 = vmatpush1.bf16.xpose.msra.mxu0 0
        %2686 = vmatprep.subr.bf16.mxu0 0
        %2687 = vmatpush1.bf16.xpose.msra.mxu0 0
        %2688 = vmatprep.subr.bf16.mxu0 0
        %2689 = vmatpush1.bf16.xpose.msra.mxu0 0
        %2690 = vmatprep.subr.bf16.mxu0 0
        %2691 = vmatpush1.bf16.xpose.msra.mxu0 0
        %2692 = vmatprep.subr.bf16.mxu0 0
        %2693 = vmatpush1.bf16.xpose.msra.mxu0 0
        %2694 = vmatprep.subr.bf16.mxu0 0
        %2695 = vmatpush1.bf16.xpose.msra.mxu0 0
        %2696 = vmatprep.mubr.bf16.mxu0 0
        %2697 = vmatmul.mubr.bf16.gmra.mrb[0].mxu0 %v2652
        %v2698 = vpop.f32.mrb[0].mxu0
        %v2699 = vadd.f32 %v2663, %v2698
        %v2700 = vpop.f32.mrb[0].mxu0
        %v2701 = vpop.f32.mrb[0].mxu0
        %v2702 = vadd.f32 %v2663, %v2701
        %v2703 = vpop.f32.mrb[0].mxu0
        %2704 = vmatprep.mubr.bf16.mxu0 0
        %2705 = vmatmul.mubr.bf16.gmra.mrb[0].mxu0 %v2653
        %v2706 = vpop.f32.mrb[0].mxu0
        %v2707 = vadd.f32 %v2663, %v2706
        %v2708 = vpop.f32.mrb[0].mxu0
        %v2709 = vpop.f32.mrb[0].mxu0
        %v2710 = vadd.f32 %v2663, %v2709
        %v2711 = vpop.f32.mrb[0].mxu0
        %2712 = vmatprep.mubr.bf16.mxu0 0
        %2713 = vmatmul.mubr.bf16.gmra.mrb[0].mxu0 %v2654
        %v2714 = vpop.f32.mrb[0].mxu0
        %v2715 = vadd.f32 %v2663, %v2714
        %v2716 = vpop.f32.mrb[0].mxu0
        %v2717 = vpop.f32.mrb[0].mxu0
        %v2718 = vadd.f32 %v2663, %v2717
        %v2719 = vpop.f32.mrb[0].mxu0
        %2720 = vmatprep.mubr.bf16.mxu0 0
        %2721 = vmatmul.mubr.bf16.gmra.mrb[0].mxu0 %v2655
        %v2722 = vpop.f32.mrb[0].mxu0
        %v2723 = vadd.f32 %v2663, %v2722
        %v2724 = vpop.f32.mrb[0].mxu0
        %v2725 = vpop.f32.mrb[0].mxu0
        %v2726 = vadd.f32 %v2663, %v2725
        %v2727 = vpop.f32.mrb[0].mxu0
        %2728 = vmatprep.mubr.bf16.mxu0 0
        %2729 = vmatmul.mubr.bf16.gmra.mrb[0].mxu0 %v2656
        %v2730 = vpop.f32.mrb[0].mxu0
        %v2731 = vadd.f32 %v2663, %v2730
        %v2732 = vpop.f32.mrb[0].mxu0
        %v2733 = vpop.f32.mrb[0].mxu0
        %v2734 = vadd.f32 %v2663, %v2733
        %v2735 = vpop.f32.mrb[0].mxu0
        %2736 = vmatprep.mubr.bf16.mxu0 0
        %2737 = vmatmul.mubr.bf16.gmra.mrb[0].mxu0 %v2657
        %v2738 = vpop.f32.mrb[0].mxu0
        %v2739 = vadd.f32 %v2663, %v2738
        %v2740 = vpop.f32.mrb[0].mxu0
        %v2741 = vpop.f32.mrb[0].mxu0
        %v2742 = vadd.f32 %v2663, %v2741
        %v2743 = vpop.f32.mrb[0].mxu0
        %2744 = vmatprep.mubr.bf16.mxu0 0
        %2745 = vmatmul.mubr.bf16.gmra.mrb[0].mxu0 %v2658
        %v2746 = vpop.f32.mrb[0].mxu0
        %v2747 = vadd.f32 %v2663, %v2746
        %v2748 = vpop.f32.mrb[0].mxu0
        %v2749 = vpop.f32.mrb[0].mxu0
        %v2750 = vadd.f32 %v2663, %v2749
        %v2751 = vpop.f32.mrb[0].mxu0
        %2752 = vmatprep.mubr.bf16.mxu0 0
        %2753 = vmatmul.mubr.bf16.gmra.mrb[0].mxu0 %v2659
        %v2754 = vpop.f32.mrb[0].mxu0
        %v2755 = vadd.f32 %v2663, %v2754
        %v2756 = vpop.f32.mrb[0].mxu0
        %v2757 = vpop.f32.mrb[0].mxu0
        %v2758 = vadd.f32 %v2663, %v2757
        %v2759 = vpop.f32.mrb[0].mxu0
        %2760 = vdwg.mxu0
        %v2761 = vsel %vm415, %v2699, -inf
        %2762 = vmax.xlane.f32.xlu0 %v2761
        %v2763 = vpop.xlane.xlu0 %2762
        %v2764 = vsel %vm415, %v2702, -inf
        %2765 = vmax.xlane.f32.xlu0 %v2764
        %v2766 = vpop.xlane.xlu0 %2765
        %v2767 = vsel %vm415, %v2707, -inf
        %2768 = vmax.xlane.f32.xlu0 %v2767
        %v2769 = vpop.xlane.xlu0 %2768
        %v2770 = vsel %vm415, %v2710, -inf
        %2771 = vmax.xlane.f32.xlu0 %v2770
        %v2772 = vpop.xlane.xlu0 %2771
        %v2773 = vsel %vm415, %v2715, -inf
        %2774 = vmax.xlane.f32.xlu0 %v2773
        %v2775 = vpop.xlane.xlu0 %2774
        %v2776 = vsel %vm415, %v2718, -inf
        %2777 = vmax.xlane.f32.xlu0 %v2776
        %v2778 = vpop.xlane.xlu0 %2777
        %v2779 = vsel %vm415, %v2723, -inf
        %2780 = vmax.xlane.f32.xlu0 %v2779
        %v2781 = vpop.xlane.xlu0 %2780
        %v2782 = vsel %vm415, %v2726, -inf
        %2783 = vmax.xlane.f32.xlu0 %v2782
        %v2784 = vpop.xlane.xlu0 %2783
        %v2785 = vsel %vm415, %v2731, -inf
        %2786 = vmax.xlane.f32.xlu0 %v2785
        %v2787 = vpop.xlane.xlu0 %2786
        %v2788 = vsel %vm415, %v2734, -inf
        %2789 = vmax.xlane.f32.xlu0 %v2788
        %v2790 = vpop.xlane.xlu0 %2789
        %v2791 = vsel %vm415, %v2739, -inf
        %2792 = vmax.xlane.f32.xlu0 %v2791
        %v2793 = vpop.xlane.xlu0 %2792
        %v2794 = vsel %vm415, %v2742, -inf
        %2795 = vmax.xlane.f32.xlu0 %v2794
        %v2796 = vpop.xlane.xlu0 %2795
        %v2797 = vsel %vm415, %v2747, -inf
        %2798 = vmax.xlane.f32.xlu0 %v2797
        %v2799 = vpop.xlane.xlu0 %2798
        %v2800 = vsel %vm415, %v2750, -inf
        %2801 = vmax.xlane.f32.xlu0 %v2800
        %v2802 = vpop.xlane.xlu0 %2801
        %v2803 = vsel %vm415, %v2755, -inf
        %2804 = vmax.xlane.f32.xlu0 %v2803
        %v2805 = vpop.xlane.xlu0 %2804
        %v2806 = vsel %vm415, %v2758, -inf
        %2807 = vmax.xlane.f32.xlu0 %v2806
        %v2808 = vpop.xlane.xlu0 %2807
        %v2809 = vsub.f32 %v2699, %v2763
        %v2810 = vsub.f32 %v2702, %v2766
        %v2811 = vsub.f32 %v2707, %v2769
        %v2812 = vsub.f32 %v2710, %v2772
        %v2813 = vsub.f32 %v2715, %v2775
        %v2814 = vsub.f32 %v2718, %v2778
        %v2815 = vsub.f32 %v2723, %v2781
        %v2816 = vsub.f32 %v2726, %v2784
        %v2817 = vsub.f32 %v2731, %v2787
        %v2818 = vsub.f32 %v2734, %v2790
        %v2819 = vsub.f32 %v2739, %v2793
        %v2820 = vsub.f32 %v2742, %v2796
        %v2821 = vsub.f32 %v2747, %v2799
        %v2822 = vsub.f32 %v2750, %v2802
        %v2823 = vsub.f32 %v2755, %v2805
        %v2824 = vsub.f32 %v2758, %v2808
        %v2825 = vmul.f32 %v2809, 1.442695
        %v2826 = vpow.pop %v2825
        %v2827 = vmul.f32 %v2810, 1.442695
        %v2828 = vpow.pop %v2827
        %v2829 = vmul.f32 %v2811, 1.442695
        %v2830 = vpow.pop %v2829
        %v2831 = vmul.f32 %v2812, 1.442695
        %v2832 = vpow.pop %v2831
        %v2833 = vmul.f32 %v2813, 1.442695
        %v2834 = vpow.pop %v2833
        %v2835 = vmul.f32 %v2814, 1.442695
        %v2836 = vpow.pop %v2835
        %v2837 = vmul.f32 %v2815, 1.442695
        %v2838 = vpow.pop %v2837
        %v2839 = vmul.f32 %v2816, 1.442695
        %v2840 = vpow.pop %v2839
        %v2841 = vmul.f32 %v2817, 1.442695
        %v2842 = vpow.pop %v2841
        %v2843 = vmul.f32 %v2818, 1.442695
        %v2844 = vpow.pop %v2843
        %v2845 = vmul.f32 %v2819, 1.442695
        %v2846 = vpow.pop %v2845
        %v2847 = vmul.f32 %v2820, 1.442695
        %v2848 = vpow.pop %v2847
        %v2849 = vmul.f32 %v2821, 1.442695
        %v2850 = vpow.pop %v2849
        %v2851 = vmul.f32 %v2822, 1.442695
        %v2852 = vpow.pop %v2851
        %v2853 = vmul.f32 %v2823, 1.442695
        %v2854 = vpow.pop %v2853
        %v2855 = vmul.f32 %v2824, 1.442695
        %v2856 = vpow.pop %v2855
        %v2857 = vsel %vm415, %v2826, 0.0
        %2858 = vadd.xlane.f32.xlu0 %v2857
        %v2859 = vpop.xlane.xlu0 %2858
        %v2860 = vsel %vm415, %v2828, 0.0
        %2861 = vadd.xlane.f32.xlu0 %v2860
        %v2862 = vpop.xlane.xlu0 %2861
        %v2863 = vsel %vm415, %v2830, 0.0
        %2864 = vadd.xlane.f32.xlu0 %v2863
        %v2865 = vpop.xlane.xlu0 %2864
        %v2866 = vsel %vm415, %v2832, 0.0
        %2867 = vadd.xlane.f32.xlu0 %v2866
        %v2868 = vpop.xlane.xlu0 %2867
        %v2869 = vsel %vm415, %v2834, 0.0
        %2870 = vadd.xlane.f32.xlu0 %v2869
        %v2871 = vpop.xlane.xlu0 %2870
        %v2872 = vsel %vm415, %v2836, 0.0
        %2873 = vadd.xlane.f32.xlu0 %v2872
        %v2874 = vpop.xlane.xlu0 %2873
        %v2875 = vsel %vm415, %v2838, 0.0
        %2876 = vadd.xlane.f32.xlu0 %v2875
        %v2877 = vpop.xlane.xlu0 %2876
        %v2878 = vsel %vm415, %v2840, 0.0
        %2879 = vadd.xlane.f32.xlu0 %v2878
        %v2880 = vpop.xlane.xlu0 %2879
        %v2881 = vsel %vm415, %v2842, 0.0
        %2882 = vadd.xlane.f32.xlu0 %v2881
        %v2883 = vpop.xlane.xlu0 %2882
        %v2884 = vsel %vm415, %v2844, 0.0
        %2885 = vadd.xlane.f32.xlu0 %v2884
        %v2886 = vpop.xlane.xlu0 %2885
        %v2887 = vsel %vm415, %v2846, 0.0
        %2888 = vadd.xlane.f32.xlu0 %v2887
        %v2889 = vpop.xlane.xlu0 %2888
        %v2890 = vsel %vm415, %v2848, 0.0
        %2891 = vadd.xlane.f32.xlu0 %v2890
        %v2892 = vpop.xlane.xlu0 %2891
        %v2893 = vsel %vm415, %v2850, 0.0
        %2894 = vadd.xlane.f32.xlu0 %v2893
        %v2895 = vpop.xlane.xlu0 %2894
        %v2896 = vsel %vm415, %v2852, 0.0
        %2897 = vadd.xlane.f32.xlu0 %v2896
        %v2898 = vpop.xlane.xlu0 %2897
        %v2899 = vsel %vm415, %v2854, 0.0
        %2900 = vadd.xlane.f32.xlu0 %v2899
        %v2901 = vpop.xlane.xlu0 %2900
        %v2902 = vsel %vm415, %v2856, 0.0
        %2903 = vadd.xlane.f32.xlu0 %v2902
        %v2904 = vpop.xlane.xlu0 %2903
        %v2905 = vrcp.pop %v2859
        %v2906 = vrcp.pop %v2862
        %v2907 = vrcp.pop %v2865
        %v2908 = vrcp.pop %v2868
        %v2909 = vrcp.pop %v2871
        %v2910 = vrcp.pop %v2874
        %v2911 = vrcp.pop %v2877
        %v2912 = vrcp.pop %v2880
        %v2913 = vrcp.pop %v2883
        %v2914 = vrcp.pop %v2886
        %v2915 = vrcp.pop %v2889
        %v2916 = vrcp.pop %v2892
        %v2917 = vrcp.pop %v2895
        %v2918 = vrcp.pop %v2898
        %v2919 = vrcp.pop %v2901
        %v2920 = vrcp.pop %v2904
        %v2921 = vmul.f32 %v2826, %v2905
        %v2922 = vmul.f32 %v2828, %v2906
        %v2923 = vmul.f32 %v2830, %v2907
        %v2924 = vmul.f32 %v2832, %v2908
        %v2925 = vmul.f32 %v2834, %v2909
        %v2926 = vmul.f32 %v2836, %v2910
        %v2927 = vmul.f32 %v2838, %v2911
        %v2928 = vmul.f32 %v2840, %v2912
        %v2929 = vmul.f32 %v2842, %v2913
        %v2930 = vmul.f32 %v2844, %v2914
        %v2931 = vmul.f32 %v2846, %v2915
        %v2932 = vmul.f32 %v2848, %v2916
        %v2933 = vmul.f32 %v2850, %v2917
        %v2934 = vmul.f32 %v2852, %v2918
        %v2935 = vmul.f32 %v2854, %v2919
        %v2936 = vmul.f32 %v2856, %v2920
        %s2937 = sld [smem:[#allocation9 + $0x7]]
        %v2938 = vstv %s2937
        %v2939 = vmul.f32 %v2938, %v2921
        %v2940 = vmul.f32 %v2938, %v2922
        %v2941 = vmul.f32 %v2938, %v2923
        %v2942 = vmul.f32 %v2938, %v2924
        %v2943 = vmul.f32 %v2938, %v2925
        %v2944 = vmul.f32 %v2938, %v2926
        %v2945 = vmul.f32 %v2938, %v2927
        %v2946 = vmul.f32 %v2938, %v2928
        %v2947 = vmul.f32 %v2938, %v2929
        %v2948 = vmul.f32 %v2938, %v2930
        %v2949 = vmul.f32 %v2938, %v2931
        %v2950 = vmul.f32 %v2938, %v2932
        %v2951 = vmul.f32 %v2938, %v2933
        %v2952 = vmul.f32 %v2938, %v2934
        %v2953 = vmul.f32 %v2938, %v2935
        %v2954 = vmul.f32 %v2938, %v2936
        %v2955 = vadd.f32 %v2620, %v2939
        %v2956 = vadd.f32 %v2621, %v2940
        %v2957 = vadd.f32 %v2622, %v2941
        %v2958 = vadd.f32 %v2623, %v2942
        %v2959 = vadd.f32 %v2624, %v2943
        %v2960 = vadd.f32 %v2625, %v2944
        %v2961 = vadd.f32 %v2626, %v2945
        %v2962 = vadd.f32 %v2627, %v2946
        %v2963 = vadd.f32 %v2628, %v2947
        %v2964 = vadd.f32 %v2629, %v2948
        %v2965 = vadd.f32 %v2630, %v2949
        %v2966 = vadd.f32 %v2631, %v2950
        %v2967 = vadd.f32 %v2632, %v2951
        %v2968 = vadd.f32 %v2633, %v2952
        %v2969 = vadd.f32 %v2634, %v2953
        %v2970 = vadd.f32 %v2635, %v2954
        %2972 = vset.pattern.permute.xlu0 0
        %2973 = vperm.xlu0 %2972, %v2955
        %v2974 = vpop.permute.xlu0 %2973
        %2977 = vset.pattern.permute.xlu0 0
        %2978 = vperm.xlu0 %2977, %v2956
        %v2979 = vpop.permute.xlu0 %2978
        %2982 = vset.pattern.permute.xlu0 0
        %2983 = vperm.xlu0 %2982, %v2957
        %v2984 = vpop.permute.xlu0 %2983
        %2987 = vset.pattern.permute.xlu0 0
        %2988 = vperm.xlu0 %2987, %v2958
        %v2989 = vpop.permute.xlu0 %2988
        %2992 = vset.pattern.permute.xlu0 0
        %2993 = vperm.xlu0 %2992, %v2959
        %v2994 = vpop.permute.xlu0 %2993
        %2997 = vset.pattern.permute.xlu0 0
        %2998 = vperm.xlu0 %2997, %v2960
        %v2999 = vpop.permute.xlu0 %2998
        %3002 = vset.pattern.permute.xlu0 0
        %3003 = vperm.xlu0 %3002, %v2961
        %v3004 = vpop.permute.xlu0 %3003
        %3007 = vset.pattern.permute.xlu0 0
        %3008 = vperm.xlu0 %3007, %v2962
        %v3009 = vpop.permute.xlu0 %3008
        %3012 = vset.pattern.permute.xlu0 0
        %3013 = vperm.xlu0 %3012, %v2963
        %v3014 = vpop.permute.xlu0 %3013
        %3017 = vset.pattern.permute.xlu0 0
        %3018 = vperm.xlu0 %3017, %v2964
        %v3019 = vpop.permute.xlu0 %3018
        %3022 = vset.pattern.permute.xlu0 0
        %3023 = vperm.xlu0 %3022, %v2965
        %v3024 = vpop.permute.xlu0 %3023
        %3027 = vset.pattern.permute.xlu0 0
        %3028 = vperm.xlu0 %3027, %v2966
        %v3029 = vpop.permute.xlu0 %3028
        %3032 = vset.pattern.permute.xlu0 0
        %3033 = vperm.xlu0 %3032, %v2967
        %v3034 = vpop.permute.xlu0 %3033
        %3037 = vset.pattern.permute.xlu0 0
        %3038 = vperm.xlu0 %3037, %v2968
        %v3039 = vpop.permute.xlu0 %3038
        %3042 = vset.pattern.permute.xlu0 0
        %3043 = vperm.xlu0 %3042, %v2969
        %v3044 = vpop.permute.xlu0 %3043
        %3047 = vset.pattern.permute.xlu0 0
        %3048 = vperm.xlu0 %3047, %v2970
        %v3049 = vpop.permute.xlu0 %3048
        %v3051 = vmul.f32 %v2974, %v290
        %v3052 = vmul.f32 %v2979, %v291
        %v3053 = vmul.f32 %v2984, %v292
        %v3054 = vmul.f32 %v2989, %v293
        %v3055 = vmul.f32 %v2994, %v294
        %v3056 = vmul.f32 %v2999, %v295
        %v3057 = vmul.f32 %v3004, %v296
        %v3058 = vmul.f32 %v3009, %v297
        %v3059 = vmul.f32 %v3014, %v298
        %v3060 = vmul.f32 %v3019, %v299
        %v3061 = vmul.f32 %v3024, %v300
        %v3062 = vmul.f32 %v3029, %v301
        %v3063 = vmul.f32 %v3034, %v302
        %v3064 = vmul.f32 %v3039, %v303
        %v3065 = vmul.f32 %v3044, %v304
        %v3066 = vmul.f32 %v3049, %v305
        %v3067 = vadd.f32 %v3051, 0.0
        %v3068 = vadd.f32 %v3052, 0.0
        %v3069 = vadd.f32 %v3053, 0.0
        %v3070 = vadd.f32 %v3054, 0.0
        %v3071 = vadd.f32 %v3055, 0.0
        %v3072 = vadd.f32 %v3056, 0.0
        %v3073 = vadd.f32 %v3057, 0.0
        %v3074 = vadd.f32 %v3058, 0.0
        %v3075 = vadd.f32 %v3059, 0.0
        %v3076 = vadd.f32 %v3060, 0.0
        %v3077 = vadd.f32 %v3061, 0.0
        %v3078 = vadd.f32 %v3062, 0.0
        %v3079 = vadd.f32 %v3063, 0.0
        %v3080 = vadd.f32 %v3064, 0.0
        %v3081 = vadd.f32 %v3065, 0.0
        %v3082 = vadd.f32 %v3066, 0.0
        %3083 = vset.pattern.permute.xlu0 1
        %3084 = vperm.xlu0 %3083, %v2955
        %v3085 = vpop.permute.xlu0 %3084
        %3087 = vset.pattern.permute.xlu0 1
        %3088 = vperm.xlu0 %3087, %v2956
        %v3089 = vpop.permute.xlu0 %3088
        %3091 = vset.pattern.permute.xlu0 1
        %3092 = vperm.xlu0 %3091, %v2957
        %v3093 = vpop.permute.xlu0 %3092
        %3095 = vset.pattern.permute.xlu0 1
        %3096 = vperm.xlu0 %3095, %v2958
        %v3097 = vpop.permute.xlu0 %3096
        %3099 = vset.pattern.permute.xlu0 1
        %3100 = vperm.xlu0 %3099, %v2959
        %v3101 = vpop.permute.xlu0 %3100
        %3103 = vset.pattern.permute.xlu0 1
        %3104 = vperm.xlu0 %3103, %v2960
        %v3105 = vpop.permute.xlu0 %3104
        %3107 = vset.pattern.permute.xlu0 1
        %3108 = vperm.xlu0 %3107, %v2961
        %v3109 = vpop.permute.xlu0 %3108
        %3111 = vset.pattern.permute.xlu0 1
        %3112 = vperm.xlu0 %3111, %v2962
        %v3113 = vpop.permute.xlu0 %3112
        %3115 = vset.pattern.permute.xlu0 1
        %3116 = vperm.xlu0 %3115, %v2963
        %v3117 = vpop.permute.xlu0 %3116
        %3119 = vset.pattern.permute.xlu0 1
        %3120 = vperm.xlu0 %3119, %v2964
        %v3121 = vpop.permute.xlu0 %3120
        %3123 = vset.pattern.permute.xlu0 1
        %3124 = vperm.xlu0 %3123, %v2965
        %v3125 = vpop.permute.xlu0 %3124
        %3127 = vset.pattern.permute.xlu0 1
        %3128 = vperm.xlu0 %3127, %v2966
        %v3129 = vpop.permute.xlu0 %3128
        %3131 = vset.pattern.permute.xlu0 1
        %3132 = vperm.xlu0 %3131, %v2967
        %v3133 = vpop.permute.xlu0 %3132
        %3135 = vset.pattern.permute.xlu0 1
        %3136 = vperm.xlu0 %3135, %v2968
        %v3137 = vpop.permute.xlu0 %3136
        %3139 = vset.pattern.permute.xlu0 1
        %3140 = vperm.xlu0 %3139, %v2969
        %v3141 = vpop.permute.xlu0 %3140
        %3143 = vset.pattern.permute.xlu0 1
        %3144 = vperm.xlu0 %3143, %v2970
        %v3145 = vpop.permute.xlu0 %3144
        %v3147 = vmul.f32 %v3085, %v626
        %v3148 = vmul.f32 %v3089, %v627
        %v3149 = vmul.f32 %v3093, %v628
        %v3150 = vmul.f32 %v3097, %v629
        %v3151 = vmul.f32 %v3101, %v630
        %v3152 = vmul.f32 %v3105, %v631
        %v3153 = vmul.f32 %v3109, %v632
        %v3154 = vmul.f32 %v3113, %v633
        %v3155 = vmul.f32 %v3117, %v634
        %v3156 = vmul.f32 %v3121, %v635
        %v3157 = vmul.f32 %v3125, %v636
        %v3158 = vmul.f32 %v3129, %v637
        %v3159 = vmul.f32 %v3133, %v638
        %v3160 = vmul.f32 %v3137, %v639
        %v3161 = vmul.f32 %v3141, %v640
        %v3162 = vmul.f32 %v3145, %v641
        %v3163 = vadd.f32 %v3067, %v3147
        %v3164 = vadd.f32 %v3068, %v3148
        %v3165 = vadd.f32 %v3069, %v3149
        %v3166 = vadd.f32 %v3070, %v3150
        %v3167 = vadd.f32 %v3071, %v3151
        %v3168 = vadd.f32 %v3072, %v3152
        %v3169 = vadd.f32 %v3073, %v3153
        %v3170 = vadd.f32 %v3074, %v3154
        %v3171 = vadd.f32 %v3075, %v3155
        %v3172 = vadd.f32 %v3076, %v3156
        %v3173 = vadd.f32 %v3077, %v3157
        %v3174 = vadd.f32 %v3078, %v3158
        %v3175 = vadd.f32 %v3079, %v3159
        %v3176 = vadd.f32 %v3080, %v3160
        %v3177 = vadd.f32 %v3081, %v3161
        %v3178 = vadd.f32 %v3082, %v3162
        %3179 = vset.pattern.permute.xlu0 2
        %3180 = vperm.xlu0 %3179, %v2955
        %v3181 = vpop.permute.xlu0 %3180
        %3183 = vset.pattern.permute.xlu0 2
        %3184 = vperm.xlu0 %3183, %v2956
        %v3185 = vpop.permute.xlu0 %3184
        %3187 = vset.pattern.permute.xlu0 2
        %3188 = vperm.xlu0 %3187, %v2957
        %v3189 = vpop.permute.xlu0 %3188
        %3191 = vset.pattern.permute.xlu0 2
        %3192 = vperm.xlu0 %3191, %v2958
        %v3193 = vpop.permute.xlu0 %3192
        %3195 = vset.pattern.permute.xlu0 2
        %3196 = vperm.xlu0 %3195, %v2959
        %v3197 = vpop.permute.xlu0 %3196
        %3199 = vset.pattern.permute.xlu0 2
        %3200 = vperm.xlu0 %3199, %v2960
        %v3201 = vpop.permute.xlu0 %3200
        %3203 = vset.pattern.permute.xlu0 2
        %3204 = vperm.xlu0 %3203, %v2961
        %v3205 = vpop.permute.xlu0 %3204
        %3207 = vset.pattern.permute.xlu0 2
        %3208 = vperm.xlu0 %3207, %v2962
        %v3209 = vpop.permute.xlu0 %3208
        %3211 = vset.pattern.permute.xlu0 2
        %3212 = vperm.xlu0 %3211, %v2963
        %v3213 = vpop.permute.xlu0 %3212
        %3215 = vset.pattern.permute.xlu0 2
        %3216 = vperm.xlu0 %3215, %v2964
        %v3217 = vpop.permute.xlu0 %3216
        %3219 = vset.pattern.permute.xlu0 2
        %3220 = vperm.xlu0 %3219, %v2965
        %v3221 = vpop.permute.xlu0 %3220
        %3223 = vset.pattern.permute.xlu0 2
        %3224 = vperm.xlu0 %3223, %v2966
        %v3225 = vpop.permute.xlu0 %3224
        %3227 = vset.pattern.permute.xlu0 2
        %3228 = vperm.xlu0 %3227, %v2967
        %v3229 = vpop.permute.xlu0 %3228
        %3231 = vset.pattern.permute.xlu0 2
        %3232 = vperm.xlu0 %3231, %v2968
        %v3233 = vpop.permute.xlu0 %3232
        %3235 = vset.pattern.permute.xlu0 2
        %3236 = vperm.xlu0 %3235, %v2969
        %v3237 = vpop.permute.xlu0 %3236
        %3239 = vset.pattern.permute.xlu0 2
        %3240 = vperm.xlu0 %3239, %v2970
        %v3241 = vpop.permute.xlu0 %3240
        %v3243 = vmul.f32 %v3181, %v961
        %v3244 = vmul.f32 %v3185, %v962
        %v3245 = vmul.f32 %v3189, %v963
        %v3246 = vmul.f32 %v3193, %v964
        %v3247 = vmul.f32 %v3197, %v965
        %v3248 = vmul.f32 %v3201, %v966
        %v3249 = vmul.f32 %v3205, %v967
        %v3250 = vmul.f32 %v3209, %v968
        %v3251 = vmul.f32 %v3213, %v969
        %v3252 = vmul.f32 %v3217, %v970
        %v3253 = vmul.f32 %v3221, %v971
        %v3254 = vmul.f32 %v3225, %v972
        %v3255 = vmul.f32 %v3229, %v973
        %v3256 = vmul.f32 %v3233, %v974
        %v3257 = vmul.f32 %v3237, %v975
        %v3258 = vmul.f32 %v3241, %v976
        %v3259 = vadd.f32 %v3163, %v3243
        %v3260 = vadd.f32 %v3164, %v3244
        %v3261 = vadd.f32 %v3165, %v3245
        %v3262 = vadd.f32 %v3166, %v3246
        %v3263 = vadd.f32 %v3167, %v3247
        %v3264 = vadd.f32 %v3168, %v3248
        %v3265 = vadd.f32 %v3169, %v3249
        %v3266 = vadd.f32 %v3170, %v3250
        %v3267 = vadd.f32 %v3171, %v3251
        %v3268 = vadd.f32 %v3172, %v3252
        %v3269 = vadd.f32 %v3173, %v3253
        %v3270 = vadd.f32 %v3174, %v3254
        %v3271 = vadd.f32 %v3175, %v3255
        %v3272 = vadd.f32 %v3176, %v3256
        %v3273 = vadd.f32 %v3177, %v3257
        %v3274 = vadd.f32 %v3178, %v3258
        %3275 = vset.pattern.permute.xlu0 3
        %3276 = vperm.xlu0 %3275, %v2955
        %v3277 = vpop.permute.xlu0 %3276
        %3279 = vset.pattern.permute.xlu0 3
        %3280 = vperm.xlu0 %3279, %v2956
        %v3281 = vpop.permute.xlu0 %3280
        %3283 = vset.pattern.permute.xlu0 3
        %3284 = vperm.xlu0 %3283, %v2957
        %v3285 = vpop.permute.xlu0 %3284
        %3287 = vset.pattern.permute.xlu0 3
        %3288 = vperm.xlu0 %3287, %v2958
        %v3289 = vpop.permute.xlu0 %3288
        %3291 = vset.pattern.permute.xlu0 3
        %3292 = vperm.xlu0 %3291, %v2959
        %v3293 = vpop.permute.xlu0 %3292
        %3295 = vset.pattern.permute.xlu0 3
        %3296 = vperm.xlu0 %3295, %v2960
        %v3297 = vpop.permute.xlu0 %3296
        %3299 = vset.pattern.permute.xlu0 3
        %3300 = vperm.xlu0 %3299, %v2961
        %v3301 = vpop.permute.xlu0 %3300
        %3303 = vset.pattern.permute.xlu0 3
        %3304 = vperm.xlu0 %3303, %v2962
        %v3305 = vpop.permute.xlu0 %3304
        %3307 = vset.pattern.permute.xlu0 3
        %3308 = vperm.xlu0 %3307, %v2963
        %v3309 = vpop.permute.xlu0 %3308
        %3311 = vset.pattern.permute.xlu0 3
        %3312 = vperm.xlu0 %3311, %v2964
        %v3313 = vpop.permute.xlu0 %3312
        %3315 = vset.pattern.permute.xlu0 3
        %3316 = vperm.xlu0 %3315, %v2965
        %v3317 = vpop.permute.xlu0 %3316
        %3319 = vset.pattern.permute.xlu0 3
        %3320 = vperm.xlu0 %3319, %v2966
        %v3321 = vpop.permute.xlu0 %3320
        %3323 = vset.pattern.permute.xlu0 3
        %3324 = vperm.xlu0 %3323, %v2967
        %v3325 = vpop.permute.xlu0 %3324
        %3327 = vset.pattern.permute.xlu0 3
        %3328 = vperm.xlu0 %3327, %v2968
        %v3329 = vpop.permute.xlu0 %3328
        %3331 = vset.pattern.permute.xlu0 3
        %3332 = vperm.xlu0 %3331, %v2969
        %v3333 = vpop.permute.xlu0 %3332
        %3335 = vset.pattern.permute.xlu0 3
        %3336 = vperm.xlu0 %3335, %v2970
        %v3337 = vpop.permute.xlu0 %3336
        %v3339 = vmul.f32 %v3277, %v1296
        %v3340 = vmul.f32 %v3281, %v1297
        %v3341 = vmul.f32 %v3285, %v1298
        %v3342 = vmul.f32 %v3289, %v1299
        %v3343 = vmul.f32 %v3293, %v1300
        %v3344 = vmul.f32 %v3297, %v1301
        %v3345 = vmul.f32 %v3301, %v1302
        %v3346 = vmul.f32 %v3305, %v1303
        %v3347 = vmul.f32 %v3309, %v1304
        %v3348 = vmul.f32 %v3313, %v1305
        %v3349 = vmul.f32 %v3317, %v1306
        %v3350 = vmul.f32 %v3321, %v1307
        %v3351 = vmul.f32 %v3325, %v1308
        %v3352 = vmul.f32 %v3329, %v1309
        %v3353 = vmul.f32 %v3333, %v1310
        %v3354 = vmul.f32 %v3337, %v1311
        %v3355 = vadd.f32 %v3259, %v3339
        %v3356 = vadd.f32 %v3260, %v3340
        %v3357 = vadd.f32 %v3261, %v3341
        %v3358 = vadd.f32 %v3262, %v3342
        %v3359 = vadd.f32 %v3263, %v3343
        %v3360 = vadd.f32 %v3264, %v3344
        %v3361 = vadd.f32 %v3265, %v3345
        %v3362 = vadd.f32 %v3266, %v3346
        %v3363 = vadd.f32 %v3267, %v3347
        %v3364 = vadd.f32 %v3268, %v3348
        %v3365 = vadd.f32 %v3269, %v3349
        %v3366 = vadd.f32 %v3270, %v3350
        %v3367 = vadd.f32 %v3271, %v3351
        %v3368 = vadd.f32 %v3272, %v3352
        %v3369 = vadd.f32 %v3273, %v3353
        %v3370 = vadd.f32 %v3274, %v3354
        %3371 = vset.pattern.permute.xlu0 4
        %3372 = vperm.xlu0 %3371, %v2955
        %v3373 = vpop.permute.xlu0 %3372
        %3375 = vset.pattern.permute.xlu0 4
        %3376 = vperm.xlu0 %3375, %v2956
        %v3377 = vpop.permute.xlu0 %3376
        %3379 = vset.pattern.permute.xlu0 4
        %3380 = vperm.xlu0 %3379, %v2957
        %v3381 = vpop.permute.xlu0 %3380
        %3383 = vset.pattern.permute.xlu0 4
        %3384 = vperm.xlu0 %3383, %v2958
        %v3385 = vpop.permute.xlu0 %3384
        %3387 = vset.pattern.permute.xlu0 4
        %3388 = vperm.xlu0 %3387, %v2959
        %v3389 = vpop.permute.xlu0 %3388
        %3391 = vset.pattern.permute.xlu0 4
        %3392 = vperm.xlu0 %3391, %v2960
        %v3393 = vpop.permute.xlu0 %3392
        %3395 = vset.pattern.permute.xlu0 4
        %3396 = vperm.xlu0 %3395, %v2961
        %v3397 = vpop.permute.xlu0 %3396
        %3399 = vset.pattern.permute.xlu0 4
        %3400 = vperm.xlu0 %3399, %v2962
        %v3401 = vpop.permute.xlu0 %3400
        %3403 = vset.pattern.permute.xlu0 4
        %3404 = vperm.xlu0 %3403, %v2963
        %v3405 = vpop.permute.xlu0 %3404
        %3407 = vset.pattern.permute.xlu0 4
        %3408 = vperm.xlu0 %3407, %v2964
        %v3409 = vpop.permute.xlu0 %3408
        %3411 = vset.pattern.permute.xlu0 4
        %3412 = vperm.xlu0 %3411, %v2965
        %v3413 = vpop.permute.xlu0 %3412
        %3415 = vset.pattern.permute.xlu0 4
        %3416 = vperm.xlu0 %3415, %v2966
        %v3417 = vpop.permute.xlu0 %3416
        %3419 = vset.pattern.permute.xlu0 4
        %3420 = vperm.xlu0 %3419, %v2967
        %v3421 = vpop.permute.xlu0 %3420
        %3423 = vset.pattern.permute.xlu0 4
        %3424 = vperm.xlu0 %3423, %v2968
        %v3425 = vpop.permute.xlu0 %3424
        %3427 = vset.pattern.permute.xlu0 4
        %3428 = vperm.xlu0 %3427, %v2969
        %v3429 = vpop.permute.xlu0 %3428
        %3431 = vset.pattern.permute.xlu0 4
        %3432 = vperm.xlu0 %3431, %v2970
        %v3433 = vpop.permute.xlu0 %3432
        %v3435 = vmul.f32 %v3373, %v1631
        %v3436 = vmul.f32 %v3377, %v1632
        %v3437 = vmul.f32 %v3381, %v1633
        %v3438 = vmul.f32 %v3385, %v1634
        %v3439 = vmul.f32 %v3389, %v1635
        %v3440 = vmul.f32 %v3393, %v1636
        %v3441 = vmul.f32 %v3397, %v1637
        %v3442 = vmul.f32 %v3401, %v1638
        %v3443 = vmul.f32 %v3405, %v1639
        %v3444 = vmul.f32 %v3409, %v1640
        %v3445 = vmul.f32 %v3413, %v1641
        %v3446 = vmul.f32 %v3417, %v1642
        %v3447 = vmul.f32 %v3421, %v1643
        %v3448 = vmul.f32 %v3425, %v1644
        %v3449 = vmul.f32 %v3429, %v1645
        %v3450 = vmul.f32 %v3433, %v1646
        %v3451 = vadd.f32 %v3355, %v3435
        %v3452 = vadd.f32 %v3356, %v3436
        %v3453 = vadd.f32 %v3357, %v3437
        %v3454 = vadd.f32 %v3358, %v3438
        %v3455 = vadd.f32 %v3359, %v3439
        %v3456 = vadd.f32 %v3360, %v3440
        %v3457 = vadd.f32 %v3361, %v3441
        %v3458 = vadd.f32 %v3362, %v3442
        %v3459 = vadd.f32 %v3363, %v3443
        %v3460 = vadd.f32 %v3364, %v3444
        %v3461 = vadd.f32 %v3365, %v3445
        %v3462 = vadd.f32 %v3366, %v3446
        %v3463 = vadd.f32 %v3367, %v3447
        %v3464 = vadd.f32 %v3368, %v3448
        %v3465 = vadd.f32 %v3369, %v3449
        %v3466 = vadd.f32 %v3370, %v3450
        %3467 = vset.pattern.permute.xlu0 5
        %3468 = vperm.xlu0 %3467, %v2955
        %v3469 = vpop.permute.xlu0 %3468
        %3471 = vset.pattern.permute.xlu0 5
        %3472 = vperm.xlu0 %3471, %v2956
        %v3473 = vpop.permute.xlu0 %3472
        %3475 = vset.pattern.permute.xlu0 5
        %3476 = vperm.xlu0 %3475, %v2957
        %v3477 = vpop.permute.xlu0 %3476
        %3479 = vset.pattern.permute.xlu0 5
        %3480 = vperm.xlu0 %3479, %v2958
        %v3481 = vpop.permute.xlu0 %3480
        %3483 = vset.pattern.permute.xlu0 5
        %3484 = vperm.xlu0 %3483, %v2959
        %v3485 = vpop.permute.xlu0 %3484
        %3487 = vset.pattern.permute.xlu0 5
        %3488 = vperm.xlu0 %3487, %v2960
        %v3489 = vpop.permute.xlu0 %3488
        %3491 = vset.pattern.permute.xlu0 5
        %3492 = vperm.xlu0 %3491, %v2961
        %v3493 = vpop.permute.xlu0 %3492
        %3495 = vset.pattern.permute.xlu0 5
        %3496 = vperm.xlu0 %3495, %v2962
        %v3497 = vpop.permute.xlu0 %3496
        %3499 = vset.pattern.permute.xlu0 5
        %3500 = vperm.xlu0 %3499, %v2963
        %v3501 = vpop.permute.xlu0 %3500
        %3503 = vset.pattern.permute.xlu0 5
        %3504 = vperm.xlu0 %3503, %v2964
        %v3505 = vpop.permute.xlu0 %3504
        %3507 = vset.pattern.permute.xlu0 5
        %3508 = vperm.xlu0 %3507, %v2965
        %v3509 = vpop.permute.xlu0 %3508
        %3511 = vset.pattern.permute.xlu0 5
        %3512 = vperm.xlu0 %3511, %v2966
        %v3513 = vpop.permute.xlu0 %3512
        %3515 = vset.pattern.permute.xlu0 5
        %3516 = vperm.xlu0 %3515, %v2967
        %v3517 = vpop.permute.xlu0 %3516
        %3519 = vset.pattern.permute.xlu0 5
        %3520 = vperm.xlu0 %3519, %v2968
        %v3521 = vpop.permute.xlu0 %3520
        %3523 = vset.pattern.permute.xlu0 5
        %3524 = vperm.xlu0 %3523, %v2969
        %v3525 = vpop.permute.xlu0 %3524
        %3527 = vset.pattern.permute.xlu0 5
        %3528 = vperm.xlu0 %3527, %v2970
        %v3529 = vpop.permute.xlu0 %3528
        %v3531 = vmul.f32 %v3469, %v1966
        %v3532 = vmul.f32 %v3473, %v1967
        %v3533 = vmul.f32 %v3477, %v1968
        %v3534 = vmul.f32 %v3481, %v1969
        %v3535 = vmul.f32 %v3485, %v1970
        %v3536 = vmul.f32 %v3489, %v1971
        %v3537 = vmul.f32 %v3493, %v1972
        %v3538 = vmul.f32 %v3497, %v1973
        %v3539 = vmul.f32 %v3501, %v1974
        %v3540 = vmul.f32 %v3505, %v1975
        %v3541 = vmul.f32 %v3509, %v1976
        %v3542 = vmul.f32 %v3513, %v1977
        %v3543 = vmul.f32 %v3517, %v1978
        %v3544 = vmul.f32 %v3521, %v1979
        %v3545 = vmul.f32 %v3525, %v1980
        %v3546 = vmul.f32 %v3529, %v1981
        %v3547 = vadd.f32 %v3451, %v3531
        %v3548 = vadd.f32 %v3452, %v3532
        %v3549 = vadd.f32 %v3453, %v3533
        %v3550 = vadd.f32 %v3454, %v3534
        %v3551 = vadd.f32 %v3455, %v3535
        %v3552 = vadd.f32 %v3456, %v3536
        %v3553 = vadd.f32 %v3457, %v3537
        %v3554 = vadd.f32 %v3458, %v3538
        %v3555 = vadd.f32 %v3459, %v3539
        %v3556 = vadd.f32 %v3460, %v3540
        %v3557 = vadd.f32 %v3461, %v3541
        %v3558 = vadd.f32 %v3462, %v3542
        %v3559 = vadd.f32 %v3463, %v3543
        %v3560 = vadd.f32 %v3464, %v3544
        %v3561 = vadd.f32 %v3465, %v3545
        %v3562 = vadd.f32 %v3466, %v3546
        %3563 = vset.pattern.permute.xlu0 6
        %3564 = vperm.xlu0 %3563, %v2955
        %v3565 = vpop.permute.xlu0 %3564
        %3567 = vset.pattern.permute.xlu0 6
        %3568 = vperm.xlu0 %3567, %v2956
        %v3569 = vpop.permute.xlu0 %3568
        %3571 = vset.pattern.permute.xlu0 6
        %3572 = vperm.xlu0 %3571, %v2957
        %v3573 = vpop.permute.xlu0 %3572
        %3575 = vset.pattern.permute.xlu0 6
        %3576 = vperm.xlu0 %3575, %v2958
        %v3577 = vpop.permute.xlu0 %3576
        %3579 = vset.pattern.permute.xlu0 6
        %3580 = vperm.xlu0 %3579, %v2959
        %v3581 = vpop.permute.xlu0 %3580
        %3583 = vset.pattern.permute.xlu0 6
        %3584 = vperm.xlu0 %3583, %v2960
        %v3585 = vpop.permute.xlu0 %3584
        %3587 = vset.pattern.permute.xlu0 6
        %3588 = vperm.xlu0 %3587, %v2961
        %v3589 = vpop.permute.xlu0 %3588
        %3591 = vset.pattern.permute.xlu0 6
        %3592 = vperm.xlu0 %3591, %v2962
        %v3593 = vpop.permute.xlu0 %3592
        %3595 = vset.pattern.permute.xlu0 6
        %3596 = vperm.xlu0 %3595, %v2963
        %v3597 = vpop.permute.xlu0 %3596
        %3599 = vset.pattern.permute.xlu0 6
        %3600 = vperm.xlu0 %3599, %v2964
        %v3601 = vpop.permute.xlu0 %3600
        %3603 = vset.pattern.permute.xlu0 6
        %3604 = vperm.xlu0 %3603, %v2965
        %v3605 = vpop.permute.xlu0 %3604
        %3607 = vset.pattern.permute.xlu0 6
        %3608 = vperm.xlu0 %3607, %v2966
        %v3609 = vpop.permute.xlu0 %3608
        %3611 = vset.pattern.permute.xlu0 6
        %3612 = vperm.xlu0 %3611, %v2967
        %v3613 = vpop.permute.xlu0 %3612
        %3615 = vset.pattern.permute.xlu0 6
        %3616 = vperm.xlu0 %3615, %v2968
        %v3617 = vpop.permute.xlu0 %3616
        %3619 = vset.pattern.permute.xlu0 6
        %3620 = vperm.xlu0 %3619, %v2969
        %v3621 = vpop.permute.xlu0 %3620
        %3623 = vset.pattern.permute.xlu0 6
        %3624 = vperm.xlu0 %3623, %v2970
        %v3625 = vpop.permute.xlu0 %3624
        %v3627 = vmul.f32 %v3565, %v2301
        %v3628 = vmul.f32 %v3569, %v2302
        %v3629 = vmul.f32 %v3573, %v2303
        %v3630 = vmul.f32 %v3577, %v2304
        %v3631 = vmul.f32 %v3581, %v2305
        %v3632 = vmul.f32 %v3585, %v2306
        %v3633 = vmul.f32 %v3589, %v2307
        %v3634 = vmul.f32 %v3593, %v2308
        %v3635 = vmul.f32 %v3597, %v2309
        %v3636 = vmul.f32 %v3601, %v2310
        %v3637 = vmul.f32 %v3605, %v2311
        %v3638 = vmul.f32 %v3609, %v2312
        %v3639 = vmul.f32 %v3613, %v2313
        %v3640 = vmul.f32 %v3617, %v2314
        %v3641 = vmul.f32 %v3621, %v2315
        %v3642 = vmul.f32 %v3625, %v2316
        %v3643 = vadd.f32 %v3547, %v3627
        %v3644 = vadd.f32 %v3548, %v3628
        %v3645 = vadd.f32 %v3549, %v3629
        %v3646 = vadd.f32 %v3550, %v3630
        %v3647 = vadd.f32 %v3551, %v3631
        %v3648 = vadd.f32 %v3552, %v3632
        %v3649 = vadd.f32 %v3553, %v3633
        %v3650 = vadd.f32 %v3554, %v3634
        %v3651 = vadd.f32 %v3555, %v3635
        %v3652 = vadd.f32 %v3556, %v3636
        %v3653 = vadd.f32 %v3557, %v3637
        %v3654 = vadd.f32 %v3558, %v3638
        %v3655 = vadd.f32 %v3559, %v3639
        %v3656 = vadd.f32 %v3560, %v3640
        %v3657 = vadd.f32 %v3561, %v3641
        %v3658 = vadd.f32 %v3562, %v3642
        %3659 = vset.pattern.permute.xlu0 7
        %3660 = vperm.xlu0 %3659, %v2955
        %v3661 = vpop.permute.xlu0 %3660
        %3663 = vset.pattern.permute.xlu0 7
        %3664 = vperm.xlu0 %3663, %v2956
        %v3665 = vpop.permute.xlu0 %3664
        %3667 = vset.pattern.permute.xlu0 7
        %3668 = vperm.xlu0 %3667, %v2957
        %v3669 = vpop.permute.xlu0 %3668
        %3671 = vset.pattern.permute.xlu0 7
        %3672 = vperm.xlu0 %3671, %v2958
        %v3673 = vpop.permute.xlu0 %3672
        %3675 = vset.pattern.permute.xlu0 7
        %3676 = vperm.xlu0 %3675, %v2959
        %v3677 = vpop.permute.xlu0 %3676
        %3679 = vset.pattern.permute.xlu0 7
        %3680 = vperm.xlu0 %3679, %v2960
        %v3681 = vpop.permute.xlu0 %3680
        %3683 = vset.pattern.permute.xlu0 7
        %3684 = vperm.xlu0 %3683, %v2961
        %v3685 = vpop.permute.xlu0 %3684
        %3687 = vset.pattern.permute.xlu0 7
        %3688 = vperm.xlu0 %3687, %v2962
        %v3689 = vpop.permute.xlu0 %3688
        %3691 = vset.pattern.permute.xlu0 7
        %3692 = vperm.xlu0 %3691, %v2963
        %v3693 = vpop.permute.xlu0 %3692
        %3695 = vset.pattern.permute.xlu0 7
        %3696 = vperm.xlu0 %3695, %v2964
        %v3697 = vpop.permute.xlu0 %3696
        %3699 = vset.pattern.permute.xlu0 7
        %3700 = vperm.xlu0 %3699, %v2965
        %v3701 = vpop.permute.xlu0 %3700
        %3703 = vset.pattern.permute.xlu0 7
        %3704 = vperm.xlu0 %3703, %v2966
        %v3705 = vpop.permute.xlu0 %3704
        %3707 = vset.pattern.permute.xlu0 7
        %3708 = vperm.xlu0 %3707, %v2967
        %v3709 = vpop.permute.xlu0 %3708
        %3711 = vset.pattern.permute.xlu0 7
        %3712 = vperm.xlu0 %3711, %v2968
        %v3713 = vpop.permute.xlu0 %3712
        %3715 = vset.pattern.permute.xlu0 7
        %3716 = vperm.xlu0 %3715, %v2969
        %v3717 = vpop.permute.xlu0 %3716
        %3719 = vset.pattern.permute.xlu0 7
        %3720 = vperm.xlu0 %3719, %v2970
        %v3721 = vpop.permute.xlu0 %3720
        %v3723 = vmul.f32 %v3661, %v2636
        %v3724 = vmul.f32 %v3665, %v2637
        %v3725 = vmul.f32 %v3669, %v2638
        %v3726 = vmul.f32 %v3673, %v2639
        %v3727 = vmul.f32 %v3677, %v2640
        %v3728 = vmul.f32 %v3681, %v2641
        %v3729 = vmul.f32 %v3685, %v2642
        %v3730 = vmul.f32 %v3689, %v2643
        %v3731 = vmul.f32 %v3693, %v2644
        %v3732 = vmul.f32 %v3697, %v2645
        %v3733 = vmul.f32 %v3701, %v2646
        %v3734 = vmul.f32 %v3705, %v2647
        %v3735 = vmul.f32 %v3709, %v2648
        %v3736 = vmul.f32 %v3713, %v2649
        %v3737 = vmul.f32 %v3717, %v2650
        %v3738 = vmul.f32 %v3721, %v2651
        %v3739 = vadd.f32 %v3643, %v3723
        %v3740 = vadd.f32 %v3644, %v3724
        %v3741 = vadd.f32 %v3645, %v3725
        %v3742 = vadd.f32 %v3646, %v3726
        %v3743 = vadd.f32 %v3647, %v3727
        %v3744 = vadd.f32 %v3648, %v3728
        %v3745 = vadd.f32 %v3649, %v3729
        %v3746 = vadd.f32 %v3650, %v3730
        %v3747 = vadd.f32 %v3651, %v3731
        %v3748 = vadd.f32 %v3652, %v3732
        %v3749 = vadd.f32 %v3653, %v3733
        %v3750 = vadd.f32 %v3654, %v3734
        %v3751 = vadd.f32 %v3655, %v3735
        %v3752 = vadd.f32 %v3656, %v3736
        %v3753 = vadd.f32 %v3657, %v3737
        %v3754 = vadd.f32 %v3658, %v3738
        %v3755 = vstv %s286
        %v3756 = vadd.f32 %v3739, %v3755
        %v3757 = vadd.f32 %v3740, %v3755
        %v3758 = vadd.f32 %v3741, %v3755
        %v3759 = vadd.f32 %v3742, %v3755
        %v3760 = vadd.f32 %v3743, %v3755
        %v3761 = vadd.f32 %v3744, %v3755
        %v3762 = vadd.f32 %v3745, %v3755
        %v3763 = vadd.f32 %v3746, %v3755
        %v3764 = vadd.f32 %v3747, %v3755
        %v3765 = vadd.f32 %v3748, %v3755
        %v3766 = vadd.f32 %v3749, %v3755
        %v3767 = vadd.f32 %v3750, %v3755
        %v3768 = vadd.f32 %v3751, %v3755
        %v3769 = vadd.f32 %v3752, %v3755
        %v3770 = vadd.f32 %v3753, %v3755
        %v3771 = vadd.f32 %v3754, %v3755
        %3772 = vst [vmem:[%s273] sm:$0xff] %v3756
        %3773 = vst [vmem:[%s273 + $0x8] sm:$0xff] %v3757
        %3774 = vst [vmem:[%s273 + $0x10] sm:$0xff] %v3758
        %3775 = vst [vmem:[%s273 + $0x18] sm:$0xff] %v3759
        %3776 = vst [vmem:[%s273 + $0x20] sm:$0xff] %v3760
        %3777 = vst [vmem:[%s273 + $0x28] sm:$0xff] %v3761
        %3778 = vst [vmem:[%s273 + $0x30] sm:$0xff] %v3762
        %3779 = vst [vmem:[%s273 + $0x38] sm:$0xff] %v3763
        %3780 = vst [vmem:[%s273 + $0x40] sm:$0xff] %v3764
        %3781 = vst [vmem:[%s273 + $0x48] sm:$0xff] %v3765
        %3782 = vst [vmem:[%s273 + $0x50] sm:$0xff] %v3766
        %3783 = vst [vmem:[%s273 + $0x58] sm:$0xff] %v3767
        %3784 = vst [vmem:[%s273 + $0x60] sm:$0xff] %v3768
        %3785 = vst [vmem:[%s273 + $0x68] sm:$0xff] %v3769
        %3786 = vst [vmem:[%s273 + $0x70] sm:$0xff] %v3770
        %3787 = vst [vmem:[%s273 + $0x78] sm:$0xff] %v3771
        %s3788 = sand.u32 %s143, 1
        %s3789 = scalar_lea.sflag [#allocation5], %s3788
        %s3790 = sand.u32 %s143, 1
        %s3791 = smul.addr %s3790, 128
        %s3792 = scalar_lea.vmem [#allocation10], %s3791
        // Predicated region
        $region53: #{tpu_custom_call.1} parent=39 // pred_check
          %p3793 = pneg %p153
        $region54: #{tpu_custom_call.1} parent=39 // pred_check_branch
          %3795 = sbr.rel (%p3793) target = $region56
        $region55: #{tpu_custom_call.1} parent=39 // pred_region
          %s3796 = smul.u32 16, %s25
          %s3798 = ssub.s32 2048, 2048
          %3799 = vsyncadd %s3789, %s3798
          %s3800 = smul.addr %s3796, 128
          %s3801 = scalar_lea.hbm %s5, %s3800
          %s3802 = sshll.u32 %s3792, 4
          %s3803 = int_to_ptr.vmem [resolvable:$true] %s3802
          %3808 = dma.vmem_to_hbm [thread:$0]  %s3803, 2048, %s3801, %s3789, 128, 128, 8
        $region56: #{tpu_custom_call.1} parent=39 // pred_fallthru
          _
      $region40: #{tpu_custom_call.1} parent=5 // pred_fallthru
        _
      %p3809 = scmp.le.s32.totalorder 2, %s20
      // Predicated region
      $region57: #{tpu_custom_call.1} parent=5 // pred_check
        %p3810 = pneg %p3809
      $region58: #{tpu_custom_call.1} parent=5 // pred_check_branch
        %3812 = sbr.rel (%p3810) target = $region60
      $region59: #{tpu_custom_call.1} parent=5 // pred_region
        %s3813 = ssub.s32 %s20, 2
        // Predicated region
        $region61: #{tpu_custom_call.1} parent=59 // pred_check
          %p3814 = pneg %p159
        $region62: #{tpu_custom_call.1} parent=59 // pred_check_branch
          %3816 = sbr.rel (%p3814) target = $region64
        $region63: #{tpu_custom_call.1} parent=59 // pred_region
          %s3817 = sand.u32 %s144, 1
          %s3818 = scalar_lea.sflag [#allocation5], %s3817
          %s3819 = sand.u32 %s144, 1
          %s3820 = smul.addr %s3819, 128
          %s3821 = scalar_lea.vmem [#allocation10], %s3820
          %3822 = dma.done %s3818, 2048
        $region64: #{tpu_custom_call.1} parent=59 // pred_fallthru
          _
      $region60: #{tpu_custom_call.1} parent=5 // pred_fallthru
        _
    $region6: #{tpu_custom_call.1} parent=1 // loop_footer
      %s24 = sadd.s32 1, %s20
    $region7: #{tpu_custom_call.1} parent=1 // loop_footer_branch
      %19 = sbr.rel target = $region3
    $region8: #{tpu_custom_call.1} parent=1 // loop_exit
      _
    %3823 = vsyncpa [#allocation4], 1
    %s3824 = scalar_lea.sflag [#allocation4], 1
    %3825 = vsyncpa %s3824, 1
    %3826 = vsyncpa [#allocation8], 1
    %3827 = vsyncpa [#allocation5], 1
    %s3828 = scalar_lea.sflag [#allocation5], 1
    %3829 = vsyncpa %s3828, 1
    %3830 = vsyncpa [#allocation6], 1
    %s3831 = scalar_lea.sflag [#allocation6], 1
    %3832 = vsyncpa %s3831, 1

</llo_original>
